<compile_context>
chip_gen: v7x
topology: tpu7x:2x2x1
jax: 0.10.0
libtpu: 0.0.40
codegen_flags: <defaults>
</compile_context>

<pallas_src>
import math
import numpy as np
import jax
import jax.numpy as jnp
from jax import lax
from jax.experimental import pallas as pl
from jax.experimental.pallas import tpu as pltpu  # noqa: F401  (TPU backend)

# ---------------- small, module-consistent hyper-parameters ----------------
B = 2                      # batch
L = 8                      # observed sequence length
ENC_IN = 4                 # configs.enc_in
S = 2 * ENC_IN             # channels after cat(data, mask)       = 8
D_IN = 2 * ENC_IN + 1      # DLA input_dim (value channels)       = 9
D_MODEL = 16               # configs.d_model
E_T = D_MODEL + 1          # DLA embed_time                       = 17
GRID = 8                   # configs.grid
PATCH = 4                  # configs.patch_len
E_LAYERS = 1               # configs.e_layers
N_CLASSES = 3              # configs.class_num
FUSE = 300                 # fuse hidden width (hard-coded in module)
FUSE_PAD = 384             # FUSE zero-padded to 3 x 128 lanes (exact)
NEG_INF = -1e9


# =========================== fused Pallas kernel ===========================

def tada_fused_kernel(
        # data (batch stacked into the leading / sublane dim)
        x_col_ref, idx_col_ref, msk_ref, tp_ref, tcol_ref, vt_ref, mskt_ref,
        # TimeEmbedding weights (mlp & h first/second layers merged; g2 composed with K)
        w_mh1_ref, b_mh1_ref, w_mh2_ref, b_mh2_ref,
        w_g1_ref, b_g1_ref, w_g2k_ref, b_g2k_ref, w_kks_ref, q_ref,
        # DLA weights (query projection + time windows precomputed; b_o folded into pool bias)
        qproj_ref, w_k_ref, b_k_ref, w_o_ref, up_ref, lo_ref,
        # composed patch_embed + AdaptiveAvgPool linear map (block-diag over batch)
        a_pool_ref, c_pool_ref,
        # fuse MLP + classifier (FUSE padded 300 -> 384, classifier pre-scaled by 1/G)
        w_f1_ref, b_f1_ref, w_f2_ref, b_f2_ref, w_c_ref, b_c_ref,
        # output
        o_ref):
    f32 = jnp.float32
    N = B * L

    # ================= TimeEmbedding (dim_enc) =================
    x3 = x_col_ref[...].reshape(N, S, 1)        # x = cat([data, mask], -1), flat over (b, l)
    idx3 = idx_col_ref[...].reshape(N, S, 1)    # constant channel index
    msk3 = msk_ref[...]                         # [N, S, 1]

    # Linear(2, d) of mlp() and h() fused into one VPU FMA (no K=2 matmul)
    w1 = w_mh1_ref[...]                                                                 # [2, 32]
    mh1 = jnp.maximum(x3 * w1[0:1, :] + idx3 * w1[1:2, :] + b_mh1_ref[...], 0.0)        # [N, S, 32]
    mh1 = mh1.reshape(N * S, 2 * D_MODEL)                                               # [128, 32]
    mh2 = jnp.dot(mh1, w_mh2_ref[...], preferred_element_type=f32) + b_mh2_ref[...]     # [128, 32]
    m2 = mh2[:, :D_MODEL]                       # mlp(s)
    hs = mh2[:, D_MODEL:]                       # h(s)

    fs = jnp.sum(m2.reshape(N, S, D_MODEL), axis=1)                                     # [N, d]
    count = jnp.sum(msk3, axis=1)                                                       # [N, 1]
    fs = fs * pl.reciprocal(count + 1e-9, approx=True)

    g1 = jnp.maximum(jnp.dot(fs, w_g1_ref[...], preferred_element_type=f32) + b_g1_ref[...], 0.0)
    # g()'s 2nd layer composed with K's fs-rows (and b_K absorbed) -> one matmul total
    fs_proj = jnp.dot(g1, w_g2k_ref[...], preferred_element_type=f32) + b_g2k_ref[...]  # [N, d]

    wks = w_kks_ref[...]                                                                 # [2, d]  (K rows for x, index)
    s_part = x3 * wks[0:1, :] + idx3 * wks[1:2, :]                                       # [N, S, d]
    zt = fs_proj[:, None, :] + s_part                                                    # [N, S, d]

    e = jnp.sum(zt * q_ref[...], axis=-1, keepdims=True)                                 # [N, S, 1]
    e = jnp.where(msk3 != 0, e, f32(NEG_INF))
    e = jnp.exp(e - jnp.max(e, axis=1, keepdims=True))
    e = e * pl.reciprocal(jnp.sum(e, axis=1, keepdims=True), approx=True)                # softmax over S
    r = jnp.sum(hs.reshape(N, S, D_MODEL) * e, axis=1)                                   # [N, d]

    # ================= DLA attention =================
    # key = cat([z, t], -1); the Linear is split so no lane-concat is needed.
    wk = w_k_ref[...]                                                                     # [E_T, E_T]
    kp = (jnp.dot(r, wk[0:D_MODEL, :], preferred_element_type=f32)
          + tcol_ref[...] * wk[D_MODEL:D_MODEL + 1, :] + b_k_ref[...])                    # [N, E_T]
    qp = qproj_ref[...]                                                                   # [G, E_T]
    up3 = up_ref[...]                                                                     # [G, D_IN, 1]
    lo3 = lo_ref[...]
    scale = 1.0 / math.sqrt(E_T)

    atts = []
    for b in range(B):                            # B = 2, static unroll
        kp_b = kp[b * L:(b + 1) * L, :]           # [L, E_T]
        sc = lax.dot_general(qp, kp_b, (((1,), (1,)), ((), ())),
                             preferred_element_type=f32) * scale                          # [G, L]
        tt3 = tp_ref[b:b + 1, :][None, :, :]      # [1, 1, L]
        vt_b = vt_ref[b]                          # [D_IN, L]
        mt_b = mskt_ref[b]                        # [D_IN, L]
        valid = (tt3 <= up3) & (tt3 >= lo3) & (mt_b[None, :, :] != 0.0)                   # [G, D_IN, L]
        sc3 = jnp.where(valid, sc[:, None, :], f32(NEG_INF))
        p3 = jnp.exp(sc3 - jnp.max(sc3, axis=-1, keepdims=True))
        p3 = p3 * pl.reciprocal(jnp.sum(p3, axis=-1, keepdims=True), approx=True)         # softmax over L
        atts.append(jnp.sum(p3 * vt_b[None, :, :], axis=-1))                              # [G, D_IN]
    att = jnp.concatenate(atts, axis=0)                                                   # [B*G, D_IN]
    z = jnp.dot(att, w_o_ref[...], preferred_element_type=f32)                            # [B*G, d]  (b_o folded below)

    # ======= patch_embed + AdaptiveAvgPool1d(grid), composed into one linear map =======
    pooled = jnp.dot(a_pool_ref[...], z, preferred_element_type=f32) + c_pool_ref[...]    # [B*G, d]
    out = pooled
    # TODO(synk): scale_block is not defined in the provided source; encoder blocks are
    # treated as identity, so extra e_layers only multiply the pooled output element-wise.
    for _ in range(E_LAYERS - 1):
        out = out * pooled

    # ================= fuse MLP + ClassificationHead =================
    h1 = jnp.maximum(jnp.dot(out, w_f1_ref[...], preferred_element_type=f32) + b_f1_ref[...], 0.0)
    h2 = jnp.maximum(jnp.dot(h1, w_f2_ref[...], preferred_element_type=f32) + b_f2_ref[...], 0.0)
    lg = jnp.dot(h2, w_c_ref[...], preferred_element_type=f32)                             # [B*G, C] (w_c pre-scaled by 1/G)
    logits = jnp.sum(lg.reshape(B, GRID, N_CLASSES), axis=1) + b_c_ref[...]                # mean over G
    o_ref[...] = logits.astype(o_ref.dtype)


# =========================== wrapper (one fused pallas_call) ===========================

def tada_forward(observed_data, observed_tp, observed_mask, pk):
    # Tiny input re-layouts (single XLA fusion); everything else lives in the kernel.
    z0 = jnp.concatenate([observed_data, observed_mask], axis=-1)             # [B, L, S]
    msk2 = jnp.concatenate([observed_mask, observed_mask], axis=-1)           # [B, L, S]
    v = jnp.concatenate([z0, observed_tp[..., None]], axis=-1)                # [B, L, D_IN]
    msk3 = jnp.concatenate([msk2, jnp.ones((B, L, 1), jnp.float32)], axis=-1)

    x_col = z0.reshape(B * L * S, 1)                                          # [128, 1]
    msk_ns = msk2.reshape(B * L, S, 1)                                        # [16, 8, 1]
    tcol = observed_tp.reshape(B * L, 1)                                      # [16, 1]
    vt = jnp.transpose(v, (0, 2, 1))                                          # [B, D_IN, L]
    mskt = jnp.transpose(msk3, (0, 2, 1))                                     # [B, D_IN, L]

    args = (
        x_col, pk['idx_col'], msk_ns, observed_tp, tcol, vt, mskt,
        pk['w_mh1'], pk['b_mh1'], pk['w_mh2'], pk['b_mh2'],
        pk['w_g1'], pk['b_g1'], pk['w_g2k'], pk['b_g2k'], pk['w_kk_s'], pk['q_param'],
        pk['q_proj'], pk['w_k'], pk['b_k'], pk['w_o'], pk['up3'], pk['lo3'],
        pk['a_pool'], pk['c_pool'],
        pk['w_f1'], pk['b_f1'], pk['w_f2'], pk['b_f2'], pk['w_c'], pk['b_c'],
    )
    return pl.pallas_call(
        tada_fused_kernel,
        out_shape=jax.ShapeDtypeStruct((B, N_CLASSES), jnp.float32),
    )(*args)


# =========================== parameter preparation (one-time, exact) ===========================

def adaptive_avg_pool1d_matrix(l_in, l_out):
    # exact nn.AdaptiveAvgPool1d semantics as a [l_in, l_out] averaging matrix
    m = np.zeros((l_in, l_out), dtype=np.float32)
    for j in range(l_out):
        s = (j * l_in) // l_out
        e = -((-(j + 1) * l_in) // l_out)
        m[s:e, j] = 1.0 / (e - s)
    return jnp.asarray(m)


def prepare_params(p):
    """One-time packing of module parameters into kernel-friendly buffers.
    Every transformation is exact (weight merging/composition, block-diagonals, zero
    padding, composing the linear patch_embed + avgpool chain), so forward semantics
    are preserved."""
    f32 = jnp.float32
    k = {}
    # -- TimeEmbedding: merge the mlp() and h() branches (Linear(2,d)+ReLU+Linear(d,d)) --
    k['w_mh1'] = jnp.concatenate([p['te_w_m1'], p['te_w_h1']], axis=1)          # [2, 32]
    k['b_mh1'] = jnp.concatenate([p['te_b_m1'], p['te_b_h1']], axis=1)          # [1, 32]
    w_mh2 = jnp.zeros((2 * D_MODEL, 2 * D_MODEL), f32)
    w_mh2 = w_mh2.at[:D_MODEL, :D_MODEL].set(p['te_w_m2'])
    w_mh2 = w_mh2.at[D_MODEL:, D_MODEL:].set(p['te_w_h2'])
    k['w_mh2'] = w_mh2                                                          # block-diag [32, 32]
    k['b_mh2'] = jnp.concatenate([p['te_b_m2'], p['te_b_h2']], axis=1)
    k['w_g1'], k['b_g1'] = p['te_w_g1'], p['te_b_g1']
    # g()'s second layer composed with K's fs-rows; b_K absorbed into the bias (exact)
    k['w_g2k'] = p['te_w_g2'] @ p['te_w_k'][:D_MODEL, :]                         # [d, d]
    k['b_g2k'] = p['te_b_g2'] @ p['te_w_k'][:D_MODEL, :] + p['te_b_k']           # [1, d]
    k['w_kk_s'] = p['te_w_k'][D_MODEL:D_MODEL + 2, :]                            # [2, d] rows for (x, index)
    k['q_param'] = p['te_q']
    # -- DLA: parameter-only precomputations (query projection, sigmoid time windows) --
    k['q_proj'] = p['query'] @ p['att_w_q'] + p['att_b_q']                       # [G, E_T]
    k['w_k'], k['b_k'] = p['att_w_k'], p['att_b_k']
    k['w_o'] = p['att_w_o']
    stride = jax.nn.sigmoid(p['stride_list'] @ p['range_w'] + p['range_b'][0])   # [D_IN]
    ref = jnp.linspace(0.0, 1.0, GRID)
    k['up3'] = (ref[:, None] + stride[None, :])[:, :, None]                      # [G, D_IN, 1]
    k['lo3'] = (ref[:, None] - stride[None, :])[:, :, None]
    # -- patch_embed (Linear(patch,patch)) + zero-pad + AdaptiveAvgPool1d(grid) composed
    #    into a single [G, G] linear map, replicated block-diagonally over the batch --
    patch_num = GRID // PATCH + 1
    l_full = patch_num * PATCH
    pool_m = adaptive_avg_pool1d_matrix(l_full, GRID)                            # [12, G]
    m_embed = jnp.zeros((l_full, GRID), f32)
    for pidx in range(patch_num):
        lo, hi = pidx * PATCH, pidx * PATCH + PATCH
        if hi <= GRID:                                  # rows past GRID read only zero padding
            m_embed = m_embed.at[lo:hi, lo:hi].set(p['pe_w'].T)
    b_embed = jnp.tile(p['pe_b'][0], patch_num)                                  # [12]
    a = pool_m.T @ m_embed                                                       # [G, G]
    c = (pool_m.T @ b_embed)[:, None]                                            # [G, 1]
    a2 = jnp.zeros((B * GRID, B * GRID), f32)
    for b in range(B):
        a2 = a2.at[b * GRID:(b + 1) * GRID, b * GRID:(b + 1) * GRID].set(a)
    k['a_pool'] = a2                                                             # [B*G, B*G]
    # fold the DLA output-projection bias b_o into the pooled bias (exact):
    #   a_pool @ (att @ w_o + 1⊗b_o) + c  ==  a_pool @ (att @ w_o) + (rowsum(a_pool)⊗b_o + c)
    rowsum = jnp.sum(a2, axis=1, keepdims=True)                                  # [B*G, 1]
    k['c_pool'] = rowsum * p['att_b_o'] + jnp.tile(c, (B, 1))                    # [B*G, d]
    # -- fuse MLP + classifier: zero-pad FUSE 300 -> 384 (= 3 * 128 lanes), exact;
    #    classifier weight pre-scaled by 1/G so the grid-mean is a plain in-kernel sum --
    k['w_f1'] = jnp.zeros((D_MODEL, FUSE_PAD), f32).at[:, :FUSE].set(p['fuse_w1'])
    k['b_f1'] = jnp.zeros((1, FUSE_PAD), f32).at[:, :FUSE].set(p['fuse_b1'])
    k['w_f2'] = jnp.zeros((FUSE_PAD, FUSE_PAD), f32).at[:FUSE, :FUSE].set(p['fuse_w2'])
    k['b_f2'] = jnp.zeros((1, FUSE_PAD), f32).at[:, :FUSE].set(p['fuse_b2'])
    k['w_c'] = jnp.zeros((FUSE_PAD, N_CLASSES), f32).at[:FUSE, :].set(p['cls_w'] * (1.0 / GRID))
    k['b_c'] = p['cls_b']
    # -- constants --
    k['idx_col'] = jnp.tile(jnp.arange(ENC_IN, dtype=f32), B * L * 2).reshape(B * L * S, 1)
    return k


# =========================== deterministic parameter init ===========================

def init_params(key):
    def linear(kk, fin, fout, scale=0.1):
        k1, k2 = jax.random.split(kk)
        w = jax.random.normal(k1, (fin, fout), jnp.float32) * scale
        b = jax.random.normal(k2, (1, fout), jnp.float32) * scale
        return w, b

    keys = iter(jax.random.split(key, 24))
    p = {}
    # TimeEmbedding(2, d_model, 1)
    p['te_w_m1'], p['te_b_m1'] = linear(next(keys), 2, D_MODEL)
    p['te_w_m2'], p['te_b_m2'] = linear(next(keys), D_MODEL, D_MODEL)
    p['te_w_g1'], p['te_b_g1'] = linear(next(keys), D_MODEL, D_MODEL)
    p['te_w_g2'], p['te_b_g2'] = linear(next(keys), D_MODEL, D_MODEL)
    p['te_w_k'], p['te_b_k'] = linear(next(keys), D_MODEL + 2, D_MODEL)
    p['te_q'] = jax.random.normal(next(keys), (1, D_MODEL), jnp.float32) * 0.1
    p['te_w_h1'], p['te_b_h1'] = linear(next(keys), 2, D_MODEL)
    p['te_w_h2'], p['te_b_h2'] = linear(next(keys), D_MODEL, D_MODEL)
    # DLA(D_IN, D_MODEL, E_T, 1)
    p['att_w_q'], p['att_b_q'] = linear(next(keys), E_T, E_T)
    p['att_w_k'], p['att_b_k'] = linear(next(keys), E_T, E_T)
    p['att_w_o'], p['att_b_o'] = linear(next(keys), D_IN, D_MODEL)
    p['range_w'], p['range_b'] = linear(next(keys), D_IN, D_IN)
    p['stride_list'] = jnp.zeros((D_IN,), jnp.float32)       # module init: zeros
    # Model-level params
    p['query'] = jax.random.normal(next(keys), (GRID, E_T), jnp.float32) * 0.1
    p['pe_w'], p['pe_b'] = linear(next(keys), PATCH, PATCH)
    p['fuse_w1'], p['fuse_b1'] = linear(next(keys), D_MODEL, FUSE)
    p['fuse_w2'], p['fuse_b2'] = linear(next(keys), FUSE, FUSE)
    p['cls_w'], p['cls_b'] = linear(next(keys), FUSE, N_CLASSES)
    return p


if __name__ == "__main__":
    key = jax.random.PRNGKey(0)
    kp, kd, kt, km = jax.random.split(key, 4)
    raw_params = init_params(kp)
    packed_params = prepare_params(raw_params)        # one-time, outside the jitted forward

    observed_data = jax.random.normal(kd, (B, L, ENC_IN), jnp.float32)
    observed_tp = jnp.sort(jax.random.uniform(kt, (B, L), jnp.float32), axis=1)
    observed_mask = (jax.random.uniform(km, (B, L, ENC_IN)) < 0.8).astype(jnp.float32)

    fwd = jax.jit(tada_forward)
    logits = fwd(observed_data, observed_tp, observed_mask, packed_params)
    jax.block_until_ready(logits)
    assert logits.shape == (B, N_CLASSES)
    print("KERNEL_OK")
</pallas_src>

<mosaic_0001>
module attributes {stable_mosaic.version = 11 : i64} {
  func.func @tada_fused_kernel(%arg0: memref<128x1xf32, #tpu.memory_space<vmem>>, %arg1: memref<128x1xf32, #tpu.memory_space<vmem>>, %arg2: memref<16x8x1xf32, #tpu.memory_space<vmem>>, %arg3: memref<2x8xf32, #tpu.memory_space<vmem>>, %arg4: memref<16x1xf32, #tpu.memory_space<vmem>>, %arg5: memref<2x9x8xf32, #tpu.memory_space<vmem>>, %arg6: memref<2x9x8xf32, #tpu.memory_space<vmem>>, %arg7: memref<2x32xf32, #tpu.memory_space<vmem>>, %arg8: memref<1x32xf32, #tpu.memory_space<vmem>>, %arg9: memref<32x32xf32, #tpu.memory_space<vmem>>, %arg10: memref<1x32xf32, #tpu.memory_space<vmem>>, %arg11: memref<16x16xf32, #tpu.memory_space<vmem>>, %arg12: memref<1x16xf32, #tpu.memory_space<vmem>>, %arg13: memref<16x16xf32, #tpu.memory_space<vmem>>, %arg14: memref<1x16xf32, #tpu.memory_space<vmem>>, %arg15: memref<2x16xf32, #tpu.memory_space<vmem>>, %arg16: memref<1x16xf32, #tpu.memory_space<vmem>>, %arg17: memref<8x17xf32, #tpu.memory_space<vmem>>, %arg18: memref<17x17xf32, #tpu.memory_space<vmem>>, %arg19: memref<1x17xf32, #tpu.memory_space<vmem>>, %arg20: memref<9x16xf32, #tpu.memory_space<vmem>>, %arg21: memref<8x9x1xf32, #tpu.memory_space<vmem>>, %arg22: memref<8x9x1xf32, #tpu.memory_space<vmem>>, %arg23: memref<16x16xf32, #tpu.memory_space<vmem>>, %arg24: memref<16x16xf32, #tpu.memory_space<vmem>>, %arg25: memref<16x384xf32, #tpu.memory_space<vmem>>, %arg26: memref<1x384xf32, #tpu.memory_space<vmem>>, %arg27: memref<384x384xf32, #tpu.memory_space<vmem>>, %arg28: memref<1x384xf32, #tpu.memory_space<vmem>>, %arg29: memref<384x3xf32, #tpu.memory_space<vmem>>, %arg30: memref<1x3xf32, #tpu.memory_space<vmem>>, %arg31: memref<2x3xf32, #tpu.memory_space<vmem>>) attributes {dimension_semantics = [], scalar_prefetch = 0 : i64, scratch_operands = 0 : i64, tpu.core_type = #tpu.core_type<tc>} {
    %c0 = arith.constant 0 : index
    %c0_0 = arith.constant 0 : index
    %0 = vector.load %arg0[%c0, %c0_0] : memref<128x1xf32, #tpu.memory_space<vmem>>, vector<128x1xf32>
    %1 = vector.shape_cast %0 : vector<128x1xf32> to vector<16x8x1xf32>
    %c0_1 = arith.constant 0 : index
    %c0_2 = arith.constant 0 : index
    %2 = vector.load %arg1[%c0_1, %c0_2] : memref<128x1xf32, #tpu.memory_space<vmem>>, vector<128x1xf32>
    %3 = vector.shape_cast %2 : vector<128x1xf32> to vector<16x8x1xf32>
    %c0_3 = arith.constant 0 : index
    %c0_4 = arith.constant 0 : index
    %c0_5 = arith.constant 0 : index
    %4 = vector.load %arg2[%c0_3, %c0_4, %c0_5] : memref<16x8x1xf32, #tpu.memory_space<vmem>>, vector<16x8x1xf32>
    %c0_6 = arith.constant 0 : index
    %c0_7 = arith.constant 0 : index
    %5 = vector.load %arg7[%c0_6, %c0_7] : memref<2x32xf32, #tpu.memory_space<vmem>>, vector<2x32xf32>
    %6 = vector.extract_strided_slice %5 {offsets = [0, 0], sizes = [1, 32], strides = [1, 1]} : vector<2x32xf32> to vector<1x32xf32>
    %7 = vector.shape_cast %6 : vector<1x32xf32> to vector<1x1x32xf32>
    %8 = vector.broadcast %1 : vector<16x8x1xf32> to vector<16x8x32xf32>
    %9 = vector.broadcast %7 : vector<1x1x32xf32> to vector<16x8x32xf32>
    %10 = arith.mulf %8, %9 : vector<16x8x32xf32>
    %11 = vector.extract_strided_slice %5 {offsets = [1, 0], sizes = [1, 32], strides = [1, 1]} : vector<2x32xf32> to vector<1x32xf32>
    %12 = vector.shape_cast %11 : vector<1x32xf32> to vector<1x1x32xf32>
    %13 = vector.broadcast %3 : vector<16x8x1xf32> to vector<16x8x32xf32>
    %14 = vector.broadcast %12 : vector<1x1x32xf32> to vector<16x8x32xf32>
    %15 = arith.mulf %13, %14 : vector<16x8x32xf32>
    %16 = arith.addf %10, %15 : vector<16x8x32xf32>
    %c0_8 = arith.constant 0 : index
    %c0_9 = arith.constant 0 : index
    %17 = vector.load %arg8[%c0_8, %c0_9] : memref<1x32xf32, #tpu.memory_space<vmem>>, vector<1x32xf32>
    %18 = vector.shape_cast %17 : vector<1x32xf32> to vector<1x1x32xf32>
    %19 = vector.broadcast %18 : vector<1x1x32xf32> to vector<16x8x32xf32>
    %20 = arith.addf %16, %19 : vector<16x8x32xf32>
    %cst = arith.constant 0.000000e+00 : f32
    %21 = vector.broadcast %cst : f32 to vector<16x8x32xf32>
    %22 = arith.maximumf %20, %21 : vector<16x8x32xf32>
    %23 = vector.shape_cast %22 : vector<16x8x32xf32> to vector<128x32xf32>
    %c0_10 = arith.constant 0 : index
    %c0_11 = arith.constant 0 : index
    %24 = vector.load %arg9[%c0_10, %c0_11] : memref<32x32xf32, #tpu.memory_space<vmem>>, vector<32x32xf32>
    %cst_12 = arith.constant dense<0.000000e+00> : vector<128x32xf32>
    %25 = tpu.matmul %23, %24, %cst_12 {dimension_numbers = #tpu.dot_dimension_numbers<[1], [0], [0], [1], [0, 0, 1, 1], [], []>} : vector<128x32xf32>, vector<32x32xf32>, vector<128x32xf32> -> vector<128x32xf32>
    %c0_13 = arith.constant 0 : index
    %c0_14 = arith.constant 0 : index
    %26 = vector.load %arg10[%c0_13, %c0_14] : memref<1x32xf32, #tpu.memory_space<vmem>>, vector<1x32xf32>
    %27 = vector.broadcast %26 : vector<1x32xf32> to vector<128x32xf32>
    %28 = arith.addf %25, %27 : vector<128x32xf32>
    %29 = vector.extract_strided_slice %28 {offsets = [0, 0], sizes = [128, 16], strides = [1, 1]} : vector<128x32xf32> to vector<128x16xf32>
    %30 = vector.extract_strided_slice %28 {offsets = [0, 16], sizes = [128, 16], strides = [1, 1]} : vector<128x32xf32> to vector<128x16xf32>
    %31 = vector.shape_cast %29 : vector<128x16xf32> to vector<16x8x16xf32>
    %cst_15 = arith.constant dense<0.000000e+00> : vector<16x16xf32>
    %32 = vector.multi_reduction <add>, %31, %cst_15 [1] : vector<16x8x16xf32> to vector<16x16xf32>
    %cst_16 = arith.constant dense<0.000000e+00> : vector<16x1xf32>
    %33 = vector.multi_reduction <add>, %4, %cst_16 [1] : vector<16x8x1xf32> to vector<16x1xf32>
    %cst_17 = arith.constant 9.99999971E-10 : f32
    %34 = vector.broadcast %cst_17 : f32 to vector<16x1xf32>
    %35 = arith.addf %33, %34 : vector<16x1xf32>
    %36 = tpu.reciprocal %35 {approx = true} : vector<16x1xf32> -> vector<16x1xf32>
    %37 = vector.broadcast %36 : vector<16x1xf32> to vector<16x16xf32>
    %38 = arith.mulf %32, %37 : vector<16x16xf32>
    %c0_18 = arith.constant 0 : index
    %c0_19 = arith.constant 0 : index
    %39 = vector.load %arg11[%c0_18, %c0_19] : memref<16x16xf32, #tpu.memory_space<vmem>>, vector<16x16xf32>
    %cst_20 = arith.constant dense<0.000000e+00> : vector<16x16xf32>
    %40 = tpu.matmul %38, %39, %cst_20 {dimension_numbers = #tpu.dot_dimension_numbers<[1], [0], [0], [1], [0, 0, 1, 1], [], []>} : vector<16x16xf32>, vector<16x16xf32>, vector<16x16xf32> -> vector<16x16xf32>
    %c0_21 = arith.constant 0 : index
    %c0_22 = arith.constant 0 : index
    %41 = vector.load %arg12[%c0_21, %c0_22] : memref<1x16xf32, #tpu.memory_space<vmem>>, vector<1x16xf32>
    %42 = vector.broadcast %41 : vector<1x16xf32> to vector<16x16xf32>
    %43 = arith.addf %40, %42 : vector<16x16xf32>
    %cst_23 = arith.constant 0.000000e+00 : f32
    %44 = vector.broadcast %cst_23 : f32 to vector<16x16xf32>
    %45 = arith.maximumf %43, %44 : vector<16x16xf32>
    %c0_24 = arith.constant 0 : index
    %c0_25 = arith.constant 0 : index
    %46 = vector.load %arg13[%c0_24, %c0_25] : memref<16x16xf32, #tpu.memory_space<vmem>>, vector<16x16xf32>
    %cst_26 = arith.constant dense<0.000000e+00> : vector<16x16xf32>
    %47 = tpu.matmul %45, %46, %cst_26 {dimension_numbers = #tpu.dot_dimension_numbers<[1], [0], [0], [1], [0, 0, 1, 1], [], []>} : vector<16x16xf32>, vector<16x16xf32>, vector<16x16xf32> -> vector<16x16xf32>
    %c0_27 = arith.constant 0 : index
    %c0_28 = arith.constant 0 : index
    %48 = vector.load %arg14[%c0_27, %c0_28] : memref<1x16xf32, #tpu.memory_space<vmem>>, vector<1x16xf32>
    %49 = vector.broadcast %48 : vector<1x16xf32> to vector<16x16xf32>
    %50 = arith.addf %47, %49 : vector<16x16xf32>
    %c0_29 = arith.constant 0 : index
    %c0_30 = arith.constant 0 : index
    %51 = vector.load %arg15[%c0_29, %c0_30] : memref<2x16xf32, #tpu.memory_space<vmem>>, vector<2x16xf32>
    %52 = vector.extract_strided_slice %51 {offsets = [0, 0], sizes = [1, 16], strides = [1, 1]} : vector<2x16xf32> to vector<1x16xf32>
    %53 = vector.shape_cast %52 : vector<1x16xf32> to vector<1x1x16xf32>
    %54 = vector.broadcast %1 : vector<16x8x1xf32> to vector<16x8x16xf32>
    %55 = vector.broadcast %53 : vector<1x1x16xf32> to vector<16x8x16xf32>
    %56 = arith.mulf %54, %55 : vector<16x8x16xf32>
    %57 = vector.extract_strided_slice %51 {offsets = [1, 0], sizes = [1, 16], strides = [1, 1]} : vector<2x16xf32> to vector<1x16xf32>
    %58 = vector.shape_cast %57 : vector<1x16xf32> to vector<1x1x16xf32>
    %59 = vector.broadcast %3 : vector<16x8x1xf32> to vector<16x8x16xf32>
    %60 = vector.broadcast %58 : vector<1x1x16xf32> to vector<16x8x16xf32>
    %61 = arith.mulf %59, %60 : vector<16x8x16xf32>
    %62 = arith.addf %56, %61 : vector<16x8x16xf32>
    %63 = vector.shape_cast %50 : vector<16x16xf32> to vector<16x1x16xf32>
    %64 = vector.broadcast %63 : vector<16x1x16xf32> to vector<16x8x16xf32>
    %65 = arith.addf %64, %62 : vector<16x8x16xf32>
    %c0_31 = arith.constant 0 : index
    %c0_32 = arith.constant 0 : index
    %66 = vector.load %arg16[%c0_31, %c0_32] : memref<1x16xf32, #tpu.memory_space<vmem>>, vector<1x16xf32>
    %67 = vector.shape_cast %66 : vector<1x16xf32> to vector<1x1x16xf32>
    %68 = vector.broadcast %67 : vector<1x1x16xf32> to vector<16x8x16xf32>
    %69 = arith.mulf %65, %68 : vector<16x8x16xf32>
    %cst_33 = arith.constant dense<0.000000e+00> : vector<16x8xf32>
    %70 = vector.multi_reduction <add>, %69, %cst_33 [2] : vector<16x8x16xf32> to vector<16x8xf32>
    %71 = vector.shape_cast %70 : vector<16x8xf32> to vector<16x8x1xf32>
    %cst_34 = arith.constant 0.000000e+00 : f32
    %72 = vector.broadcast %cst_34 : f32 to vector<16x8x1xf32>
    %73 = arith.cmpf one, %4, %72 : vector<16x8x1xf32>
    %cst_35 = arith.constant -1.000000e+09 : f32
    %74 = vector.broadcast %cst_35 : f32 to vector<16x8x1xf32>
    %75 = arith.select %73, %71, %74 : vector<16x8x1xi1>, vector<16x8x1xf32>
    %cst_36 = arith.constant dense<0xFF800000> : vector<16x1xf32>
    %76 = vector.multi_reduction <maximumf>, %75, %cst_36 [1] : vector<16x8x1xf32> to vector<16x1xf32>
    %77 = vector.shape_cast %76 : vector<16x1xf32> to vector<16x1x1xf32>
    %78 = vector.broadcast %77 : vector<16x1x1xf32> to vector<16x8x1xf32>
    %79 = arith.subf %75, %78 : vector<16x8x1xf32>
    %80 = math.exp %79 : vector<16x8x1xf32>
    %cst_37 = arith.constant dense<0.000000e+00> : vector<16x1xf32>
    %81 = vector.multi_reduction <add>, %80, %cst_37 [1] : vector<16x8x1xf32> to vector<16x1xf32>
    %82 = vector.shape_cast %81 : vector<16x1xf32> to vector<16x1x1xf32>
    %83 = tpu.reciprocal %82 {approx = true} : vector<16x1x1xf32> -> vector<16x1x1xf32>
    %84 = vector.broadcast %83 : vector<16x1x1xf32> to vector<16x8x1xf32>
    %85 = arith.mulf %80, %84 : vector<16x8x1xf32>
    %86 = vector.shape_cast %30 : vector<128x16xf32> to vector<16x8x16xf32>
    %87 = vector.broadcast %85 : vector<16x8x1xf32> to vector<16x8x16xf32>
    %88 = arith.mulf %86, %87 : vector<16x8x16xf32>
    %cst_38 = arith.constant dense<0.000000e+00> : vector<16x16xf32>
    %89 = vector.multi_reduction <add>, %88, %cst_38 [1] : vector<16x8x16xf32> to vector<16x16xf32>
    %c0_39 = arith.constant 0 : index
    %c0_40 = arith.constant 0 : index
    %90 = vector.load %arg18[%c0_39, %c0_40] : memref<17x17xf32, #tpu.memory_space<vmem>>, vector<17x17xf32>
    %91 = vector.extract_strided_slice %90 {offsets = [0, 0], sizes = [16, 17], strides = [1, 1]} : vector<17x17xf32> to vector<16x17xf32>
    %cst_41 = arith.constant dense<0.000000e+00> : vector<16x17xf32>
    %92 = tpu.matmul %89, %91, %cst_41 {dimension_numbers = #tpu.dot_dimension_numbers<[1], [0], [0], [1], [0, 0, 1, 1], [], []>} : vector<16x16xf32>, vector<16x17xf32>, vector<16x17xf32> -> vector<16x17xf32>
    %c0_42 = arith.constant 0 : index
    %c0_43 = arith.constant 0 : index
    %93 = vector.load %arg4[%c0_42, %c0_43] : memref<16x1xf32, #tpu.memory_space<vmem>>, vector<16x1xf32>
    %94 = vector.extract_strided_slice %90 {offsets = [16, 0], sizes = [1, 17], strides = [1, 1]} : vector<17x17xf32> to vector<1x17xf32>
    %95 = vector.broadcast %93 : vector<16x1xf32> to vector<16x17xf32>
    %96 = vector.broadcast %94 : vector<1x17xf32> to vector<16x17xf32>
    %97 = arith.mulf %95, %96 : vector<16x17xf32>
    %98 = arith.addf %92, %97 : vector<16x17xf32>
    %c0_44 = arith.constant 0 : index
    %c0_45 = arith.constant 0 : index
    %99 = vector.load %arg19[%c0_44, %c0_45] : memref<1x17xf32, #tpu.memory_space<vmem>>, vector<1x17xf32>
    %100 = vector.broadcast %99 : vector<1x17xf32> to vector<16x17xf32>
    %101 = arith.addf %98, %100 : vector<16x17xf32>
    %c0_46 = arith.constant 0 : index
    %c0_47 = arith.constant 0 : index
    %102 = vector.load %arg17[%c0_46, %c0_47] : memref<8x17xf32, #tpu.memory_space<vmem>>, vector<8x17xf32>
    %c0_48 = arith.constant 0 : index
    %c0_49 = arith.constant 0 : index
    %c0_50 = arith.constant 0 : index
    %103 = vector.load %arg21[%c0_48, %c0_49, %c0_50] : memref<8x9x1xf32, #tpu.memory_space<vmem>>, vector<8x9x1xf32>
    %c0_51 = arith.constant 0 : index
    %c0_52 = arith.constant 0 : index
    %c0_53 = arith.constant 0 : index
    %104 = vector.load %arg22[%c0_51, %c0_52, %c0_53] : memref<8x9x1xf32, #tpu.memory_space<vmem>>, vector<8x9x1xf32>
    %105 = vector.extract_strided_slice %101 {offsets = [0, 0], sizes = [8, 17], strides = [1, 1]} : vector<16x17xf32> to vector<8x17xf32>
    %cst_54 = arith.constant dense<0.000000e+00> : vector<8x8xf32>
    %106 = tpu.matmul %102, %105, %cst_54 {dimension_numbers = #tpu.dot_dimension_numbers<[1], [1], [0], [0], [0, 0, 1, 0], [], []>} : vector<8x17xf32>, vector<8x17xf32>, vector<8x8xf32> -> vector<8x8xf32>
    %cst_55 = arith.constant 0.242535621 : f32
    %107 = vector.broadcast %cst_55 : f32 to vector<8x8xf32>
    %108 = arith.mulf %106, %107 : vector<8x8xf32>
    %c0_56 = arith.constant 0 : index
    %c0_57 = arith.constant 0 : index
    %109 = vector.load %arg3[%c0_56, %c0_57] : memref<2x8xf32, #tpu.memory_space<vmem>>, vector<1x8xf32>
    %110 = vector.shape_cast %109 : vector<1x8xf32> to vector<1x1x8xf32>
    %c0_58 = arith.constant 0 : index
    %c0_59 = arith.constant 0 : index
    %c0_60 = arith.constant 0 : index
    %111 = vector.load %arg5[%c0_58, %c0_59, %c0_60] : memref<2x9x8xf32, #tpu.memory_space<vmem>>, vector<1x9x8xf32>
    %112 = vector.shape_cast %111 : vector<1x9x8xf32> to vector<9x8xf32>
    %c0_61 = arith.constant 0 : index
    %c0_62 = arith.constant 0 : index
    %c0_63 = arith.constant 0 : index
    %113 = vector.load %arg6[%c0_61, %c0_62, %c0_63] : memref<2x9x8xf32, #tpu.memory_space<vmem>>, vector<1x9x8xf32>
    %114 = vector.shape_cast %113 : vector<1x9x8xf32> to vector<9x8xf32>
    %115 = vector.broadcast %110 : vector<1x1x8xf32> to vector<8x9x8xf32>
    %116 = vector.broadcast %103 : vector<8x9x1xf32> to vector<8x9x8xf32>
    %117 = arith.cmpf ole, %115, %116 : vector<8x9x8xf32>
    %118 = vector.broadcast %110 : vector<1x1x8xf32> to vector<8x9x8xf32>
    %119 = vector.broadcast %104 : vector<8x9x1xf32> to vector<8x9x8xf32>
    %120 = arith.cmpf oge, %118, %119 : vector<8x9x8xf32>
    %121 = arith.andi %117, %120 : vector<8x9x8xi1>
    %122 = vector.shape_cast %114 : vector<9x8xf32> to vector<1x9x8xf32>
    %cst_64 = arith.constant 0.000000e+00 : f32
    %123 = vector.broadcast %cst_64 : f32 to vector<1x9x8xf32>
    %124 = arith.cmpf one, %122, %123 : vector<1x9x8xf32>
    %125 = vector.broadcast %124 : vector<1x9x8xi1> to vector<8x9x8xi1>
    %126 = arith.andi %121, %125 : vector<8x9x8xi1>
    %127 = vector.shape_cast %108 : vector<8x8xf32> to vector<8x1x8xf32>
    %cst_65 = arith.constant -1.000000e+09 : f32
    %128 = vector.shape_cast %127 : vector<8x1x8xf32> to vector<8x1x8xf32>
    %129 = vector.broadcast %128 : vector<8x1x8xf32> to vector<8x9x8xf32>
    %130 = vector.broadcast %cst_65 : f32 to vector<8x9x8xf32>
    %131 = arith.select %126, %129, %130 : vector<8x9x8xi1>, vector<8x9x8xf32>
    %cst_66 = arith.constant dense<0xFF800000> : vector<8x9xf32>
    %132 = vector.multi_reduction <maximumf>, %131, %cst_66 [2] : vector<8x9x8xf32> to vector<8x9xf32>
    %133 = vector.shape_cast %132 : vector<8x9xf32> to vector<8x9x1xf32>
    %134 = vector.broadcast %133 : vector<8x9x1xf32> to vector<8x9x8xf32>
    %135 = arith.subf %131, %134 : vector<8x9x8xf32>
    %136 = math.exp %135 : vector<8x9x8xf32>
    %cst_67 = arith.constant dense<0.000000e+00> : vector<8x9xf32>
    %137 = vector.multi_reduction <add>, %136, %cst_67 [2] : vector<8x9x8xf32> to vector<8x9xf32>
    %138 = vector.shape_cast %137 : vector<8x9xf32> to vector<8x9x1xf32>
    %139 = tpu.reciprocal %138 {approx = true} : vector<8x9x1xf32> -> vector<8x9x1xf32>
    %140 = vector.broadcast %139 : vector<8x9x1xf32> to vector<8x9x8xf32>
    %141 = arith.mulf %136, %140 : vector<8x9x8xf32>
    %142 = vector.shape_cast %112 : vector<9x8xf32> to vector<1x9x8xf32>
    %143 = vector.broadcast %142 : vector<1x9x8xf32> to vector<8x9x8xf32>
    %144 = arith.mulf %141, %143 : vector<8x9x8xf32>
    %cst_68 = arith.constant dense<0.000000e+00> : vector<8x9xf32>
    %145 = vector.multi_reduction <add>, %144, %cst_68 [2] : vector<8x9x8xf32> to vector<8x9xf32>
    %146 = vector.extract_strided_slice %101 {offsets = [8, 0], sizes = [8, 17], strides = [1, 1]} : vector<16x17xf32> to vector<8x17xf32>
    %cst_69 = arith.constant dense<0.000000e+00> : vector<8x8xf32>
    %147 = tpu.matmul %102, %146, %cst_69 {dimension_numbers = #tpu.dot_dimension_numbers<[1], [1], [0], [0], [0, 0, 1, 0], [], []>} : vector<8x17xf32>, vector<8x17xf32>, vector<8x8xf32> -> vector<8x8xf32>
    %cst_70 = arith.constant 0.242535621 : f32
    %148 = vector.broadcast %cst_70 : f32 to vector<8x8xf32>
    %149 = arith.mulf %147, %148 : vector<8x8xf32>
    %c1 = arith.constant 1 : index
    %c0_71 = arith.constant 0 : index
    %150 = vector.load %arg3[%c1, %c0_71] : memref<2x8xf32, #tpu.memory_space<vmem>>, vector<1x8xf32>
    %151 = vector.shape_cast %150 : vector<1x8xf32> to vector<1x1x8xf32>
    %c1_72 = arith.constant 1 : index
    %c0_73 = arith.constant 0 : index
    %c0_74 = arith.constant 0 : index
    %152 = vector.load %arg5[%c1_72, %c0_73, %c0_74] : memref<2x9x8xf32, #tpu.memory_space<vmem>>, vector<1x9x8xf32>
    %153 = vector.shape_cast %152 : vector<1x9x8xf32> to vector<9x8xf32>
    %c1_75 = arith.constant 1 : index
    %c0_76 = arith.constant 0 : index
    %c0_77 = arith.constant 0 : index
    %154 = vector.load %arg6[%c1_75, %c0_76, %c0_77] : memref<2x9x8xf32, #tpu.memory_space<vmem>>, vector<1x9x8xf32>
    %155 = vector.shape_cast %154 : vector<1x9x8xf32> to vector<9x8xf32>
    %156 = vector.broadcast %151 : vector<1x1x8xf32> to vector<8x9x8xf32>
    %157 = vector.broadcast %103 : vector<8x9x1xf32> to vector<8x9x8xf32>
    %158 = arith.cmpf ole, %156, %157 : vector<8x9x8xf32>
    %159 = vector.broadcast %151 : vector<1x1x8xf32> to vector<8x9x8xf32>
    %160 = vector.broadcast %104 : vector<8x9x1xf32> to vector<8x9x8xf32>
    %161 = arith.cmpf oge, %159, %160 : vector<8x9x8xf32>
    %162 = arith.andi %158, %161 : vector<8x9x8xi1>
    %163 = vector.shape_cast %155 : vector<9x8xf32> to vector<1x9x8xf32>
    %cst_78 = arith.constant 0.000000e+00 : f32
    %164 = vector.broadcast %cst_78 : f32 to vector<1x9x8xf32>
    %165 = arith.cmpf one, %163, %164 : vector<1x9x8xf32>
    %166 = vector.broadcast %165 : vector<1x9x8xi1> to vector<8x9x8xi1>
    %167 = arith.andi %162, %166 : vector<8x9x8xi1>
    %168 = vector.shape_cast %149 : vector<8x8xf32> to vector<8x1x8xf32>
    %cst_79 = arith.constant -1.000000e+09 : f32
    %169 = vector.shape_cast %168 : vector<8x1x8xf32> to vector<8x1x8xf32>
    %170 = vector.broadcast %169 : vector<8x1x8xf32> to vector<8x9x8xf32>
    %171 = vector.broadcast %cst_79 : f32 to vector<8x9x8xf32>
    %172 = arith.select %167, %170, %171 : vector<8x9x8xi1>, vector<8x9x8xf32>
    %cst_80 = arith.constant dense<0xFF800000> : vector<8x9xf32>
    %173 = vector.multi_reduction <maximumf>, %172, %cst_80 [2] : vector<8x9x8xf32> to vector<8x9xf32>
    %174 = vector.shape_cast %173 : vector<8x9xf32> to vector<8x9x1xf32>
    %175 = vector.broadcast %174 : vector<8x9x1xf32> to vector<8x9x8xf32>
    %176 = arith.subf %172, %175 : vector<8x9x8xf32>
    %177 = math.exp %176 : vector<8x9x8xf32>
    %cst_81 = arith.constant dense<0.000000e+00> : vector<8x9xf32>
    %178 = vector.multi_reduction <add>, %177, %cst_81 [2] : vector<8x9x8xf32> to vector<8x9xf32>
    %179 = vector.shape_cast %178 : vector<8x9xf32> to vector<8x9x1xf32>
    %180 = tpu.reciprocal %179 {approx = true} : vector<8x9x1xf32> -> vector<8x9x1xf32>
    %181 = vector.broadcast %180 : vector<8x9x1xf32> to vector<8x9x8xf32>
    %182 = arith.mulf %177, %181 : vector<8x9x8xf32>
    %183 = vector.shape_cast %153 : vector<9x8xf32> to vector<1x9x8xf32>
    %184 = vector.broadcast %183 : vector<1x9x8xf32> to vector<8x9x8xf32>
    %185 = arith.mulf %182, %184 : vector<8x9x8xf32>
    %cst_82 = arith.constant dense<0.000000e+00> : vector<8x9xf32>
    %186 = vector.multi_reduction <add>, %185, %cst_82 [2] : vector<8x9x8xf32> to vector<8x9xf32>
    %187 = tpu.concatenate %145, %186 in 0 : vector<8x9xf32>, vector<8x9xf32> -> vector<16x9xf32>
    %c0_83 = arith.constant 0 : index
    %c0_84 = arith.constant 0 : index
    %188 = vector.load %arg20[%c0_83, %c0_84] : memref<9x16xf32, #tpu.memory_space<vmem>>, vector<9x16xf32>
    %cst_85 = arith.constant dense<0.000000e+00> : vector<16x16xf32>
    %189 = tpu.matmul %187, %188, %cst_85 {dimension_numbers = #tpu.dot_dimension_numbers<[1], [0], [0], [1], [0, 0, 1, 1], [], []>} : vector<16x9xf32>, vector<9x16xf32>, vector<16x16xf32> -> vector<16x16xf32>
    %c0_86 = arith.constant 0 : index
    %c0_87 = arith.constant 0 : index
    %190 = vector.load %arg23[%c0_86, %c0_87] : memref<16x16xf32, #tpu.memory_space<vmem>>, vector<16x16xf32>
    %cst_88 = arith.constant dense<0.000000e+00> : vector<16x16xf32>
    %191 = tpu.matmul %190, %189, %cst_88 {dimension_numbers = #tpu.dot_dimension_numbers<[1], [0], [0], [1], [0, 0, 1, 1], [], []>} : vector<16x16xf32>, vector<16x16xf32>, vector<16x16xf32> -> vector<16x16xf32>
    %c0_89 = arith.constant 0 : index
    %c0_90 = arith.constant 0 : index
    %192 = vector.load %arg24[%c0_89, %c0_90] : memref<16x16xf32, #tpu.memory_space<vmem>>, vector<16x16xf32>
    %193 = arith.addf %191, %192 : vector<16x16xf32>
    %c0_91 = arith.constant 0 : index
    %c0_92 = arith.constant 0 : index
    %194 = vector.load %arg25[%c0_91, %c0_92] : memref<16x384xf32, #tpu.memory_space<vmem>>, vector<16x384xf32>
    %cst_93 = arith.constant dense<0.000000e+00> : vector<16x384xf32>
    %195 = tpu.matmul %193, %194, %cst_93 {dimension_numbers = #tpu.dot_dimension_numbers<[1], [0], [0], [1], [0, 0, 1, 1], [], []>} : vector<16x16xf32>, vector<16x384xf32>, vector<16x384xf32> -> vector<16x384xf32>
    %c0_94 = arith.constant 0 : index
    %c0_95 = arith.constant 0 : index
    %196 = vector.load %arg26[%c0_94, %c0_95] : memref<1x384xf32, #tpu.memory_space<vmem>>, vector<1x384xf32>
    %197 = vector.broadcast %196 : vector<1x384xf32> to vector<16x384xf32>
    %198 = arith.addf %195, %197 : vector<16x384xf32>
    %cst_96 = arith.constant 0.000000e+00 : f32
    %199 = vector.broadcast %cst_96 : f32 to vector<16x384xf32>
    %200 = arith.maximumf %198, %199 : vector<16x384xf32>
    %c0_97 = arith.constant 0 : index
    %c0_98 = arith.constant 0 : index
    %201 = vector.load %arg27[%c0_97, %c0_98] : memref<384x384xf32, #tpu.memory_space<vmem>>, vector<384x384xf32>
    %cst_99 = arith.constant dense<0.000000e+00> : vector<16x384xf32>
    %202 = tpu.matmul %200, %201, %cst_99 {dimension_numbers = #tpu.dot_dimension_numbers<[1], [0], [0], [1], [0, 0, 1, 1], [], []>} : vector<16x384xf32>, vector<384x384xf32>, vector<16x384xf32> -> vector<16x384xf32>
    %c0_100 = arith.constant 0 : index
    %c0_101 = arith.constant 0 : index
    %203 = vector.load %arg28[%c0_100, %c0_101] : memref<1x384xf32, #tpu.memory_space<vmem>>, vector<1x384xf32>
    %204 = vector.broadcast %203 : vector<1x384xf32> to vector<16x384xf32>
    %205 = arith.addf %202, %204 : vector<16x384xf32>
    %cst_102 = arith.constant 0.000000e+00 : f32
    %206 = vector.broadcast %cst_102 : f32 to vector<16x384xf32>
    %207 = arith.maximumf %205, %206 : vector<16x384xf32>
    %c0_103 = arith.constant 0 : index
    %c0_104 = arith.constant 0 : index
    %208 = vector.load %arg29[%c0_103, %c0_104] : memref<384x3xf32, #tpu.memory_space<vmem>>, vector<384x3xf32>
    %cst_105 = arith.constant dense<0.000000e+00> : vector<16x3xf32>
    %209 = tpu.matmul %207, %208, %cst_105 {dimension_numbers = #tpu.dot_dimension_numbers<[1], [0], [0], [1], [0, 0, 1, 1], [], []>} : vector<16x384xf32>, vector<384x3xf32>, vector<16x3xf32> -> vector<16x3xf32>
    %210 = vector.shape_cast %209 : vector<16x3xf32> to vector<2x8x3xf32>
    %cst_106 = arith.constant dense<0.000000e+00> : vector<2x3xf32>
    %211 = vector.multi_reduction <add>, %210, %cst_106 [1] : vector<2x8x3xf32> to vector<2x3xf32>
    %c0_107 = arith.constant 0 : index
    %c0_108 = arith.constant 0 : index
    %212 = vector.load %arg30[%c0_107, %c0_108] : memref<1x3xf32, #tpu.memory_space<vmem>>, vector<1x3xf32>
    %213 = vector.broadcast %212 : vector<1x3xf32> to vector<2x3xf32>
    %214 = arith.addf %211, %213 : vector<2x3xf32>
    %c0_109 = arith.constant 0 : index
    %c0_110 = arith.constant 0 : index
    %215 = vector.load %arg31[%c0_109, %c0_110] : memref<2x3xf32, #tpu.memory_space<vmem>>, vector<2x3xf32>
    tpu.vector_store %arg31[%c0_109, %c0_110], %214 {strides = array<i32>} : memref<2x3xf32, #tpu.memory_space<vmem>>, vector<2x3xf32>,
    return
  }
}

</mosaic_0001>

<llo_original>
// kernel: tada_forward.1
$region0: #{tada_forward.1}
  #allocation0 [shape = 'u32[]', space=smem, size = 0x4, offset = 0x4, fixed_abs, tag = 'smem constant byte address 0x4 - core index']
  #allocation1 [shape = 'u32[144,128]{1,0:T(1,128)}', space=vmem, size = 0x12000, scoped, tag = 'internal scratch']
  %s0 = inlined_call_operand.smem [shape: u32[32], index: -1, kind: input, shape index: {}]
  %s1 = sld [smem:[%s0]]
  %s2 = scalar_lea.smem %s0, 1
  %s3 = sld [smem:[%s2]]
  %s4 = scalar_lea.smem %s0, 2
  %s5 = sld [smem:[%s4]]
  %s6 = scalar_lea.smem %s0, 3
  %s7 = sld [smem:[%s6]]
  %s8 = scalar_lea.smem %s0, 4
  %s9 = sld [smem:[%s8]]
  %s10 = scalar_lea.smem %s0, 5
  %s11 = sld [smem:[%s10]]
  %s12 = scalar_lea.smem %s0, 6
  %s13 = sld [smem:[%s12]]
  %s14 = scalar_lea.smem %s0, 7
  %s15 = sld [smem:[%s14]]
  %s16 = scalar_lea.smem %s0, 8
  %s17 = sld [smem:[%s16]]
  %s18 = scalar_lea.smem %s0, 9
  %s19 = sld [smem:[%s18]]
  %s20 = scalar_lea.smem %s0, 10
  %s21 = sld [smem:[%s20]]
  %s22 = scalar_lea.smem %s0, 11
  %s23 = sld [smem:[%s22]]
  %s24 = scalar_lea.smem %s0, 12
  %s25 = sld [smem:[%s24]]
  %s26 = scalar_lea.smem %s0, 13
  %s27 = sld [smem:[%s26]]
  %s28 = scalar_lea.smem %s0, 14
  %s29 = sld [smem:[%s28]]
  %s30 = scalar_lea.smem %s0, 15
  %s31 = sld [smem:[%s30]]
  %s32 = scalar_lea.smem %s0, 16
  %s33 = sld [smem:[%s32]]
  %s34 = scalar_lea.smem %s0, 17
  %s35 = sld [smem:[%s34]]
  %s36 = scalar_lea.smem %s0, 18
  %s37 = sld [smem:[%s36]]
  %s38 = scalar_lea.smem %s0, 19
  %s39 = sld [smem:[%s38]]
  %s40 = scalar_lea.smem %s0, 20
  %s41 = sld [smem:[%s40]]
  %s42 = scalar_lea.smem %s0, 21
  %s43 = sld [smem:[%s42]]
  %s44 = scalar_lea.smem %s0, 22
  %s45 = sld [smem:[%s44]]
  %s46 = scalar_lea.smem %s0, 23
  %s47 = sld [smem:[%s46]]
  %s48 = scalar_lea.smem %s0, 24
  %s49 = sld [smem:[%s48]]
  %s50 = scalar_lea.smem %s0, 25
  %s51 = sld [smem:[%s50]]
  %s52 = scalar_lea.smem %s0, 26
  %s53 = sld [smem:[%s52]]
  %s54 = scalar_lea.smem %s0, 27
  %s55 = sld [smem:[%s54]]
  %s56 = scalar_lea.smem %s0, 28
  %s57 = sld [smem:[%s56]]
  %s58 = scalar_lea.smem %s0, 29
  %s59 = sld [smem:[%s58]]
  %s60 = scalar_lea.smem %s0, 30
  %s61 = sld [smem:[%s60]]
  %s62 = scalar_lea.smem %s0, 31
  %s63 = sld [smem:[%s62]]
  %s64 = sld [smem:[#allocation0]]
  $region134: #{tada_forward.1} parent=0
    _
  %s66 = ssub.s32 1, %s64
  %s67 = scalar_select 0, %s66, %s64
  $region1: #{tada_forward.1} parent=0
    #allocation2 [shape = 'u8[1024]{0}', space=vmem, size = 0x400, scoped, tag = 'output window, operand 0, single buffered']
    #allocation3 [shape = 's32[1]{0}', space=sflag, size = 0x4, scoped, tag = 'scoped memory for tada_forward.1']
    %68 = vsyncpa [#allocation3], 0
    // Predicated region
    $region2: #{tada_forward.1} parent=1 // pred_check
      _
    $region3: #{tada_forward.1} parent=1 // pred_check_branch
      %70 = sbr.rel (0) target = $region5
    $region4: #{tada_forward.1} parent=1 // pred_region
      _
    $region5: #{tada_forward.1} parent=1 // pred_fallthru
      _
    // Predicated region
    $region6: #{tada_forward.1} parent=1 // pred_check
      _
    $region7: #{tada_forward.1} parent=1 // pred_check_branch
      %72 = sbr.rel (0) target = $region9
    $region8: #{tada_forward.1} parent=1 // pred_region
      _
    $region9: #{tada_forward.1} parent=1 // pred_fallthru
      _
    // Predicated region
    $region10: #{tada_forward.1} parent=1 // pred_check
      _
    $region11: #{tada_forward.1} parent=1 // pred_check_branch
      %74 = sbr.rel (0) target = $region13
    $region12: #{tada_forward.1} parent=1 // pred_region
      _
    $region13: #{tada_forward.1} parent=1 // pred_fallthru
      _
    // Predicated region
    $region14: #{tada_forward.1} parent=1 // pred_check
      _
    $region15: #{tada_forward.1} parent=1 // pred_check_branch
      %76 = sbr.rel (0) target = $region17
    $region16: #{tada_forward.1} parent=1 // pred_region
      _
    $region17: #{tada_forward.1} parent=1 // pred_fallthru
      _
    // Predicated region
    $region18: #{tada_forward.1} parent=1 // pred_check
      _
    $region19: #{tada_forward.1} parent=1 // pred_check_branch
      %78 = sbr.rel (0) target = $region21
    $region20: #{tada_forward.1} parent=1 // pred_region
      _
    $region21: #{tada_forward.1} parent=1 // pred_fallthru
      _
    // Predicated region
    $region22: #{tada_forward.1} parent=1 // pred_check
      _
    $region23: #{tada_forward.1} parent=1 // pred_check_branch
      %80 = sbr.rel (0) target = $region25
    $region24: #{tada_forward.1} parent=1 // pred_region
      _
    $region25: #{tada_forward.1} parent=1 // pred_fallthru
      _
    // Predicated region
    $region26: #{tada_forward.1} parent=1 // pred_check
      _
    $region27: #{tada_forward.1} parent=1 // pred_check_branch
      %82 = sbr.rel (0) target = $region29
    $region28: #{tada_forward.1} parent=1 // pred_region
      _
    $region29: #{tada_forward.1} parent=1 // pred_fallthru
      _
    // Predicated region
    $region30: #{tada_forward.1} parent=1 // pred_check
      _
    $region31: #{tada_forward.1} parent=1 // pred_check_branch
      %84 = sbr.rel (0) target = $region33
    $region32: #{tada_forward.1} parent=1 // pred_region
      _
    $region33: #{tada_forward.1} parent=1 // pred_fallthru
      _
    // Predicated region
    $region34: #{tada_forward.1} parent=1 // pred_check
      _
    $region35: #{tada_forward.1} parent=1 // pred_check_branch
      %86 = sbr.rel (0) target = $region37
    $region36: #{tada_forward.1} parent=1 // pred_region
      _
    $region37: #{tada_forward.1} parent=1 // pred_fallthru
      _
    // Predicated region
    $region38: #{tada_forward.1} parent=1 // pred_check
      _
    $region39: #{tada_forward.1} parent=1 // pred_check_branch
      %88 = sbr.rel (0) target = $region41
    $region40: #{tada_forward.1} parent=1 // pred_region
      _
    $region41: #{tada_forward.1} parent=1 // pred_fallthru
      _
    // Predicated region
    $region42: #{tada_forward.1} parent=1 // pred_check
      _
    $region43: #{tada_forward.1} parent=1 // pred_check_branch
      %90 = sbr.rel (0) target = $region45
    $region44: #{tada_forward.1} parent=1 // pred_region
      _
    $region45: #{tada_forward.1} parent=1 // pred_fallthru
      _
    // Predicated region
    $region46: #{tada_forward.1} parent=1 // pred_check
      _
    $region47: #{tada_forward.1} parent=1 // pred_check_branch
      %92 = sbr.rel (0) target = $region49
    $region48: #{tada_forward.1} parent=1 // pred_region
      _
    $region49: #{tada_forward.1} parent=1 // pred_fallthru
      _
    // Predicated region
    $region50: #{tada_forward.1} parent=1 // pred_check
      _
    $region51: #{tada_forward.1} parent=1 // pred_check_branch
      %94 = sbr.rel (0) target = $region53
    $region52: #{tada_forward.1} parent=1 // pred_region
      _
    $region53: #{tada_forward.1} parent=1 // pred_fallthru
      _
    // Predicated region
    $region54: #{tada_forward.1} parent=1 // pred_check
      _
    $region55: #{tada_forward.1} parent=1 // pred_check_branch
      %96 = sbr.rel (0) target = $region57
    $region56: #{tada_forward.1} parent=1 // pred_region
      _
    $region57: #{tada_forward.1} parent=1 // pred_fallthru
      _
    // Predicated region
    $region58: #{tada_forward.1} parent=1 // pred_check
      _
    $region59: #{tada_forward.1} parent=1 // pred_check_branch
      %98 = sbr.rel (0) target = $region61
    $region60: #{tada_forward.1} parent=1 // pred_region
      _
    $region61: #{tada_forward.1} parent=1 // pred_fallthru
      _
    // Predicated region
    $region62: #{tada_forward.1} parent=1 // pred_check
      _
    $region63: #{tada_forward.1} parent=1 // pred_check_branch
      %100 = sbr.rel (0) target = $region65
    $region64: #{tada_forward.1} parent=1 // pred_region
      _
    $region65: #{tada_forward.1} parent=1 // pred_fallthru
      _
    // Predicated region
    $region66: #{tada_forward.1} parent=1 // pred_check
      _
    $region67: #{tada_forward.1} parent=1 // pred_check_branch
      %102 = sbr.rel (0) target = $region69
    $region68: #{tada_forward.1} parent=1 // pred_region
      _
    $region69: #{tada_forward.1} parent=1 // pred_fallthru
      _
    // Predicated region
    $region70: #{tada_forward.1} parent=1 // pred_check
      _
    $region71: #{tada_forward.1} parent=1 // pred_check_branch
      %104 = sbr.rel (0) target = $region73
    $region72: #{tada_forward.1} parent=1 // pred_region
      _
    $region73: #{tada_forward.1} parent=1 // pred_fallthru
      _
    // Predicated region
    $region74: #{tada_forward.1} parent=1 // pred_check
      _
    $region75: #{tada_forward.1} parent=1 // pred_check_branch
      %106 = sbr.rel (0) target = $region77
    $region76: #{tada_forward.1} parent=1 // pred_region
      _
    $region77: #{tada_forward.1} parent=1 // pred_fallthru
      _
    // Predicated region
    $region78: #{tada_forward.1} parent=1 // pred_check
      _
    $region79: #{tada_forward.1} parent=1 // pred_check_branch
      %108 = sbr.rel (0) target = $region81
    $region80: #{tada_forward.1} parent=1 // pred_region
      _
    $region81: #{tada_forward.1} parent=1 // pred_fallthru
      _
    // Predicated region
    $region82: #{tada_forward.1} parent=1 // pred_check
      _
    $region83: #{tada_forward.1} parent=1 // pred_check_branch
      %110 = sbr.rel (0) target = $region85
    $region84: #{tada_forward.1} parent=1 // pred_region
      _
    $region85: #{tada_forward.1} parent=1 // pred_fallthru
      _
    // Predicated region
    $region86: #{tada_forward.1} parent=1 // pred_check
      _
    $region87: #{tada_forward.1} parent=1 // pred_check_branch
      %112 = sbr.rel (0) target = $region89
    $region88: #{tada_forward.1} parent=1 // pred_region
      _
    $region89: #{tada_forward.1} parent=1 // pred_fallthru
      _
    // Predicated region
    $region90: #{tada_forward.1} parent=1 // pred_check
      _
    $region91: #{tada_forward.1} parent=1 // pred_check_branch
      %114 = sbr.rel (0) target = $region93
    $region92: #{tada_forward.1} parent=1 // pred_region
      _
    $region93: #{tada_forward.1} parent=1 // pred_fallthru
      _
    // Predicated region
    $region94: #{tada_forward.1} parent=1 // pred_check
      _
    $region95: #{tada_forward.1} parent=1 // pred_check_branch
      %116 = sbr.rel (0) target = $region97
    $region96: #{tada_forward.1} parent=1 // pred_region
      _
    $region97: #{tada_forward.1} parent=1 // pred_fallthru
      _
    // Predicated region
    $region98: #{tada_forward.1} parent=1 // pred_check
      _
    $region99: #{tada_forward.1} parent=1 // pred_check_branch
      %118 = sbr.rel (0) target = $region101
    $region100: #{tada_forward.1} parent=1 // pred_region
      _
    $region101: #{tada_forward.1} parent=1 // pred_fallthru
      _
    // Predicated region
    $region102: #{tada_forward.1} parent=1 // pred_check
      _
    $region103: #{tada_forward.1} parent=1 // pred_check_branch
      %120 = sbr.rel (0) target = $region105
    $region104: #{tada_forward.1} parent=1 // pred_region
      _
    $region105: #{tada_forward.1} parent=1 // pred_fallthru
      _
    // Predicated region
    $region106: #{tada_forward.1} parent=1 // pred_check
      _
    $region107: #{tada_forward.1} parent=1 // pred_check_branch
      %122 = sbr.rel (0) target = $region109
    $region108: #{tada_forward.1} parent=1 // pred_region
      _
    $region109: #{tada_forward.1} parent=1 // pred_fallthru
      _
    // Predicated region
    $region110: #{tada_forward.1} parent=1 // pred_check
      _
    $region111: #{tada_forward.1} parent=1 // pred_check_branch
      %124 = sbr.rel (0) target = $region113
    $region112: #{tada_forward.1} parent=1 // pred_region
      _
    $region113: #{tada_forward.1} parent=1 // pred_fallthru
      _
    // Predicated region
    $region114: #{tada_forward.1} parent=1 // pred_check
      _
    $region115: #{tada_forward.1} parent=1 // pred_check_branch
      %126 = sbr.rel (0) target = $region117
    $region116: #{tada_forward.1} parent=1 // pred_region
      _
    $region117: #{tada_forward.1} parent=1 // pred_fallthru
      _
    // Predicated region
    $region118: #{tada_forward.1} parent=1 // pred_check
      _
    $region119: #{tada_forward.1} parent=1 // pred_check_branch
      %128 = sbr.rel (0) target = $region121
    $region120: #{tada_forward.1} parent=1 // pred_region
      _
    $region121: #{tada_forward.1} parent=1 // pred_fallthru
      _
    // Predicated region
    $region122: #{tada_forward.1} parent=1 // pred_check
      _
    $region123: #{tada_forward.1} parent=1 // pred_check_branch
      %130 = sbr.rel (0) target = $region125
    $region124: #{tada_forward.1} parent=1 // pred_region
      _
    $region125: #{tada_forward.1} parent=1 // pred_fallthru
      _
    %v131 = vld [vmem:[%s1] sm:$0xff]
    %v132 = vld [vmem:[%s1 + $0x8] sm:$0xff]
    %v133 = vld [vmem:[%s1 + $0x10] sm:$0xff]
    %v134 = vld [vmem:[%s1 + $0x18] sm:$0xff]
    %v135 = vld [vmem:[%s1 + $0x20] sm:$0xff]
    %v136 = vld [vmem:[%s1 + $0x28] sm:$0xff]
    %v137 = vld [vmem:[%s1 + $0x30] sm:$0xff]
    %v138 = vld [vmem:[%s1 + $0x38] sm:$0xff]
    %v139 = vld [vmem:[%s1 + $0x40] sm:$0xff]
    %v140 = vld [vmem:[%s1 + $0x48] sm:$0xff]
    %v141 = vld [vmem:[%s1 + $0x50] sm:$0xff]
    %v142 = vld [vmem:[%s1 + $0x58] sm:$0xff]
    %v143 = vld [vmem:[%s1 + $0x60] sm:$0xff]
    %v144 = vld [vmem:[%s1 + $0x68] sm:$0xff]
    %v145 = vld [vmem:[%s1 + $0x70] sm:$0xff]
    %v146 = vld [vmem:[%s1 + $0x78] sm:$0xff]
    %v147 = vld [vmem:[%s3] sm:$0xff]
    %v148 = vld [vmem:[%s3 + $0x8] sm:$0xff]
    %v149 = vld [vmem:[%s3 + $0x10] sm:$0xff]
    %v150 = vld [vmem:[%s3 + $0x18] sm:$0xff]
    %v151 = vld [vmem:[%s3 + $0x20] sm:$0xff]
    %v152 = vld [vmem:[%s3 + $0x28] sm:$0xff]
    %v153 = vld [vmem:[%s3 + $0x30] sm:$0xff]
    %v154 = vld [vmem:[%s3 + $0x38] sm:$0xff]
    %v155 = vld [vmem:[%s3 + $0x40] sm:$0xff]
    %v156 = vld [vmem:[%s3 + $0x48] sm:$0xff]
    %v157 = vld [vmem:[%s3 + $0x50] sm:$0xff]
    %v158 = vld [vmem:[%s3 + $0x58] sm:$0xff]
    %v159 = vld [vmem:[%s3 + $0x60] sm:$0xff]
    %v160 = vld [vmem:[%s3 + $0x68] sm:$0xff]
    %v161 = vld [vmem:[%s3 + $0x70] sm:$0xff]
    %v162 = vld [vmem:[%s3 + $0x78] sm:$0xff]
    %v163 = vld [vmem:[%s5] sm:$0xff]
    %v164 = vld [vmem:[%s5 + $0x8] sm:$0xff]
    %v165 = vld [vmem:[%s5 + $0x10] sm:$0xff]
    %v166 = vld [vmem:[%s5 + $0x18] sm:$0xff]
    %v167 = vld [vmem:[%s5 + $0x20] sm:$0xff]
    %v168 = vld [vmem:[%s5 + $0x28] sm:$0xff]
    %v169 = vld [vmem:[%s5 + $0x30] sm:$0xff]
    %v170 = vld [vmem:[%s5 + $0x38] sm:$0xff]
    %v171 = vld [vmem:[%s5 + $0x40] sm:$0xff]
    %v172 = vld [vmem:[%s5 + $0x48] sm:$0xff]
    %v173 = vld [vmem:[%s5 + $0x50] sm:$0xff]
    %v174 = vld [vmem:[%s5 + $0x58] sm:$0xff]
    %v175 = vld [vmem:[%s5 + $0x60] sm:$0xff]
    %v176 = vld [vmem:[%s5 + $0x68] sm:$0xff]
    %v177 = vld [vmem:[%s5 + $0x70] sm:$0xff]
    %v178 = vld [vmem:[%s5 + $0x78] sm:$0xff]
    %v179 = vld [vmem:[%s15] sm:$0x3]
    %181 = vset.pattern.permute.xlu0 0
    %182 = vperm.xlu0 %181, %v131
    %v183 = vpop.permute.xlu0 %182
    %186 = vset.pattern.permute.xlu0 0
    %187 = vperm.xlu0 %186, %v132
    %v188 = vpop.permute.xlu0 %187
    %191 = vset.pattern.permute.xlu0 0
    %192 = vperm.xlu0 %191, %v133
    %v193 = vpop.permute.xlu0 %192
    %196 = vset.pattern.permute.xlu0 0
    %197 = vperm.xlu0 %196, %v134
    %v198 = vpop.permute.xlu0 %197
    %201 = vset.pattern.permute.xlu0 0
    %202 = vperm.xlu0 %201, %v135
    %v203 = vpop.permute.xlu0 %202
    %206 = vset.pattern.permute.xlu0 0
    %207 = vperm.xlu0 %206, %v136
    %v208 = vpop.permute.xlu0 %207
    %211 = vset.pattern.permute.xlu0 0
    %212 = vperm.xlu0 %211, %v137
    %v213 = vpop.permute.xlu0 %212
    %216 = vset.pattern.permute.xlu0 0
    %217 = vperm.xlu0 %216, %v138
    %v218 = vpop.permute.xlu0 %217
    %221 = vset.pattern.permute.xlu0 0
    %222 = vperm.xlu0 %221, %v139
    %v223 = vpop.permute.xlu0 %222
    %226 = vset.pattern.permute.xlu0 0
    %227 = vperm.xlu0 %226, %v140
    %v228 = vpop.permute.xlu0 %227
    %231 = vset.pattern.permute.xlu0 0
    %232 = vperm.xlu0 %231, %v141
    %v233 = vpop.permute.xlu0 %232
    %236 = vset.pattern.permute.xlu0 0
    %237 = vperm.xlu0 %236, %v142
    %v238 = vpop.permute.xlu0 %237
    %241 = vset.pattern.permute.xlu0 0
    %242 = vperm.xlu0 %241, %v143
    %v243 = vpop.permute.xlu0 %242
    %246 = vset.pattern.permute.xlu0 0
    %247 = vperm.xlu0 %246, %v144
    %v248 = vpop.permute.xlu0 %247
    %251 = vset.pattern.permute.xlu0 0
    %252 = vperm.xlu0 %251, %v145
    %v253 = vpop.permute.xlu0 %252
    %256 = vset.pattern.permute.xlu0 0
    %257 = vperm.xlu0 %256, %v146
    %v258 = vpop.permute.xlu0 %257
    %v260 = vlaneseq
    %v261 = vshrl.u32 %v260, 7
    %v262 = vsub.s32 0, %v261
    %v263 = vrot.slane %v179, %v262
    %v264 = vmul.f32 %v183, %v263
    %v265 = vmul.f32 %v188, %v263
    %v266 = vmul.f32 %v193, %v263
    %v267 = vmul.f32 %v198, %v263
    %v268 = vmul.f32 %v203, %v263
    %v269 = vmul.f32 %v208, %v263
    %v270 = vmul.f32 %v213, %v263
    %v271 = vmul.f32 %v218, %v263
    %v272 = vmul.f32 %v223, %v263
    %v273 = vmul.f32 %v228, %v263
    %v274 = vmul.f32 %v233, %v263
    %v275 = vmul.f32 %v238, %v263
    %v276 = vmul.f32 %v243, %v263
    %v277 = vmul.f32 %v248, %v263
    %v278 = vmul.f32 %v253, %v263
    %v279 = vmul.f32 %v258, %v263
    %281 = vset.pattern.permute.xlu0 0
    %282 = vperm.xlu0 %281, %v147
    %v283 = vpop.permute.xlu0 %282
    %286 = vset.pattern.permute.xlu0 0
    %287 = vperm.xlu0 %286, %v148
    %v288 = vpop.permute.xlu0 %287
    %291 = vset.pattern.permute.xlu0 0
    %292 = vperm.xlu0 %291, %v149
    %v293 = vpop.permute.xlu0 %292
    %296 = vset.pattern.permute.xlu0 0
    %297 = vperm.xlu0 %296, %v150
    %v298 = vpop.permute.xlu0 %297
    %301 = vset.pattern.permute.xlu0 0
    %302 = vperm.xlu0 %301, %v151
    %v303 = vpop.permute.xlu0 %302
    %306 = vset.pattern.permute.xlu0 0
    %307 = vperm.xlu0 %306, %v152
    %v308 = vpop.permute.xlu0 %307
    %311 = vset.pattern.permute.xlu0 0
    %312 = vperm.xlu0 %311, %v153
    %v313 = vpop.permute.xlu0 %312
    %316 = vset.pattern.permute.xlu0 0
    %317 = vperm.xlu0 %316, %v154
    %v318 = vpop.permute.xlu0 %317
    %321 = vset.pattern.permute.xlu0 0
    %322 = vperm.xlu0 %321, %v155
    %v323 = vpop.permute.xlu0 %322
    %326 = vset.pattern.permute.xlu0 0
    %327 = vperm.xlu0 %326, %v156
    %v328 = vpop.permute.xlu0 %327
    %331 = vset.pattern.permute.xlu0 0
    %332 = vperm.xlu0 %331, %v157
    %v333 = vpop.permute.xlu0 %332
    %336 = vset.pattern.permute.xlu0 0
    %337 = vperm.xlu0 %336, %v158
    %v338 = vpop.permute.xlu0 %337
    %341 = vset.pattern.permute.xlu0 0
    %342 = vperm.xlu0 %341, %v159
    %v343 = vpop.permute.xlu0 %342
    %346 = vset.pattern.permute.xlu0 0
    %347 = vperm.xlu0 %346, %v160
    %v348 = vpop.permute.xlu0 %347
    %351 = vset.pattern.permute.xlu0 0
    %352 = vperm.xlu0 %351, %v161
    %v353 = vpop.permute.xlu0 %352
    %356 = vset.pattern.permute.xlu0 0
    %357 = vperm.xlu0 %356, %v162
    %v358 = vpop.permute.xlu0 %357
    %v360 = vlaneseq
    %v361 = vshrl.u32 %v360, 7
    %v362 = vsub.s32 1, %v361
    %v363 = vrot.slane %v179, %v362
    %v364 = vmul.f32 %v283, %v363
    %v365 = vmul.f32 %v288, %v363
    %v366 = vmul.f32 %v293, %v363
    %v367 = vmul.f32 %v298, %v363
    %v368 = vmul.f32 %v303, %v363
    %v369 = vmul.f32 %v308, %v363
    %v370 = vmul.f32 %v313, %v363
    %v371 = vmul.f32 %v318, %v363
    %v372 = vmul.f32 %v323, %v363
    %v373 = vmul.f32 %v328, %v363
    %v374 = vmul.f32 %v333, %v363
    %v375 = vmul.f32 %v338, %v363
    %v376 = vmul.f32 %v343, %v363
    %v377 = vmul.f32 %v348, %v363
    %v378 = vmul.f32 %v353, %v363
    %v379 = vmul.f32 %v358, %v363
    %v380 = vadd.f32 %v264, %v364
    %v381 = vadd.f32 %v265, %v365
    %v382 = vadd.f32 %v266, %v366
    %v383 = vadd.f32 %v267, %v367
    %v384 = vadd.f32 %v268, %v368
    %v385 = vadd.f32 %v269, %v369
    %v386 = vadd.f32 %v270, %v370
    %v387 = vadd.f32 %v271, %v371
    %v388 = vadd.f32 %v272, %v372
    %v389 = vadd.f32 %v273, %v373
    %v390 = vadd.f32 %v274, %v374
    %v391 = vadd.f32 %v275, %v375
    %v392 = vadd.f32 %v276, %v376
    %v393 = vadd.f32 %v277, %v377
    %v394 = vadd.f32 %v278, %v378
    %v395 = vadd.f32 %v279, %v379
    %v396 = vld [vmem:[%s17] sm:$0x1]
    %v398 = vlaneseq
    %v399 = vshrl.u32 %v398, 7
    %v400 = vsub.s32 0, %v399
    %v401 = vrot.slane %v396, %v400
    %v403 = vadd.f32 %v380, %v401
    %v404 = vadd.f32 %v381, %v401
    %v405 = vadd.f32 %v382, %v401
    %v406 = vadd.f32 %v383, %v401
    %v407 = vadd.f32 %v384, %v401
    %v408 = vadd.f32 %v385, %v401
    %v409 = vadd.f32 %v386, %v401
    %v410 = vadd.f32 %v387, %v401
    %v411 = vadd.f32 %v388, %v401
    %v412 = vadd.f32 %v389, %v401
    %v413 = vadd.f32 %v390, %v401
    %v414 = vadd.f32 %v391, %v401
    %v415 = vadd.f32 %v392, %v401
    %v416 = vadd.f32 %v393, %v401
    %v417 = vadd.f32 %v394, %v401
    %v418 = vadd.f32 %v395, %v401
    %v419 = vmax.f32 %v403, 0.0
    %v420 = vmax.f32 %v404, 0.0
    %v421 = vmax.f32 %v405, 0.0
    %v422 = vmax.f32 %v406, 0.0
    %v423 = vmax.f32 %v407, 0.0
    %v424 = vmax.f32 %v408, 0.0
    %v425 = vmax.f32 %v409, 0.0
    %v426 = vmax.f32 %v410, 0.0
    %v427 = vmax.f32 %v411, 0.0
    %v428 = vmax.f32 %v412, 0.0
    %v429 = vmax.f32 %v413, 0.0
    %v430 = vmax.f32 %v414, 0.0
    %v431 = vmax.f32 %v415, 0.0
    %v432 = vmax.f32 %v416, 0.0
    %v433 = vmax.f32 %v417, 0.0
    %v434 = vmax.f32 %v418, 0.0
    %v435 = vld [vmem:[%s19] sm:$0xff]
    %v436 = vld [vmem:[%s19 + $0x8] sm:$0xff]
    %v437 = vld [vmem:[%s19 + $0x10] sm:$0xff]
    %v438 = vld [vmem:[%s19 + $0x18] sm:$0xff]
    %v439 = vld [vmem:[%s21] sm:$0x1]
    %v441 = vlaneseq
    %v442 = vshrl.u32 %v441, 7
    %v443 = vsub.s32 0, %v442
    %v444 = vrot.slane %v439, %v443
    %vm446 = vcmask 261120
    %v448 = vsel %vm446, %v419, 0
    %v451 = vsel %vm446, %v420, 0
    %v454 = vsel %vm446, %v421, 0
    %v457 = vsel %vm446, %v422, 0
    %v460 = vsel %vm446, %v423, 0
    %v463 = vsel %vm446, %v424, 0
    %v466 = vsel %vm446, %v425, 0
    %v469 = vsel %vm446, %v426, 0
    %v472 = vsel %vm446, %v427, 0
    %v475 = vsel %vm446, %v428, 0
    %v478 = vsel %vm446, %v429, 0
    %v481 = vsel %vm446, %v430, 0
    %v484 = vsel %vm446, %v431, 0
    %v487 = vsel %vm446, %v432, 0
    %v490 = vsel %vm446, %v433, 0
    %v493 = vsel %vm446, %v434, 0
    %495 = vmatprep.subr.mxu0 0.0
    %496 = vmatpush1.msra.mxu0 %v435
    %497 = vmatprep.subr.mxu0 0.0
    %498 = vmatpush1.msra.mxu0 %v436
    %499 = vmatprep.subr.mxu0 0.0
    %500 = vmatpush1.msra.mxu0 %v437
    %501 = vmatprep.subr.mxu0 0.0
    %502 = vmatpush1.msra.mxu0 %v438
    %503 = vmatprep.subr.mxu0 0.0
    %504 = vmatpush1.msra.mxu0 0.0
    %505 = vmatprep.subr.mxu0 0.0
    %506 = vmatpush1.msra.mxu0 0.0
    %507 = vmatprep.subr.mxu0 0.0
    %508 = vmatpush1.msra.mxu0 0.0
    %509 = vmatprep.subr.mxu0 0.0
    %510 = vmatpush1.msra.mxu0 0.0
    %511 = vmatprep.subr.mxu0 0.0
    %512 = vmatpush1.msra.mxu0 0.0
    %513 = vmatprep.subr.mxu0 0.0
    %514 = vmatpush1.msra.mxu0 0.0
    %515 = vmatprep.subr.mxu0 0.0
    %516 = vmatpush1.msra.mxu0 0.0
    %517 = vmatprep.subr.mxu0 0.0
    %518 = vmatpush1.msra.mxu0 0.0
    %519 = vmatprep.subr.mxu0 0.0
    %520 = vmatpush1.msra.mxu0 0.0
    %521 = vmatprep.subr.mxu0 0.0
    %522 = vmatpush1.msra.mxu0 0.0
    %523 = vmatprep.subr.mxu0 0.0
    %524 = vmatpush1.msra.mxu0 0.0
    %525 = vmatprep.subr.mxu0 0.0
    %526 = vmatpush1.msra.mxu0 0.0
    %527 = vmatprep.subr.mxu0 0.0
    %528 = vmatpush1.msra.mxu0 0.0
    %529 = vmatprep.subr.mxu0 0.0
    %530 = vmatpush1.msra.mxu0 0.0
    %531 = vmatprep.subr.mxu0 0.0
    %532 = vmatpush1.msra.mxu0 0.0
    %533 = vmatprep.subr.mxu0 0.0
    %534 = vmatpush1.msra.mxu0 0.0
    %535 = vmatprep.subr.mxu0 0.0
    %536 = vmatpush1.msra.mxu0 0.0
    %537 = vmatprep.subr.mxu0 0.0
    %538 = vmatpush1.msra.mxu0 0.0
    %539 = vmatprep.subr.mxu0 0.0
    %540 = vmatpush1.msra.mxu0 0.0
    %541 = vmatprep.subr.mxu0 0.0
    %542 = vmatpush1.msra.mxu0 0.0
    %543 = vmatprep.subr.mxu0 0.0
    %544 = vmatpush1.msra.mxu0 0.0
    %545 = vmatprep.subr.mxu0 0.0
    %546 = vmatpush1.msra.mxu0 0.0
    %547 = vmatprep.subr.mxu0 0.0
    %548 = vmatpush1.msra.mxu0 0.0
    %549 = vmatprep.subr.mxu0 0.0
    %550 = vmatpush1.msra.mxu0 0.0
    %551 = vmatprep.subr.mxu0 0.0
    %552 = vmatpush1.msra.mxu0 0.0
    %553 = vmatprep.subr.mxu0 0.0
    %554 = vmatpush1.msra.mxu0 0.0
    %555 = vmatprep.subr.mxu0 0.0
    %556 = vmatpush1.msra.mxu0 0.0
    %557 = vmatprep.subr.mxu0 0.0
    %558 = vmatpush1.msra.mxu0 0.0
    %559 = vmatprep.mubr.f32.mxu0 0.0
    %560 = vmatmul.mubr.f32.gmra.mrb[0].mxu0 %v448
    %v561 = vpop.f32.mrb[0].mxu0
    %v562 = vadd.f32 %v444, %v561
    %v563 = vpop.f32.mrb[0].mxu0
    %564 = vmatprep.mubr.f32.mxu0 0.0
    %565 = vmatmul.mubr.f32.gmra.mrb[0].mxu0 %v451
    %v566 = vpop.f32.mrb[0].mxu0
    %v567 = vadd.f32 %v444, %v566
    %v568 = vpop.f32.mrb[0].mxu0
    %569 = vmatprep.mubr.f32.mxu0 0.0
    %570 = vmatmul.mubr.f32.gmra.mrb[0].mxu0 %v454
    %v571 = vpop.f32.mrb[0].mxu0
    %v572 = vadd.f32 %v444, %v571
    %v573 = vpop.f32.mrb[0].mxu0
    %574 = vmatprep.mubr.f32.mxu0 0.0
    %575 = vmatmul.mubr.f32.gmra.mrb[0].mxu0 %v457
    %v576 = vpop.f32.mrb[0].mxu0
    %v577 = vadd.f32 %v444, %v576
    %v578 = vpop.f32.mrb[0].mxu0
    %579 = vmatprep.mubr.f32.mxu0 0.0
    %580 = vmatmul.mubr.f32.gmra.mrb[0].mxu0 %v460
    %v581 = vpop.f32.mrb[0].mxu0
    %v582 = vadd.f32 %v444, %v581
    %v583 = vpop.f32.mrb[0].mxu0
    %584 = vmatprep.mubr.f32.mxu0 0.0
    %585 = vmatmul.mubr.f32.gmra.mrb[0].mxu0 %v463
    %v586 = vpop.f32.mrb[0].mxu0
    %v587 = vadd.f32 %v444, %v586
    %v588 = vpop.f32.mrb[0].mxu0
    %589 = vmatprep.mubr.f32.mxu0 0.0
    %590 = vmatmul.mubr.f32.gmra.mrb[0].mxu0 %v466
    %v591 = vpop.f32.mrb[0].mxu0
    %v592 = vadd.f32 %v444, %v591
    %v593 = vpop.f32.mrb[0].mxu0
    %594 = vmatprep.mubr.f32.mxu0 0.0
    %595 = vmatmul.mubr.f32.gmra.mrb[0].mxu0 %v469
    %v596 = vpop.f32.mrb[0].mxu0
    %v597 = vadd.f32 %v444, %v596
    %v598 = vpop.f32.mrb[0].mxu0
    %599 = vmatprep.mubr.f32.mxu0 0.0
    %600 = vmatmul.mubr.f32.gmra.mrb[0].mxu0 %v472
    %v601 = vpop.f32.mrb[0].mxu0
    %v602 = vadd.f32 %v444, %v601
    %v603 = vpop.f32.mrb[0].mxu0
    %604 = vmatprep.mubr.f32.mxu0 0.0
    %605 = vmatmul.mubr.f32.gmra.mrb[0].mxu0 %v475
    %v606 = vpop.f32.mrb[0].mxu0
    %v607 = vadd.f32 %v444, %v606
    %v608 = vpop.f32.mrb[0].mxu0
    %609 = vmatprep.mubr.f32.mxu0 0.0
    %610 = vmatmul.mubr.f32.gmra.mrb[0].mxu0 %v478
    %v611 = vpop.f32.mrb[0].mxu0
    %v612 = vadd.f32 %v444, %v611
    %v613 = vpop.f32.mrb[0].mxu0
    %614 = vmatprep.mubr.f32.mxu0 0.0
    %615 = vmatmul.mubr.f32.gmra.mrb[0].mxu0 %v481
    %v616 = vpop.f32.mrb[0].mxu0
    %v617 = vadd.f32 %v444, %v616
    %v618 = vpop.f32.mrb[0].mxu0
    %619 = vmatprep.mubr.f32.mxu0 0.0
    %620 = vmatmul.mubr.f32.gmra.mrb[0].mxu0 %v484
    %v621 = vpop.f32.mrb[0].mxu0
    %v622 = vadd.f32 %v444, %v621
    %v623 = vpop.f32.mrb[0].mxu0
    %624 = vmatprep.mubr.f32.mxu0 0.0
    %625 = vmatmul.mubr.f32.gmra.mrb[0].mxu0 %v487
    %v626 = vpop.f32.mrb[0].mxu0
    %v627 = vadd.f32 %v444, %v626
    %v628 = vpop.f32.mrb[0].mxu0
    %629 = vmatprep.mubr.f32.mxu0 0.0
    %630 = vmatmul.mubr.f32.gmra.mrb[0].mxu0 %v490
    %v631 = vpop.f32.mrb[0].mxu0
    %v632 = vadd.f32 %v444, %v631
    %v633 = vpop.f32.mrb[0].mxu0
    %634 = vmatprep.mubr.f32.mxu0 0.0
    %635 = vmatmul.mubr.f32.gmra.mrb[0].mxu0 %v493
    %v636 = vpop.f32.mrb[0].mxu0
    %v637 = vadd.f32 %v444, %v636
    %v638 = vpop.f32.mrb[0].mxu0
    %639 = vdwg.mxu0
    %vm640 = vcmask 130048
    %v641 = vsel %vm640, %v562, 0.0
    %v642 = vrot.slane %v641, 4
    %v643 = vadd.f32 %v641, %v642
    %v644 = vrot.slane %v643, 2
    %v645 = vadd.f32 %v643, %v644
    %v646 = vrot.slane %v645, 1
    %v647 = vadd.f32 %v645, %v646
    %v648 = vsel %vm640, %v567, 0.0
    %v649 = vrot.slane %v648, 4
    %v650 = vadd.f32 %v648, %v649
    %v651 = vrot.slane %v650, 2
    %v652 = vadd.f32 %v650, %v651
    %v653 = vrot.slane %v652, 1
    %v654 = vadd.f32 %v652, %v653
    %v655 = vsel %vm640, %v572, 0.0
    %v656 = vrot.slane %v655, 4
    %v657 = vadd.f32 %v655, %v656
    %v658 = vrot.slane %v657, 2
    %v659 = vadd.f32 %v657, %v658
    %v660 = vrot.slane %v659, 1
    %v661 = vadd.f32 %v659, %v660
    %v662 = vsel %vm640, %v577, 0.0
    %v663 = vrot.slane %v662, 4
    %v664 = vadd.f32 %v662, %v663
    %v665 = vrot.slane %v664, 2
    %v666 = vadd.f32 %v664, %v665
    %v667 = vrot.slane %v666, 1
    %v668 = vadd.f32 %v666, %v667
    %v669 = vsel %vm640, %v582, 0.0
    %v670 = vrot.slane %v669, 4
    %v671 = vadd.f32 %v669, %v670
    %v672 = vrot.slane %v671, 2
    %v673 = vadd.f32 %v671, %v672
    %v674 = vrot.slane %v673, 1
    %v675 = vadd.f32 %v673, %v674
    %v676 = vsel %vm640, %v587, 0.0
    %v677 = vrot.slane %v676, 4
    %v678 = vadd.f32 %v676, %v677
    %v679 = vrot.slane %v678, 2
    %v680 = vadd.f32 %v678, %v679
    %v681 = vrot.slane %v680, 1
    %v682 = vadd.f32 %v680, %v681
    %v683 = vsel %vm640, %v592, 0.0
    %v684 = vrot.slane %v683, 4
    %v685 = vadd.f32 %v683, %v684
    %v686 = vrot.slane %v685, 2
    %v687 = vadd.f32 %v685, %v686
    %v688 = vrot.slane %v687, 1
    %v689 = vadd.f32 %v687, %v688
    %v690 = vsel %vm640, %v597, 0.0
    %v691 = vrot.slane %v690, 4
    %v692 = vadd.f32 %v690, %v691
    %v693 = vrot.slane %v692, 2
    %v694 = vadd.f32 %v692, %v693
    %v695 = vrot.slane %v694, 1
    %v696 = vadd.f32 %v694, %v695
    %v697 = vsel %vm640, %v602, 0.0
    %v698 = vrot.slane %v697, 4
    %v699 = vadd.f32 %v697, %v698
    %v700 = vrot.slane %v699, 2
    %v701 = vadd.f32 %v699, %v700
    %v702 = vrot.slane %v701, 1
    %v703 = vadd.f32 %v701, %v702
    %v704 = vsel %vm640, %v607, 0.0
    %v705 = vrot.slane %v704, 4
    %v706 = vadd.f32 %v704, %v705
    %v707 = vrot.slane %v706, 2
    %v708 = vadd.f32 %v706, %v707
    %v709 = vrot.slane %v708, 1
    %v710 = vadd.f32 %v708, %v709
    %v711 = vsel %vm640, %v612, 0.0
    %v712 = vrot.slane %v711, 4
    %v713 = vadd.f32 %v711, %v712
    %v714 = vrot.slane %v713, 2
    %v715 = vadd.f32 %v713, %v714
    %v716 = vrot.slane %v715, 1
    %v717 = vadd.f32 %v715, %v716
    %v718 = vsel %vm640, %v617, 0.0
    %v719 = vrot.slane %v718, 4
    %v720 = vadd.f32 %v718, %v719
    %v721 = vrot.slane %v720, 2
    %v722 = vadd.f32 %v720, %v721
    %v723 = vrot.slane %v722, 1
    %v724 = vadd.f32 %v722, %v723
    %v725 = vsel %vm640, %v622, 0.0
    %v726 = vrot.slane %v725, 4
    %v727 = vadd.f32 %v725, %v726
    %v728 = vrot.slane %v727, 2
    %v729 = vadd.f32 %v727, %v728
    %v730 = vrot.slane %v729, 1
    %v731 = vadd.f32 %v729, %v730
    %v732 = vsel %vm640, %v627, 0.0
    %v733 = vrot.slane %v732, 4
    %v734 = vadd.f32 %v732, %v733
    %v735 = vrot.slane %v734, 2
    %v736 = vadd.f32 %v734, %v735
    %v737 = vrot.slane %v736, 1
    %v738 = vadd.f32 %v736, %v737
    %v739 = vsel %vm640, %v632, 0.0
    %v740 = vrot.slane %v739, 4
    %v741 = vadd.f32 %v739, %v740
    %v742 = vrot.slane %v741, 2
    %v743 = vadd.f32 %v741, %v742
    %v744 = vrot.slane %v743, 1
    %v745 = vadd.f32 %v743, %v744
    %v746 = vsel %vm640, %v637, 0.0
    %v747 = vrot.slane %v746, 4
    %v748 = vadd.f32 %v746, %v747
    %v749 = vrot.slane %v748, 2
    %v750 = vadd.f32 %v748, %v749
    %v751 = vrot.slane %v750, 1
    %v752 = vadd.f32 %v750, %v751
    %vm753 = vcmask 7168
    %v754 = vsel %vm753, %v163, 0.0
    %v755 = vrot.slane %v754, 4
    %v756 = vadd.f32 %v754, %v755
    %v757 = vrot.slane %v756, 2
    %v758 = vadd.f32 %v756, %v757
    %v759 = vrot.slane %v758, 1
    %v760 = vadd.f32 %v758, %v759
    %v761 = vsel %vm753, %v164, 0.0
    %v762 = vrot.slane %v761, 4
    %v763 = vadd.f32 %v761, %v762
    %v764 = vrot.slane %v763, 2
    %v765 = vadd.f32 %v763, %v764
    %v766 = vrot.slane %v765, 1
    %v767 = vadd.f32 %v765, %v766
    %v768 = vsel %vm753, %v165, 0.0
    %v769 = vrot.slane %v768, 4
    %v770 = vadd.f32 %v768, %v769
    %v771 = vrot.slane %v770, 2
    %v772 = vadd.f32 %v770, %v771
    %v773 = vrot.slane %v772, 1
    %v774 = vadd.f32 %v772, %v773
    %v775 = vsel %vm753, %v166, 0.0
    %v776 = vrot.slane %v775, 4
    %v777 = vadd.f32 %v775, %v776
    %v778 = vrot.slane %v777, 2
    %v779 = vadd.f32 %v777, %v778
    %v780 = vrot.slane %v779, 1
    %v781 = vadd.f32 %v779, %v780
    %v782 = vsel %vm753, %v167, 0.0
    %v783 = vrot.slane %v782, 4
    %v784 = vadd.f32 %v782, %v783
    %v785 = vrot.slane %v784, 2
    %v786 = vadd.f32 %v784, %v785
    %v787 = vrot.slane %v786, 1
    %v788 = vadd.f32 %v786, %v787
    %v789 = vsel %vm753, %v168, 0.0
    %v790 = vrot.slane %v789, 4
    %v791 = vadd.f32 %v789, %v790
    %v792 = vrot.slane %v791, 2
    %v793 = vadd.f32 %v791, %v792
    %v794 = vrot.slane %v793, 1
    %v795 = vadd.f32 %v793, %v794
    %v796 = vsel %vm753, %v169, 0.0
    %v797 = vrot.slane %v796, 4
    %v798 = vadd.f32 %v796, %v797
    %v799 = vrot.slane %v798, 2
    %v800 = vadd.f32 %v798, %v799
    %v801 = vrot.slane %v800, 1
    %v802 = vadd.f32 %v800, %v801
    %v803 = vsel %vm753, %v170, 0.0
    %v804 = vrot.slane %v803, 4
    %v805 = vadd.f32 %v803, %v804
    %v806 = vrot.slane %v805, 2
    %v807 = vadd.f32 %v805, %v806
    %v808 = vrot.slane %v807, 1
    %v809 = vadd.f32 %v807, %v808
    %v810 = vsel %vm753, %v171, 0.0
    %v811 = vrot.slane %v810, 4
    %v812 = vadd.f32 %v810, %v811
    %v813 = vrot.slane %v812, 2
    %v814 = vadd.f32 %v812, %v813
    %v815 = vrot.slane %v814, 1
    %v816 = vadd.f32 %v814, %v815
    %v817 = vsel %vm753, %v172, 0.0
    %v818 = vrot.slane %v817, 4
    %v819 = vadd.f32 %v817, %v818
    %v820 = vrot.slane %v819, 2
    %v821 = vadd.f32 %v819, %v820
    %v822 = vrot.slane %v821, 1
    %v823 = vadd.f32 %v821, %v822
    %v824 = vsel %vm753, %v173, 0.0
    %v825 = vrot.slane %v824, 4
    %v826 = vadd.f32 %v824, %v825
    %v827 = vrot.slane %v826, 2
    %v828 = vadd.f32 %v826, %v827
    %v829 = vrot.slane %v828, 1
    %v830 = vadd.f32 %v828, %v829
    %v831 = vsel %vm753, %v174, 0.0
    %v832 = vrot.slane %v831, 4
    %v833 = vadd.f32 %v831, %v832
    %v834 = vrot.slane %v833, 2
    %v835 = vadd.f32 %v833, %v834
    %v836 = vrot.slane %v835, 1
    %v837 = vadd.f32 %v835, %v836
    %v838 = vsel %vm753, %v175, 0.0
    %v839 = vrot.slane %v838, 4
    %v840 = vadd.f32 %v838, %v839
    %v841 = vrot.slane %v840, 2
    %v842 = vadd.f32 %v840, %v841
    %v843 = vrot.slane %v842, 1
    %v844 = vadd.f32 %v842, %v843
    %v845 = vsel %vm753, %v176, 0.0
    %v846 = vrot.slane %v845, 4
    %v847 = vadd.f32 %v845, %v846
    %v848 = vrot.slane %v847, 2
    %v849 = vadd.f32 %v847, %v848
    %v850 = vrot.slane %v849, 1
    %v851 = vadd.f32 %v849, %v850
    %v852 = vsel %vm753, %v177, 0.0
    %v853 = vrot.slane %v852, 4
    %v854 = vadd.f32 %v852, %v853
    %v855 = vrot.slane %v854, 2
    %v856 = vadd.f32 %v854, %v855
    %v857 = vrot.slane %v856, 1
    %v858 = vadd.f32 %v856, %v857
    %v859 = vsel %vm753, %v178, 0.0
    %v860 = vrot.slane %v859, 4
    %v861 = vadd.f32 %v859, %v860
    %v862 = vrot.slane %v861, 2
    %v863 = vadd.f32 %v861, %v862
    %v864 = vrot.slane %v863, 1
    %v865 = vadd.f32 %v863, %v864
    %v866 = vadd.f32 %v760, 1e-09
    %v867 = vadd.f32 %v767, 1e-09
    %v868 = vadd.f32 %v774, 1e-09
    %v869 = vadd.f32 %v781, 1e-09
    %v870 = vadd.f32 %v788, 1e-09
    %v871 = vadd.f32 %v795, 1e-09
    %v872 = vadd.f32 %v802, 1e-09
    %v873 = vadd.f32 %v809, 1e-09
    %v874 = vadd.f32 %v816, 1e-09
    %v875 = vadd.f32 %v823, 1e-09
    %v876 = vadd.f32 %v830, 1e-09
    %v877 = vadd.f32 %v837, 1e-09
    %v878 = vadd.f32 %v844, 1e-09
    %v879 = vadd.f32 %v851, 1e-09
    %v880 = vadd.f32 %v858, 1e-09
    %v881 = vadd.f32 %v865, 1e-09
    %v882 = vrcp.pop %v866
    %v883 = vrcp.pop %v867
    %v884 = vrcp.pop %v868
    %v885 = vrcp.pop %v869
    %v886 = vrcp.pop %v870
    %v887 = vrcp.pop %v871
    %v888 = vrcp.pop %v872
    %v889 = vrcp.pop %v873
    %v890 = vrcp.pop %v874
    %v891 = vrcp.pop %v875
    %v892 = vrcp.pop %v876
    %v893 = vrcp.pop %v877
    %v894 = vrcp.pop %v878
    %v895 = vrcp.pop %v879
    %v896 = vrcp.pop %v880
    %v897 = vrcp.pop %v881
    %899 = vset.pattern.permute.xlu0 0
    %900 = vperm.xlu0 %899, %v882
    %v901 = vpop.permute.xlu0 %900
    %904 = vset.pattern.permute.xlu0 0
    %905 = vperm.xlu0 %904, %v883
    %v906 = vpop.permute.xlu0 %905
    %909 = vset.pattern.permute.xlu0 0
    %910 = vperm.xlu0 %909, %v884
    %v911 = vpop.permute.xlu0 %910
    %914 = vset.pattern.permute.xlu0 0
    %915 = vperm.xlu0 %914, %v885
    %v916 = vpop.permute.xlu0 %915
    %919 = vset.pattern.permute.xlu0 0
    %920 = vperm.xlu0 %919, %v886
    %v921 = vpop.permute.xlu0 %920
    %924 = vset.pattern.permute.xlu0 0
    %925 = vperm.xlu0 %924, %v887
    %v926 = vpop.permute.xlu0 %925
    %929 = vset.pattern.permute.xlu0 0
    %930 = vperm.xlu0 %929, %v888
    %v931 = vpop.permute.xlu0 %930
    %934 = vset.pattern.permute.xlu0 0
    %935 = vperm.xlu0 %934, %v889
    %v936 = vpop.permute.xlu0 %935
    %939 = vset.pattern.permute.xlu0 0
    %940 = vperm.xlu0 %939, %v890
    %v941 = vpop.permute.xlu0 %940
    %944 = vset.pattern.permute.xlu0 0
    %945 = vperm.xlu0 %944, %v891
    %v946 = vpop.permute.xlu0 %945
    %949 = vset.pattern.permute.xlu0 0
    %950 = vperm.xlu0 %949, %v892
    %v951 = vpop.permute.xlu0 %950
    %954 = vset.pattern.permute.xlu0 0
    %955 = vperm.xlu0 %954, %v893
    %v956 = vpop.permute.xlu0 %955
    %959 = vset.pattern.permute.xlu0 0
    %960 = vperm.xlu0 %959, %v894
    %v961 = vpop.permute.xlu0 %960
    %964 = vset.pattern.permute.xlu0 0
    %965 = vperm.xlu0 %964, %v895
    %v966 = vpop.permute.xlu0 %965
    %969 = vset.pattern.permute.xlu0 0
    %970 = vperm.xlu0 %969, %v896
    %v971 = vpop.permute.xlu0 %970
    %974 = vset.pattern.permute.xlu0 0
    %975 = vperm.xlu0 %974, %v897
    %v976 = vpop.permute.xlu0 %975
    %v978 = vmul.f32 %v647, %v901
    %v979 = vmul.f32 %v654, %v906
    %v980 = vmul.f32 %v661, %v911
    %v981 = vmul.f32 %v668, %v916
    %v982 = vmul.f32 %v675, %v921
    %v983 = vmul.f32 %v682, %v926
    %v984 = vmul.f32 %v689, %v931
    %v985 = vmul.f32 %v696, %v936
    %v986 = vmul.f32 %v703, %v941
    %v987 = vmul.f32 %v710, %v946
    %v988 = vmul.f32 %v717, %v951
    %v989 = vmul.f32 %v724, %v956
    %v990 = vmul.f32 %v731, %v961
    %v991 = vmul.f32 %v738, %v966
    %v992 = vmul.f32 %v745, %v971
    %v993 = vmul.f32 %v752, %v976
    %v994 = vld [vmem:[%s23] sm:$0xff]
    %v995 = vld [vmem:[%s23 + $0x8] sm:$0xff]
    %v996 = vld [vmem:[%s25] sm:$0x1]
    %v998 = vlaneseq
    %v999 = vshrl.u32 %v998, 7
    %v1000 = vsub.s32 0, %v999
    %v1001 = vrot.slane %v996, %v1000
    %vm1019 = vcmask 1041409
    %v1020 = vsel %vm1019, %v979, %v978
    %vm1021 = vcmask 1042434
    %v1022 = vsel %vm1021, %v980, %v1020
    %vm1023 = vcmask 1043459
    %v1024 = vsel %vm1023, %v981, %v1022
    %vm1025 = vcmask 1044484
    %v1026 = vsel %vm1025, %v982, %v1024
    %vm1027 = vcmask 1045509
    %v1028 = vsel %vm1027, %v983, %v1026
    %vm1029 = vcmask 1046534
    %v1030 = vsel %vm1029, %v984, %v1028
    %vm1031 = vcmask 1047559
    %v1032 = vsel %vm1031, %v985, %v1030
    %v1033 = vsel %vm1019, %v987, %v986
    %v1034 = vsel %vm1021, %v988, %v1033
    %v1035 = vsel %vm1023, %v989, %v1034
    %v1036 = vsel %vm1025, %v990, %v1035
    %v1037 = vsel %vm1027, %v991, %v1036
    %v1038 = vsel %vm1029, %v992, %v1037
    %v1039 = vsel %vm1031, %v993, %v1038
    %v1040 = vsel %vm640, %v1032, 0
    %v1042 = vsel %vm640, %v1039, 0
    %1044 = vmatprep.subr.mxu0 0.0
    %1045 = vmatpush1.msra.mxu0 %v994
    %1046 = vmatprep.subr.mxu0 0.0
    %1047 = vmatpush1.msra.mxu0 %v995
    %1048 = vmatprep.subr.mxu0 0.0
    %1049 = vmatpush1.msra.mxu0 0.0
    %1050 = vmatprep.subr.mxu0 0.0
    %1051 = vmatpush1.msra.mxu0 0.0
    %1052 = vmatprep.subr.mxu0 0.0
    %1053 = vmatpush1.msra.mxu0 0.0
    %1054 = vmatprep.subr.mxu0 0.0
    %1055 = vmatpush1.msra.mxu0 0.0
    %1056 = vmatprep.subr.mxu0 0.0
    %1057 = vmatpush1.msra.mxu0 0.0
    %1058 = vmatprep.subr.mxu0 0.0
    %1059 = vmatpush1.msra.mxu0 0.0
    %1060 = vmatprep.subr.mxu0 0.0
    %1061 = vmatpush1.msra.mxu0 0.0
    %1062 = vmatprep.subr.mxu0 0.0
    %1063 = vmatpush1.msra.mxu0 0.0
    %1064 = vmatprep.subr.mxu0 0.0
    %1065 = vmatpush1.msra.mxu0 0.0
    %1066 = vmatprep.subr.mxu0 0.0
    %1067 = vmatpush1.msra.mxu0 0.0
    %1068 = vmatprep.subr.mxu0 0.0
    %1069 = vmatpush1.msra.mxu0 0.0
    %1070 = vmatprep.subr.mxu0 0.0
    %1071 = vmatpush1.msra.mxu0 0.0
    %1072 = vmatprep.subr.mxu0 0.0
    %1073 = vmatpush1.msra.mxu0 0.0
    %1074 = vmatprep.subr.mxu0 0.0
    %1075 = vmatpush1.msra.mxu0 0.0
    %1076 = vmatprep.subr.mxu0 0.0
    %1077 = vmatpush1.msra.mxu0 0.0
    %1078 = vmatprep.subr.mxu0 0.0
    %1079 = vmatpush1.msra.mxu0 0.0
    %1080 = vmatprep.subr.mxu0 0.0
    %1081 = vmatpush1.msra.mxu0 0.0
    %1082 = vmatprep.subr.mxu0 0.0
    %1083 = vmatpush1.msra.mxu0 0.0
    %1084 = vmatprep.subr.mxu0 0.0
    %1085 = vmatpush1.msra.mxu0 0.0
    %1086 = vmatprep.subr.mxu0 0.0
    %1087 = vmatpush1.msra.mxu0 0.0
    %1088 = vmatprep.subr.mxu0 0.0
    %1089 = vmatpush1.msra.mxu0 0.0
    %1090 = vmatprep.subr.mxu0 0.0
    %1091 = vmatpush1.msra.mxu0 0.0
    %1092 = vmatprep.subr.mxu0 0.0
    %1093 = vmatpush1.msra.mxu0 0.0
    %1094 = vmatprep.subr.mxu0 0.0
    %1095 = vmatpush1.msra.mxu0 0.0
    %1096 = vmatprep.subr.mxu0 0.0
    %1097 = vmatpush1.msra.mxu0 0.0
    %1098 = vmatprep.subr.mxu0 0.0
    %1099 = vmatpush1.msra.mxu0 0.0
    %1100 = vmatprep.subr.mxu0 0.0
    %1101 = vmatpush1.msra.mxu0 0.0
    %1102 = vmatprep.subr.mxu0 0.0
    %1103 = vmatpush1.msra.mxu0 0.0
    %1104 = vmatprep.subr.mxu0 0.0
    %1105 = vmatpush1.msra.mxu0 0.0
    %1106 = vmatprep.subr.mxu0 0.0
    %1107 = vmatpush1.msra.mxu0 0.0
    %1108 = vmatprep.mubr.f32.mxu0 0.0
    %1109 = vmatmul.mubr.f32.gmra.mrb[0].mxu0 %v1040
    %v1110 = vpop.f32.mrb[0].mxu0
    %v1111 = vadd.f32 %v1001, %v1110
    %v1112 = vpop.f32.mrb[0].mxu0
    %1113 = vmatprep.mubr.f32.mxu0 0.0
    %1114 = vmatmul.mubr.f32.gmra.mrb[0].mxu0 %v1042
    %v1115 = vpop.f32.mrb[0].mxu0
    %v1116 = vadd.f32 %v1001, %v1115
    %v1117 = vpop.f32.mrb[0].mxu0
    %1118 = vdwg.mxu0
    %v1119 = vmax.f32 %v1111, 0.0
    %v1120 = vmax.f32 %v1116, 0.0
    %v1121 = vld [vmem:[%s27] sm:$0xff]
    %v1122 = vld [vmem:[%s27 + $0x8] sm:$0xff]
    %v1123 = vld [vmem:[%s29] sm:$0x1]
    %v1125 = vlaneseq
    %v1126 = vshrl.u32 %v1125, 7
    %v1127 = vsub.s32 0, %v1126
    %v1128 = vrot.slane %v1123, %v1127
    %v1131 = vsel %vm640, %v1119, 0
    %v1134 = vsel %vm640, %v1120, 0
    %1136 = vmatprep.subr.mxu0 0.0
    %1137 = vmatpush1.msra.mxu0 %v1121
    %1138 = vmatprep.subr.mxu0 0.0
    %1139 = vmatpush1.msra.mxu0 %v1122
    %1140 = vmatprep.subr.mxu0 0.0
    %1141 = vmatpush1.msra.mxu0 0.0
    %1142 = vmatprep.subr.mxu0 0.0
    %1143 = vmatpush1.msra.mxu0 0.0
    %1144 = vmatprep.subr.mxu0 0.0
    %1145 = vmatpush1.msra.mxu0 0.0
    %1146 = vmatprep.subr.mxu0 0.0
    %1147 = vmatpush1.msra.mxu0 0.0
    %1148 = vmatprep.subr.mxu0 0.0
    %1149 = vmatpush1.msra.mxu0 0.0
    %1150 = vmatprep.subr.mxu0 0.0
    %1151 = vmatpush1.msra.mxu0 0.0
    %1152 = vmatprep.subr.mxu0 0.0
    %1153 = vmatpush1.msra.mxu0 0.0
    %1154 = vmatprep.subr.mxu0 0.0
    %1155 = vmatpush1.msra.mxu0 0.0
    %1156 = vmatprep.subr.mxu0 0.0
    %1157 = vmatpush1.msra.mxu0 0.0
    %1158 = vmatprep.subr.mxu0 0.0
    %1159 = vmatpush1.msra.mxu0 0.0
    %1160 = vmatprep.subr.mxu0 0.0
    %1161 = vmatpush1.msra.mxu0 0.0
    %1162 = vmatprep.subr.mxu0 0.0
    %1163 = vmatpush1.msra.mxu0 0.0
    %1164 = vmatprep.subr.mxu0 0.0
    %1165 = vmatpush1.msra.mxu0 0.0
    %1166 = vmatprep.subr.mxu0 0.0
    %1167 = vmatpush1.msra.mxu0 0.0
    %1168 = vmatprep.subr.mxu0 0.0
    %1169 = vmatpush1.msra.mxu0 0.0
    %1170 = vmatprep.subr.mxu0 0.0
    %1171 = vmatpush1.msra.mxu0 0.0
    %1172 = vmatprep.subr.mxu0 0.0
    %1173 = vmatpush1.msra.mxu0 0.0
    %1174 = vmatprep.subr.mxu0 0.0
    %1175 = vmatpush1.msra.mxu0 0.0
    %1176 = vmatprep.subr.mxu0 0.0
    %1177 = vmatpush1.msra.mxu0 0.0
    %1178 = vmatprep.subr.mxu0 0.0
    %1179 = vmatpush1.msra.mxu0 0.0
    %1180 = vmatprep.subr.mxu0 0.0
    %1181 = vmatpush1.msra.mxu0 0.0
    %1182 = vmatprep.subr.mxu0 0.0
    %1183 = vmatpush1.msra.mxu0 0.0
    %1184 = vmatprep.subr.mxu0 0.0
    %1185 = vmatpush1.msra.mxu0 0.0
    %1186 = vmatprep.subr.mxu0 0.0
    %1187 = vmatpush1.msra.mxu0 0.0
    %1188 = vmatprep.subr.mxu0 0.0
    %1189 = vmatpush1.msra.mxu0 0.0
    %1190 = vmatprep.subr.mxu0 0.0
    %1191 = vmatpush1.msra.mxu0 0.0
    %1192 = vmatprep.subr.mxu0 0.0
    %1193 = vmatpush1.msra.mxu0 0.0
    %1194 = vmatprep.subr.mxu0 0.0
    %1195 = vmatpush1.msra.mxu0 0.0
    %1196 = vmatprep.subr.mxu0 0.0
    %1197 = vmatpush1.msra.mxu0 0.0
    %1198 = vmatprep.subr.mxu0 0.0
    %1199 = vmatpush1.msra.mxu0 0.0
    %1200 = vmatprep.mubr.f32.mxu0 0.0
    %1201 = vmatmul.mubr.f32.gmra.mrb[0].mxu0 %v1131
    %v1202 = vpop.f32.mrb[0].mxu0
    %v1203 = vadd.f32 %v1128, %v1202
    %v1204 = vpop.f32.mrb[0].mxu0
    %1205 = vmatprep.mubr.f32.mxu0 0.0
    %1206 = vmatmul.mubr.f32.gmra.mrb[0].mxu0 %v1134
    %v1207 = vpop.f32.mrb[0].mxu0
    %v1208 = vadd.f32 %v1128, %v1207
    %v1209 = vpop.f32.mrb[0].mxu0
    %1210 = vdwg.mxu0
    %v1211 = vld [vmem:[%s31] sm:$0x3]
    %v1212 = vlaneseq
    %v1213 = vshrl.u32 %v1212, 7
    %v1214 = vsub.s32 0, %v1213
    %v1215 = vrot.slane %v1211, %v1214
    %v1216 = vmul.f32 %v183, %v1215
    %v1217 = vmul.f32 %v188, %v1215
    %v1218 = vmul.f32 %v193, %v1215
    %v1219 = vmul.f32 %v198, %v1215
    %v1220 = vmul.f32 %v203, %v1215
    %v1221 = vmul.f32 %v208, %v1215
    %v1222 = vmul.f32 %v213, %v1215
    %v1223 = vmul.f32 %v218, %v1215
    %v1224 = vmul.f32 %v223, %v1215
    %v1225 = vmul.f32 %v228, %v1215
    %v1226 = vmul.f32 %v233, %v1215
    %v1227 = vmul.f32 %v238, %v1215
    %v1228 = vmul.f32 %v243, %v1215
    %v1229 = vmul.f32 %v248, %v1215
    %v1230 = vmul.f32 %v253, %v1215
    %v1231 = vmul.f32 %v258, %v1215
    %v1232 = vlaneseq
    %v1233 = vshrl.u32 %v1232, 7
    %v1234 = vsub.s32 1, %v1233
    %v1235 = vrot.slane %v1211, %v1234
    %v1236 = vmul.f32 %v283, %v1235
    %v1237 = vmul.f32 %v288, %v1235
    %v1238 = vmul.f32 %v293, %v1235
    %v1239 = vmul.f32 %v298, %v1235
    %v1240 = vmul.f32 %v303, %v1235
    %v1241 = vmul.f32 %v308, %v1235
    %v1242 = vmul.f32 %v313, %v1235
    %v1243 = vmul.f32 %v318, %v1235
    %v1244 = vmul.f32 %v323, %v1235
    %v1245 = vmul.f32 %v328, %v1235
    %v1246 = vmul.f32 %v333, %v1235
    %v1247 = vmul.f32 %v338, %v1235
    %v1248 = vmul.f32 %v343, %v1235
    %v1249 = vmul.f32 %v348, %v1235
    %v1250 = vmul.f32 %v353, %v1235
    %v1251 = vmul.f32 %v358, %v1235
    %v1252 = vadd.f32 %v1216, %v1236
    %v1253 = vadd.f32 %v1217, %v1237
    %v1254 = vadd.f32 %v1218, %v1238
    %v1255 = vadd.f32 %v1219, %v1239
    %v1256 = vadd.f32 %v1220, %v1240
    %v1257 = vadd.f32 %v1221, %v1241
    %v1258 = vadd.f32 %v1222, %v1242
    %v1259 = vadd.f32 %v1223, %v1243
    %v1260 = vadd.f32 %v1224, %v1244
    %v1261 = vadd.f32 %v1225, %v1245
    %v1262 = vadd.f32 %v1226, %v1246
    %v1263 = vadd.f32 %v1227, %v1247
    %v1264 = vadd.f32 %v1228, %v1248
    %v1265 = vadd.f32 %v1229, %v1249
    %v1266 = vadd.f32 %v1230, %v1250
    %v1267 = vadd.f32 %v1231, %v1251
    %v1270 = vcombine.high %v1203, %v1203
    %v1272 = vunpack.c.l.s4 1966171168
    %v1273 = vunpack.c.0.s8 %v1272
    %v1274 = vlaneseq
    %v1275 = vshrl.u32 %v1274, 7
    %v1276 = vsub.s32 %v1273, %v1275
    %v1277 = vrot.slane %v1203, %v1276
    %v1279 = vunpack.c.l.s4 1966171168
    %v1280 = vunpack.c.0.s8 %v1279
    %v1281 = vlaneseq
    %v1282 = vshrl.u32 %v1281, 7
    %v1283 = vsub.s32 %v1280, %v1282
    %v1284 = vrot.slane %v1270, %v1283
    %v1285 = vcombine.high %v1277, %v1277
    %v1286 = vcombine.high %v1284, %v1284
    %v1288 = vunpack.c.l.s4 1966171168
    %v1289 = vunpack.c.0.s8 %v1288
    %v1290 = vlaneseq
    %v1291 = vshrl.u32 %v1290, 7
    %v1292 = vsub.s32 %v1289, %v1291
    %v1293 = vrot.slane %v1277, %v1292
    %v1295 = vunpack.c.l.s4 1966171168
    %v1296 = vunpack.c.0.s8 %v1295
    %v1297 = vlaneseq
    %v1298 = vshrl.u32 %v1297, 7
    %v1299 = vsub.s32 %v1296, %v1298
    %v1300 = vrot.slane %v1284, %v1299
    %v1302 = vunpack.c.l.s4 1966171168
    %v1303 = vunpack.c.0.s8 %v1302
    %v1304 = vlaneseq
    %v1305 = vshrl.u32 %v1304, 7
    %v1306 = vsub.s32 %v1303, %v1305
    %v1307 = vrot.slane %v1285, %v1306
    %v1309 = vunpack.c.l.s4 1966171168
    %v1310 = vunpack.c.0.s8 %v1309
    %v1311 = vlaneseq
    %v1312 = vshrl.u32 %v1311, 7
    %v1313 = vsub.s32 %v1310, %v1312
    %v1314 = vrot.slane %v1286, %v1313
    %v1315 = vcombine.high %v1293, %v1293
    %v1316 = vcombine.high %v1300, %v1300
    %v1317 = vcombine.high %v1307, %v1307
    %v1318 = vcombine.high %v1314, %v1314
    %v1319 = vcombine.high %v1208, %v1208
    %v1321 = vunpack.c.l.s4 1966171168
    %v1322 = vunpack.c.0.s8 %v1321
    %v1323 = vlaneseq
    %v1324 = vshrl.u32 %v1323, 7
    %v1325 = vsub.s32 %v1322, %v1324
    %v1326 = vrot.slane %v1208, %v1325
    %v1328 = vunpack.c.l.s4 1966171168
    %v1329 = vunpack.c.0.s8 %v1328
    %v1330 = vlaneseq
    %v1331 = vshrl.u32 %v1330, 7
    %v1332 = vsub.s32 %v1329, %v1331
    %v1333 = vrot.slane %v1319, %v1332
    %v1334 = vcombine.high %v1326, %v1326
    %v1335 = vcombine.high %v1333, %v1333
    %v1337 = vunpack.c.l.s4 1966171168
    %v1338 = vunpack.c.0.s8 %v1337
    %v1339 = vlaneseq
    %v1340 = vshrl.u32 %v1339, 7
    %v1341 = vsub.s32 %v1338, %v1340
    %v1342 = vrot.slane %v1326, %v1341
    %v1344 = vunpack.c.l.s4 1966171168
    %v1345 = vunpack.c.0.s8 %v1344
    %v1346 = vlaneseq
    %v1347 = vshrl.u32 %v1346, 7
    %v1348 = vsub.s32 %v1345, %v1347
    %v1349 = vrot.slane %v1333, %v1348
    %v1351 = vunpack.c.l.s4 1966171168
    %v1352 = vunpack.c.0.s8 %v1351
    %v1353 = vlaneseq
    %v1354 = vshrl.u32 %v1353, 7
    %v1355 = vsub.s32 %v1352, %v1354
    %v1356 = vrot.slane %v1334, %v1355
    %v1358 = vunpack.c.l.s4 1966171168
    %v1359 = vunpack.c.0.s8 %v1358
    %v1360 = vlaneseq
    %v1361 = vshrl.u32 %v1360, 7
    %v1362 = vsub.s32 %v1359, %v1361
    %v1363 = vrot.slane %v1335, %v1362
    %v1364 = vcombine.high %v1342, %v1342
    %v1365 = vcombine.high %v1349, %v1349
    %v1366 = vcombine.high %v1356, %v1356
    %v1367 = vcombine.high %v1363, %v1363
    %v1368 = vlaneseq
    %v1369 = vshrl.u32 %v1368, 7
    %v1370 = vsub.s32 0, %v1369
    %v1371 = vrot.slane %v1293, %v1370
    %v1372 = vlaneseq
    %v1373 = vshrl.u32 %v1372, 7
    %v1374 = vsub.s32 0, %v1373
    %v1375 = vrot.slane %v1307, %v1374
    %v1376 = vlaneseq
    %v1377 = vshrl.u32 %v1376, 7
    %v1378 = vsub.s32 0, %v1377
    %v1379 = vrot.slane %v1315, %v1378
    %v1380 = vlaneseq
    %v1381 = vshrl.u32 %v1380, 7
    %v1382 = vsub.s32 0, %v1381
    %v1383 = vrot.slane %v1317, %v1382
    %v1384 = vlaneseq
    %v1385 = vshrl.u32 %v1384, 7
    %v1386 = vsub.s32 0, %v1385
    %v1387 = vrot.slane %v1300, %v1386
    %v1388 = vlaneseq
    %v1389 = vshrl.u32 %v1388, 7
    %v1390 = vsub.s32 0, %v1389
    %v1391 = vrot.slane %v1314, %v1390
    %v1392 = vlaneseq
    %v1393 = vshrl.u32 %v1392, 7
    %v1394 = vsub.s32 0, %v1393
    %v1395 = vrot.slane %v1316, %v1394
    %v1396 = vlaneseq
    %v1397 = vshrl.u32 %v1396, 7
    %v1398 = vsub.s32 0, %v1397
    %v1399 = vrot.slane %v1318, %v1398
    %v1400 = vlaneseq
    %v1401 = vshrl.u32 %v1400, 7
    %v1402 = vsub.s32 0, %v1401
    %v1403 = vrot.slane %v1342, %v1402
    %v1404 = vlaneseq
    %v1405 = vshrl.u32 %v1404, 7
    %v1406 = vsub.s32 0, %v1405
    %v1407 = vrot.slane %v1356, %v1406
    %v1408 = vlaneseq
    %v1409 = vshrl.u32 %v1408, 7
    %v1410 = vsub.s32 0, %v1409
    %v1411 = vrot.slane %v1364, %v1410
    %v1412 = vlaneseq
    %v1413 = vshrl.u32 %v1412, 7
    %v1414 = vsub.s32 0, %v1413
    %v1415 = vrot.slane %v1366, %v1414
    %v1416 = vlaneseq
    %v1417 = vshrl.u32 %v1416, 7
    %v1418 = vsub.s32 0, %v1417
    %v1419 = vrot.slane %v1349, %v1418
    %v1420 = vlaneseq
    %v1421 = vshrl.u32 %v1420, 7
    %v1422 = vsub.s32 0, %v1421
    %v1423 = vrot.slane %v1363, %v1422
    %v1424 = vlaneseq
    %v1425 = vshrl.u32 %v1424, 7
    %v1426 = vsub.s32 0, %v1425
    %v1427 = vrot.slane %v1365, %v1426
    %v1428 = vlaneseq
    %v1429 = vshrl.u32 %v1428, 7
    %v1430 = vsub.s32 0, %v1429
    %v1431 = vrot.slane %v1367, %v1430
    %v1448 = vadd.f32 %v1371, %v1252
    %v1449 = vadd.f32 %v1375, %v1253
    %v1450 = vadd.f32 %v1379, %v1254
    %v1451 = vadd.f32 %v1383, %v1255
    %v1452 = vadd.f32 %v1387, %v1256
    %v1453 = vadd.f32 %v1391, %v1257
    %v1454 = vadd.f32 %v1395, %v1258
    %v1455 = vadd.f32 %v1399, %v1259
    %v1456 = vadd.f32 %v1403, %v1260
    %v1457 = vadd.f32 %v1407, %v1261
    %v1458 = vadd.f32 %v1411, %v1262
    %v1459 = vadd.f32 %v1415, %v1263
    %v1460 = vadd.f32 %v1419, %v1264
    %v1461 = vadd.f32 %v1423, %v1265
    %v1462 = vadd.f32 %v1427, %v1266
    %v1463 = vadd.f32 %v1431, %v1267
    %v1464 = vld [vmem:[%s33] sm:$0x1]
    %v1466 = vlaneseq
    %v1467 = vshrl.u32 %v1466, 7
    %v1468 = vsub.s32 0, %v1467
    %v1469 = vrot.slane %v1464, %v1468
    %v1471 = vmul.f32 %v1448, %v1469
    %v1472 = vmul.f32 %v1449, %v1469
    %v1473 = vmul.f32 %v1450, %v1469
    %v1474 = vmul.f32 %v1451, %v1469
    %v1475 = vmul.f32 %v1452, %v1469
    %v1476 = vmul.f32 %v1453, %v1469
    %v1477 = vmul.f32 %v1454, %v1469
    %v1478 = vmul.f32 %v1455, %v1469
    %v1479 = vmul.f32 %v1456, %v1469
    %v1480 = vmul.f32 %v1457, %v1469
    %v1481 = vmul.f32 %v1458, %v1469
    %v1482 = vmul.f32 %v1459, %v1469
    %v1483 = vmul.f32 %v1460, %v1469
    %v1484 = vmul.f32 %v1461, %v1469
    %v1485 = vmul.f32 %v1462, %v1469
    %v1486 = vmul.f32 %v1463, %v1469
    %v1487 = vsel %vm640, %v1471, 0.0
    %1488 = vadd.xlane.f32.xlu0 %v1487
    %v1489 = vpop.xlane.xlu0 %1488
    %v1490 = vsel %vm640, %v1472, 0.0
    %1491 = vadd.xlane.f32.xlu0 %v1490
    %v1492 = vpop.xlane.xlu0 %1491
    %v1493 = vsel %vm640, %v1473, 0.0
    %1494 = vadd.xlane.f32.xlu0 %v1493
    %v1495 = vpop.xlane.xlu0 %1494
    %v1496 = vsel %vm640, %v1474, 0.0
    %1497 = vadd.xlane.f32.xlu0 %v1496
    %v1498 = vpop.xlane.xlu0 %1497
    %v1499 = vsel %vm640, %v1475, 0.0
    %1500 = vadd.xlane.f32.xlu0 %v1499
    %v1501 = vpop.xlane.xlu0 %1500
    %v1502 = vsel %vm640, %v1476, 0.0
    %1503 = vadd.xlane.f32.xlu0 %v1502
    %v1504 = vpop.xlane.xlu0 %1503
    %v1505 = vsel %vm640, %v1477, 0.0
    %1506 = vadd.xlane.f32.xlu0 %v1505
    %v1507 = vpop.xlane.xlu0 %1506
    %v1508 = vsel %vm640, %v1478, 0.0
    %1509 = vadd.xlane.f32.xlu0 %v1508
    %v1510 = vpop.xlane.xlu0 %1509
    %v1511 = vsel %vm640, %v1479, 0.0
    %1512 = vadd.xlane.f32.xlu0 %v1511
    %v1513 = vpop.xlane.xlu0 %1512
    %v1514 = vsel %vm640, %v1480, 0.0
    %1515 = vadd.xlane.f32.xlu0 %v1514
    %v1516 = vpop.xlane.xlu0 %1515
    %v1517 = vsel %vm640, %v1481, 0.0
    %1518 = vadd.xlane.f32.xlu0 %v1517
    %v1519 = vpop.xlane.xlu0 %1518
    %v1520 = vsel %vm640, %v1482, 0.0
    %1521 = vadd.xlane.f32.xlu0 %v1520
    %v1522 = vpop.xlane.xlu0 %1521
    %v1523 = vsel %vm640, %v1483, 0.0
    %1524 = vadd.xlane.f32.xlu0 %v1523
    %v1525 = vpop.xlane.xlu0 %1524
    %v1526 = vsel %vm640, %v1484, 0.0
    %1527 = vadd.xlane.f32.xlu0 %v1526
    %v1528 = vpop.xlane.xlu0 %1527
    %v1529 = vsel %vm640, %v1485, 0.0
    %1530 = vadd.xlane.f32.xlu0 %v1529
    %v1531 = vpop.xlane.xlu0 %1530
    %v1532 = vsel %vm640, %v1486, 0.0
    %1533 = vadd.xlane.f32.xlu0 %v1532
    %v1534 = vpop.xlane.xlu0 %1533
    %vm1535 = vcmp.ne.f32.partialorder %v163, 0.0
    %vm1536 = vcmp.ne.f32.partialorder %v164, 0.0
    %vm1537 = vcmp.ne.f32.partialorder %v165, 0.0
    %vm1538 = vcmp.ne.f32.partialorder %v166, 0.0
    %vm1539 = vcmp.ne.f32.partialorder %v167, 0.0
    %vm1540 = vcmp.ne.f32.partialorder %v168, 0.0
    %vm1541 = vcmp.ne.f32.partialorder %v169, 0.0
    %vm1542 = vcmp.ne.f32.partialorder %v170, 0.0
    %vm1543 = vcmp.ne.f32.partialorder %v171, 0.0
    %vm1544 = vcmp.ne.f32.partialorder %v172, 0.0
    %vm1545 = vcmp.ne.f32.partialorder %v173, 0.0
    %vm1546 = vcmp.ne.f32.partialorder %v174, 0.0
    %vm1547 = vcmp.ne.f32.partialorder %v175, 0.0
    %vm1548 = vcmp.ne.f32.partialorder %v176, 0.0
    %vm1549 = vcmp.ne.f32.partialorder %v177, 0.0
    %vm1550 = vcmp.ne.f32.partialorder %v178, 0.0
    %v1551 = vsel %vm1535, %v1489, -1e+09
    %v1552 = vsel %vm1536, %v1492, -1e+09
    %v1553 = vsel %vm1537, %v1495, -1e+09
    %v1554 = vsel %vm1538, %v1498, -1e+09
    %v1555 = vsel %vm1539, %v1501, -1e+09
    %v1556 = vsel %vm1540, %v1504, -1e+09
    %v1557 = vsel %vm1541, %v1507, -1e+09
    %v1558 = vsel %vm1542, %v1510, -1e+09
    %v1559 = vsel %vm1543, %v1513, -1e+09
    %v1560 = vsel %vm1544, %v1516, -1e+09
    %v1561 = vsel %vm1545, %v1519, -1e+09
    %v1562 = vsel %vm1546, %v1522, -1e+09
    %v1563 = vsel %vm1547, %v1525, -1e+09
    %v1564 = vsel %vm1548, %v1528, -1e+09
    %v1565 = vsel %vm1549, %v1531, -1e+09
    %v1566 = vsel %vm1550, %v1534, -1e+09
    %v1567 = vsel %vm753, %v1551, -inf
    %v1568 = vrot.slane %v1567, 4
    %v1569 = vmax.f32 %v1567, %v1568
    %v1570 = vrot.slane %v1569, 2
    %v1571 = vmax.f32 %v1569, %v1570
    %v1572 = vrot.slane %v1571, 1
    %v1573 = vmax.f32 %v1571, %v1572
    %v1574 = vsel %vm753, %v1552, -inf
    %v1575 = vrot.slane %v1574, 4
    %v1576 = vmax.f32 %v1574, %v1575
    %v1577 = vrot.slane %v1576, 2
    %v1578 = vmax.f32 %v1576, %v1577
    %v1579 = vrot.slane %v1578, 1
    %v1580 = vmax.f32 %v1578, %v1579
    %v1581 = vsel %vm753, %v1553, -inf
    %v1582 = vrot.slane %v1581, 4
    %v1583 = vmax.f32 %v1581, %v1582
    %v1584 = vrot.slane %v1583, 2
    %v1585 = vmax.f32 %v1583, %v1584
    %v1586 = vrot.slane %v1585, 1
    %v1587 = vmax.f32 %v1585, %v1586
    %v1588 = vsel %vm753, %v1554, -inf
    %v1589 = vrot.slane %v1588, 4
    %v1590 = vmax.f32 %v1588, %v1589
    %v1591 = vrot.slane %v1590, 2
    %v1592 = vmax.f32 %v1590, %v1591
    %v1593 = vrot.slane %v1592, 1
    %v1594 = vmax.f32 %v1592, %v1593
    %v1595 = vsel %vm753, %v1555, -inf
    %v1596 = vrot.slane %v1595, 4
    %v1597 = vmax.f32 %v1595, %v1596
    %v1598 = vrot.slane %v1597, 2
    %v1599 = vmax.f32 %v1597, %v1598
    %v1600 = vrot.slane %v1599, 1
    %v1601 = vmax.f32 %v1599, %v1600
    %v1602 = vsel %vm753, %v1556, -inf
    %v1603 = vrot.slane %v1602, 4
    %v1604 = vmax.f32 %v1602, %v1603
    %v1605 = vrot.slane %v1604, 2
    %v1606 = vmax.f32 %v1604, %v1605
    %v1607 = vrot.slane %v1606, 1
    %v1608 = vmax.f32 %v1606, %v1607
    %v1609 = vsel %vm753, %v1557, -inf
    %v1610 = vrot.slane %v1609, 4
    %v1611 = vmax.f32 %v1609, %v1610
    %v1612 = vrot.slane %v1611, 2
    %v1613 = vmax.f32 %v1611, %v1612
    %v1614 = vrot.slane %v1613, 1
    %v1615 = vmax.f32 %v1613, %v1614
    %v1616 = vsel %vm753, %v1558, -inf
    %v1617 = vrot.slane %v1616, 4
    %v1618 = vmax.f32 %v1616, %v1617
    %v1619 = vrot.slane %v1618, 2
    %v1620 = vmax.f32 %v1618, %v1619
    %v1621 = vrot.slane %v1620, 1
    %v1622 = vmax.f32 %v1620, %v1621
    %v1623 = vsel %vm753, %v1559, -inf
    %v1624 = vrot.slane %v1623, 4
    %v1625 = vmax.f32 %v1623, %v1624
    %v1626 = vrot.slane %v1625, 2
    %v1627 = vmax.f32 %v1625, %v1626
    %v1628 = vrot.slane %v1627, 1
    %v1629 = vmax.f32 %v1627, %v1628
    %v1630 = vsel %vm753, %v1560, -inf
    %v1631 = vrot.slane %v1630, 4
    %v1632 = vmax.f32 %v1630, %v1631
    %v1633 = vrot.slane %v1632, 2
    %v1634 = vmax.f32 %v1632, %v1633
    %v1635 = vrot.slane %v1634, 1
    %v1636 = vmax.f32 %v1634, %v1635
    %v1637 = vsel %vm753, %v1561, -inf
    %v1638 = vrot.slane %v1637, 4
    %v1639 = vmax.f32 %v1637, %v1638
    %v1640 = vrot.slane %v1639, 2
    %v1641 = vmax.f32 %v1639, %v1640
    %v1642 = vrot.slane %v1641, 1
    %v1643 = vmax.f32 %v1641, %v1642
    %v1644 = vsel %vm753, %v1562, -inf
    %v1645 = vrot.slane %v1644, 4
    %v1646 = vmax.f32 %v1644, %v1645
    %v1647 = vrot.slane %v1646, 2
    %v1648 = vmax.f32 %v1646, %v1647
    %v1649 = vrot.slane %v1648, 1
    %v1650 = vmax.f32 %v1648, %v1649
    %v1651 = vsel %vm753, %v1563, -inf
    %v1652 = vrot.slane %v1651, 4
    %v1653 = vmax.f32 %v1651, %v1652
    %v1654 = vrot.slane %v1653, 2
    %v1655 = vmax.f32 %v1653, %v1654
    %v1656 = vrot.slane %v1655, 1
    %v1657 = vmax.f32 %v1655, %v1656
    %v1658 = vsel %vm753, %v1564, -inf
    %v1659 = vrot.slane %v1658, 4
    %v1660 = vmax.f32 %v1658, %v1659
    %v1661 = vrot.slane %v1660, 2
    %v1662 = vmax.f32 %v1660, %v1661
    %v1663 = vrot.slane %v1662, 1
    %v1664 = vmax.f32 %v1662, %v1663
    %v1665 = vsel %vm753, %v1565, -inf
    %v1666 = vrot.slane %v1665, 4
    %v1667 = vmax.f32 %v1665, %v1666
    %v1668 = vrot.slane %v1667, 2
    %v1669 = vmax.f32 %v1667, %v1668
    %v1670 = vrot.slane %v1669, 1
    %v1671 = vmax.f32 %v1669, %v1670
    %v1672 = vsel %vm753, %v1566, -inf
    %v1673 = vrot.slane %v1672, 4
    %v1674 = vmax.f32 %v1672, %v1673
    %v1675 = vrot.slane %v1674, 2
    %v1676 = vmax.f32 %v1674, %v1675
    %v1677 = vrot.slane %v1676, 1
    %v1678 = vmax.f32 %v1676, %v1677
    %v1679 = vsub.f32 %v1551, %v1573
    %v1680 = vsub.f32 %v1552, %v1580
    %v1681 = vsub.f32 %v1553, %v1587
    %v1682 = vsub.f32 %v1554, %v1594
    %v1683 = vsub.f32 %v1555, %v1601
    %v1684 = vsub.f32 %v1556, %v1608
    %v1685 = vsub.f32 %v1557, %v1615
    %v1686 = vsub.f32 %v1558, %v1622
    %v1687 = vsub.f32 %v1559, %v1629
    %v1688 = vsub.f32 %v1560, %v1636
    %v1689 = vsub.f32 %v1561, %v1643
    %v1690 = vsub.f32 %v1562, %v1650
    %v1691 = vsub.f32 %v1563, %v1657
    %v1692 = vsub.f32 %v1564, %v1664
    %v1693 = vsub.f32 %v1565, %v1671
    %v1694 = vsub.f32 %v1566, %v1678
    %v1695 = vmul.f32 %v1679, 1.442695
    %v1696 = vpow.pop %v1695
    %v1697 = vmul.f32 %v1680, 1.442695
    %v1698 = vpow.pop %v1697
    %v1699 = vmul.f32 %v1681, 1.442695
    %v1700 = vpow.pop %v1699
    %v1701 = vmul.f32 %v1682, 1.442695
    %v1702 = vpow.pop %v1701
    %v1703 = vmul.f32 %v1683, 1.442695
    %v1704 = vpow.pop %v1703
    %v1705 = vmul.f32 %v1684, 1.442695
    %v1706 = vpow.pop %v1705
    %v1707 = vmul.f32 %v1685, 1.442695
    %v1708 = vpow.pop %v1707
    %v1709 = vmul.f32 %v1686, 1.442695
    %v1710 = vpow.pop %v1709
    %v1711 = vmul.f32 %v1687, 1.442695
    %v1712 = vpow.pop %v1711
    %v1713 = vmul.f32 %v1688, 1.442695
    %v1714 = vpow.pop %v1713
    %v1715 = vmul.f32 %v1689, 1.442695
    %v1716 = vpow.pop %v1715
    %v1717 = vmul.f32 %v1690, 1.442695
    %v1718 = vpow.pop %v1717
    %v1719 = vmul.f32 %v1691, 1.442695
    %v1720 = vpow.pop %v1719
    %v1721 = vmul.f32 %v1692, 1.442695
    %v1722 = vpow.pop %v1721
    %v1723 = vmul.f32 %v1693, 1.442695
    %v1724 = vpow.pop %v1723
    %v1725 = vmul.f32 %v1694, 1.442695
    %v1726 = vpow.pop %v1725
    %v1727 = vsel %vm753, %v1696, 0.0
    %v1728 = vrot.slane %v1727, 4
    %v1729 = vadd.f32 %v1727, %v1728
    %v1730 = vrot.slane %v1729, 2
    %v1731 = vadd.f32 %v1729, %v1730
    %v1732 = vrot.slane %v1731, 1
    %v1733 = vadd.f32 %v1731, %v1732
    %v1734 = vsel %vm753, %v1698, 0.0
    %v1735 = vrot.slane %v1734, 4
    %v1736 = vadd.f32 %v1734, %v1735
    %v1737 = vrot.slane %v1736, 2
    %v1738 = vadd.f32 %v1736, %v1737
    %v1739 = vrot.slane %v1738, 1
    %v1740 = vadd.f32 %v1738, %v1739
    %v1741 = vsel %vm753, %v1700, 0.0
    %v1742 = vrot.slane %v1741, 4
    %v1743 = vadd.f32 %v1741, %v1742
    %v1744 = vrot.slane %v1743, 2
    %v1745 = vadd.f32 %v1743, %v1744
    %v1746 = vrot.slane %v1745, 1
    %v1747 = vadd.f32 %v1745, %v1746
    %v1748 = vsel %vm753, %v1702, 0.0
    %v1749 = vrot.slane %v1748, 4
    %v1750 = vadd.f32 %v1748, %v1749
    %v1751 = vrot.slane %v1750, 2
    %v1752 = vadd.f32 %v1750, %v1751
    %v1753 = vrot.slane %v1752, 1
    %v1754 = vadd.f32 %v1752, %v1753
    %v1755 = vsel %vm753, %v1704, 0.0
    %v1756 = vrot.slane %v1755, 4
    %v1757 = vadd.f32 %v1755, %v1756
    %v1758 = vrot.slane %v1757, 2
    %v1759 = vadd.f32 %v1757, %v1758
    %v1760 = vrot.slane %v1759, 1
    %v1761 = vadd.f32 %v1759, %v1760
    %v1762 = vsel %vm753, %v1706, 0.0
    %v1763 = vrot.slane %v1762, 4
    %v1764 = vadd.f32 %v1762, %v1763
    %v1765 = vrot.slane %v1764, 2
    %v1766 = vadd.f32 %v1764, %v1765
    %v1767 = vrot.slane %v1766, 1
    %v1768 = vadd.f32 %v1766, %v1767
    %v1769 = vsel %vm753, %v1708, 0.0
    %v1770 = vrot.slane %v1769, 4
    %v1771 = vadd.f32 %v1769, %v1770
    %v1772 = vrot.slane %v1771, 2
    %v1773 = vadd.f32 %v1771, %v1772
    %v1774 = vrot.slane %v1773, 1
    %v1775 = vadd.f32 %v1773, %v1774
    %v1776 = vsel %vm753, %v1710, 0.0
    %v1777 = vrot.slane %v1776, 4
    %v1778 = vadd.f32 %v1776, %v1777
    %v1779 = vrot.slane %v1778, 2
    %v1780 = vadd.f32 %v1778, %v1779
    %v1781 = vrot.slane %v1780, 1
    %v1782 = vadd.f32 %v1780, %v1781
    %v1783 = vsel %vm753, %v1712, 0.0
    %v1784 = vrot.slane %v1783, 4
    %v1785 = vadd.f32 %v1783, %v1784
    %v1786 = vrot.slane %v1785, 2
    %v1787 = vadd.f32 %v1785, %v1786
    %v1788 = vrot.slane %v1787, 1
    %v1789 = vadd.f32 %v1787, %v1788
    %v1790 = vsel %vm753, %v1714, 0.0
    %v1791 = vrot.slane %v1790, 4
    %v1792 = vadd.f32 %v1790, %v1791
    %v1793 = vrot.slane %v1792, 2
    %v1794 = vadd.f32 %v1792, %v1793
    %v1795 = vrot.slane %v1794, 1
    %v1796 = vadd.f32 %v1794, %v1795
    %v1797 = vsel %vm753, %v1716, 0.0
    %v1798 = vrot.slane %v1797, 4
    %v1799 = vadd.f32 %v1797, %v1798
    %v1800 = vrot.slane %v1799, 2
    %v1801 = vadd.f32 %v1799, %v1800
    %v1802 = vrot.slane %v1801, 1
    %v1803 = vadd.f32 %v1801, %v1802
    %v1804 = vsel %vm753, %v1718, 0.0
    %v1805 = vrot.slane %v1804, 4
    %v1806 = vadd.f32 %v1804, %v1805
    %v1807 = vrot.slane %v1806, 2
    %v1808 = vadd.f32 %v1806, %v1807
    %v1809 = vrot.slane %v1808, 1
    %v1810 = vadd.f32 %v1808, %v1809
    %v1811 = vsel %vm753, %v1720, 0.0
    %v1812 = vrot.slane %v1811, 4
    %v1813 = vadd.f32 %v1811, %v1812
    %v1814 = vrot.slane %v1813, 2
    %v1815 = vadd.f32 %v1813, %v1814
    %v1816 = vrot.slane %v1815, 1
    %v1817 = vadd.f32 %v1815, %v1816
    %v1818 = vsel %vm753, %v1722, 0.0
    %v1819 = vrot.slane %v1818, 4
    %v1820 = vadd.f32 %v1818, %v1819
    %v1821 = vrot.slane %v1820, 2
    %v1822 = vadd.f32 %v1820, %v1821
    %v1823 = vrot.slane %v1822, 1
    %v1824 = vadd.f32 %v1822, %v1823
    %v1825 = vsel %vm753, %v1724, 0.0
    %v1826 = vrot.slane %v1825, 4
    %v1827 = vadd.f32 %v1825, %v1826
    %v1828 = vrot.slane %v1827, 2
    %v1829 = vadd.f32 %v1827, %v1828
    %v1830 = vrot.slane %v1829, 1
    %v1831 = vadd.f32 %v1829, %v1830
    %v1832 = vsel %vm753, %v1726, 0.0
    %v1833 = vrot.slane %v1832, 4
    %v1834 = vadd.f32 %v1832, %v1833
    %v1835 = vrot.slane %v1834, 2
    %v1836 = vadd.f32 %v1834, %v1835
    %v1837 = vrot.slane %v1836, 1
    %v1838 = vadd.f32 %v1836, %v1837
    %v1839 = vrcp.pop %v1733
    %v1840 = vrcp.pop %v1740
    %v1841 = vrcp.pop %v1747
    %v1842 = vrcp.pop %v1754
    %v1843 = vrcp.pop %v1761
    %v1844 = vrcp.pop %v1768
    %v1845 = vrcp.pop %v1775
    %v1846 = vrcp.pop %v1782
    %v1847 = vrcp.pop %v1789
    %v1848 = vrcp.pop %v1796
    %v1849 = vrcp.pop %v1803
    %v1850 = vrcp.pop %v1810
    %v1851 = vrcp.pop %v1817
    %v1852 = vrcp.pop %v1824
    %v1853 = vrcp.pop %v1831
    %v1854 = vrcp.pop %v1838
    %v1855 = vmul.f32 %v1696, %v1839
    %v1856 = vmul.f32 %v1698, %v1840
    %v1857 = vmul.f32 %v1700, %v1841
    %v1858 = vmul.f32 %v1702, %v1842
    %v1859 = vmul.f32 %v1704, %v1843
    %v1860 = vmul.f32 %v1706, %v1844
    %v1861 = vmul.f32 %v1708, %v1845
    %v1862 = vmul.f32 %v1710, %v1846
    %v1863 = vmul.f32 %v1712, %v1847
    %v1864 = vmul.f32 %v1714, %v1848
    %v1865 = vmul.f32 %v1716, %v1849
    %v1866 = vmul.f32 %v1718, %v1850
    %v1867 = vmul.f32 %v1720, %v1851
    %v1868 = vmul.f32 %v1722, %v1852
    %v1869 = vmul.f32 %v1724, %v1853
    %v1870 = vmul.f32 %v1726, %v1854
    %1872 = vset.pattern.permute.xlu0 0
    %1873 = vperm.xlu0 %1872, %v1855
    %v1874 = vpop.permute.xlu0 %1873
    %1877 = vset.pattern.permute.xlu0 0
    %1878 = vperm.xlu0 %1877, %v1856
    %v1879 = vpop.permute.xlu0 %1878
    %1882 = vset.pattern.permute.xlu0 0
    %1883 = vperm.xlu0 %1882, %v1857
    %v1884 = vpop.permute.xlu0 %1883
    %1887 = vset.pattern.permute.xlu0 0
    %1888 = vperm.xlu0 %1887, %v1858
    %v1889 = vpop.permute.xlu0 %1888
    %1892 = vset.pattern.permute.xlu0 0
    %1893 = vperm.xlu0 %1892, %v1859
    %v1894 = vpop.permute.xlu0 %1893
    %1897 = vset.pattern.permute.xlu0 0
    %1898 = vperm.xlu0 %1897, %v1860
    %v1899 = vpop.permute.xlu0 %1898
    %1902 = vset.pattern.permute.xlu0 0
    %1903 = vperm.xlu0 %1902, %v1861
    %v1904 = vpop.permute.xlu0 %1903
    %1907 = vset.pattern.permute.xlu0 0
    %1908 = vperm.xlu0 %1907, %v1862
    %v1909 = vpop.permute.xlu0 %1908
    %1912 = vset.pattern.permute.xlu0 0
    %1913 = vperm.xlu0 %1912, %v1863
    %v1914 = vpop.permute.xlu0 %1913
    %1917 = vset.pattern.permute.xlu0 0
    %1918 = vperm.xlu0 %1917, %v1864
    %v1919 = vpop.permute.xlu0 %1918
    %1922 = vset.pattern.permute.xlu0 0
    %1923 = vperm.xlu0 %1922, %v1865
    %v1924 = vpop.permute.xlu0 %1923
    %1927 = vset.pattern.permute.xlu0 0
    %1928 = vperm.xlu0 %1927, %v1866
    %v1929 = vpop.permute.xlu0 %1928
    %1932 = vset.pattern.permute.xlu0 0
    %1933 = vperm.xlu0 %1932, %v1867
    %v1934 = vpop.permute.xlu0 %1933
    %1937 = vset.pattern.permute.xlu0 0
    %1938 = vperm.xlu0 %1937, %v1868
    %v1939 = vpop.permute.xlu0 %1938
    %1942 = vset.pattern.permute.xlu0 0
    %1943 = vperm.xlu0 %1942, %v1869
    %v1944 = vpop.permute.xlu0 %1943
    %1947 = vset.pattern.permute.xlu0 0
    %1948 = vperm.xlu0 %1947, %v1870
    %v1949 = vpop.permute.xlu0 %1948
    %v1951 = vmul.f32 %v562, %v1874
    %v1952 = vmul.f32 %v567, %v1879
    %v1953 = vmul.f32 %v572, %v1884
    %v1954 = vmul.f32 %v577, %v1889
    %v1955 = vmul.f32 %v582, %v1894
    %v1956 = vmul.f32 %v587, %v1899
    %v1957 = vmul.f32 %v592, %v1904
    %v1958 = vmul.f32 %v597, %v1909
    %v1959 = vmul.f32 %v602, %v1914
    %v1960 = vmul.f32 %v607, %v1919
    %v1961 = vmul.f32 %v612, %v1924
    %v1962 = vmul.f32 %v617, %v1929
    %v1963 = vmul.f32 %v622, %v1934
    %v1964 = vmul.f32 %v627, %v1939
    %v1965 = vmul.f32 %v632, %v1944
    %v1966 = vmul.f32 %v637, %v1949
    %vm1967 = vcmask 261248
    %v1968 = vsel %vm1967, %v1951, 0.0
    %v1969 = vrot.slane %v1968, 4
    %v1970 = vadd.f32 %v1968, %v1969
    %v1971 = vrot.slane %v1970, 2
    %v1972 = vadd.f32 %v1970, %v1971
    %v1973 = vrot.slane %v1972, 1
    %v1974 = vadd.f32 %v1972, %v1973
    %v1975 = vsel %vm1967, %v1952, 0.0
    %v1976 = vrot.slane %v1975, 4
    %v1977 = vadd.f32 %v1975, %v1976
    %v1978 = vrot.slane %v1977, 2
    %v1979 = vadd.f32 %v1977, %v1978
    %v1980 = vrot.slane %v1979, 1
    %v1981 = vadd.f32 %v1979, %v1980
    %v1982 = vsel %vm1967, %v1953, 0.0
    %v1983 = vrot.slane %v1982, 4
    %v1984 = vadd.f32 %v1982, %v1983
    %v1985 = vrot.slane %v1984, 2
    %v1986 = vadd.f32 %v1984, %v1985
    %v1987 = vrot.slane %v1986, 1
    %v1988 = vadd.f32 %v1986, %v1987
    %v1989 = vsel %vm1967, %v1954, 0.0
    %v1990 = vrot.slane %v1989, 4
    %v1991 = vadd.f32 %v1989, %v1990
    %v1992 = vrot.slane %v1991, 2
    %v1993 = vadd.f32 %v1991, %v1992
    %v1994 = vrot.slane %v1993, 1
    %v1995 = vadd.f32 %v1993, %v1994
    %v1996 = vsel %vm1967, %v1955, 0.0
    %v1997 = vrot.slane %v1996, 4
    %v1998 = vadd.f32 %v1996, %v1997
    %v1999 = vrot.slane %v1998, 2
    %v2000 = vadd.f32 %v1998, %v1999
    %v2001 = vrot.slane %v2000, 1
    %v2002 = vadd.f32 %v2000, %v2001
    %v2003 = vsel %vm1967, %v1956, 0.0
    %v2004 = vrot.slane %v2003, 4
    %v2005 = vadd.f32 %v2003, %v2004
    %v2006 = vrot.slane %v2005, 2
    %v2007 = vadd.f32 %v2005, %v2006
    %v2008 = vrot.slane %v2007, 1
    %v2009 = vadd.f32 %v2007, %v2008
    %v2010 = vsel %vm1967, %v1957, 0.0
    %v2011 = vrot.slane %v2010, 4
    %v2012 = vadd.f32 %v2010, %v2011
    %v2013 = vrot.slane %v2012, 2
    %v2014 = vadd.f32 %v2012, %v2013
    %v2015 = vrot.slane %v2014, 1
    %v2016 = vadd.f32 %v2014, %v2015
    %v2017 = vsel %vm1967, %v1958, 0.0
    %v2018 = vrot.slane %v2017, 4
    %v2019 = vadd.f32 %v2017, %v2018
    %v2020 = vrot.slane %v2019, 2
    %v2021 = vadd.f32 %v2019, %v2020
    %v2022 = vrot.slane %v2021, 1
    %v2023 = vadd.f32 %v2021, %v2022
    %v2024 = vsel %vm1967, %v1959, 0.0
    %v2025 = vrot.slane %v2024, 4
    %v2026 = vadd.f32 %v2024, %v2025
    %v2027 = vrot.slane %v2026, 2
    %v2028 = vadd.f32 %v2026, %v2027
    %v2029 = vrot.slane %v2028, 1
    %v2030 = vadd.f32 %v2028, %v2029
    %v2031 = vsel %vm1967, %v1960, 0.0
    %v2032 = vrot.slane %v2031, 4
    %v2033 = vadd.f32 %v2031, %v2032
    %v2034 = vrot.slane %v2033, 2
    %v2035 = vadd.f32 %v2033, %v2034
    %v2036 = vrot.slane %v2035, 1
    %v2037 = vadd.f32 %v2035, %v2036
    %v2038 = vsel %vm1967, %v1961, 0.0
    %v2039 = vrot.slane %v2038, 4
    %v2040 = vadd.f32 %v2038, %v2039
    %v2041 = vrot.slane %v2040, 2
    %v2042 = vadd.f32 %v2040, %v2041
    %v2043 = vrot.slane %v2042, 1
    %v2044 = vadd.f32 %v2042, %v2043
    %v2045 = vsel %vm1967, %v1962, 0.0
    %v2046 = vrot.slane %v2045, 4
    %v2047 = vadd.f32 %v2045, %v2046
    %v2048 = vrot.slane %v2047, 2
    %v2049 = vadd.f32 %v2047, %v2048
    %v2050 = vrot.slane %v2049, 1
    %v2051 = vadd.f32 %v2049, %v2050
    %v2052 = vsel %vm1967, %v1963, 0.0
    %v2053 = vrot.slane %v2052, 4
    %v2054 = vadd.f32 %v2052, %v2053
    %v2055 = vrot.slane %v2054, 2
    %v2056 = vadd.f32 %v2054, %v2055
    %v2057 = vrot.slane %v2056, 1
    %v2058 = vadd.f32 %v2056, %v2057
    %v2059 = vsel %vm1967, %v1964, 0.0
    %v2060 = vrot.slane %v2059, 4
    %v2061 = vadd.f32 %v2059, %v2060
    %v2062 = vrot.slane %v2061, 2
    %v2063 = vadd.f32 %v2061, %v2062
    %v2064 = vrot.slane %v2063, 1
    %v2065 = vadd.f32 %v2063, %v2064
    %v2066 = vsel %vm1967, %v1965, 0.0
    %v2067 = vrot.slane %v2066, 4
    %v2068 = vadd.f32 %v2066, %v2067
    %v2069 = vrot.slane %v2068, 2
    %v2070 = vadd.f32 %v2068, %v2069
    %v2071 = vrot.slane %v2070, 1
    %v2072 = vadd.f32 %v2070, %v2071
    %v2073 = vsel %vm1967, %v1966, 0.0
    %v2074 = vrot.slane %v2073, 4
    %v2075 = vadd.f32 %v2073, %v2074
    %v2076 = vrot.slane %v2075, 2
    %v2077 = vadd.f32 %v2075, %v2076
    %v2078 = vrot.slane %v2077, 1
    %v2079 = vadd.f32 %v2077, %v2078
    %v2080 = vld [vmem:[%s37] sm:$0xff]
    %v2081 = vld [vmem:[%s37 + $0x8] sm:$0xff]
    %v2082 = vld [vmem:[%s37 + $0x10] sm:$0x1]
    %v2083 = vld [vmem:[%s9] sm:$0xff]
    %v2084 = vld [vmem:[%s9 + $0x8] sm:$0xff]
    %2086 = vset.pattern.permute.xlu0 0
    %2087 = vperm.xlu0 %2086, %v2083
    %v2088 = vpop.permute.xlu0 %2087
    %2091 = vset.pattern.permute.xlu0 0
    %2092 = vperm.xlu0 %2091, %v2084
    %v2093 = vpop.permute.xlu0 %2092
    %v2095 = vlaneseq
    %v2096 = vshrl.u32 %v2095, 7
    %v2097 = vsub.s32 0, %v2096
    %v2098 = vrot.slane %v2082, %v2097
    %v2099 = vmul.f32 %v2088, %v2098
    %v2100 = vmul.f32 %v2093, %v2098
    %v2117 = vsel %vm1019, %v1981, %v1974
    %v2118 = vsel %vm1021, %v1988, %v2117
    %v2119 = vsel %vm1023, %v1995, %v2118
    %v2120 = vsel %vm1025, %v2002, %v2119
    %v2121 = vsel %vm1027, %v2009, %v2120
    %v2122 = vsel %vm1029, %v2016, %v2121
    %v2123 = vsel %vm1031, %v2023, %v2122
    %v2124 = vsel %vm1019, %v2037, %v2030
    %v2125 = vsel %vm1021, %v2044, %v2124
    %v2126 = vsel %vm1023, %v2051, %v2125
    %v2127 = vsel %vm1025, %v2058, %v2126
    %v2128 = vsel %vm1027, %v2065, %v2127
    %v2129 = vsel %vm1029, %v2072, %v2128
    %v2130 = vsel %vm1031, %v2079, %v2129
    %2131 = vrot.lane.b32.xlu0 %v2123, 112
    %v2132 = vpop.permute.xlu0 %2131
    %2133 = vrot.lane.b32.xlu0 %v2130, 112
    %v2134 = vpop.permute.xlu0 %2133
    %v2135 = vsel %vm640, %v2132, 0
    %v2137 = vsel %vm640, %v2134, 0
    %2139 = vmatprep.subr.mxu0 0.0
    %2140 = vmatpush1.msra.mxu0 %v2080
    %2141 = vmatprep.subr.mxu0 0.0
    %2142 = vmatpush1.msra.mxu0 %v2081
    %2143 = vmatprep.subr.mxu0 0.0
    %2144 = vmatpush1.msra.mxu0 0.0
    %2145 = vmatprep.subr.mxu0 0.0
    %2146 = vmatpush1.msra.mxu0 0.0
    %2147 = vmatprep.subr.mxu0 0.0
    %2148 = vmatpush1.msra.mxu0 0.0
    %2149 = vmatprep.subr.mxu0 0.0
    %2150 = vmatpush1.msra.mxu0 0.0
    %2151 = vmatprep.subr.mxu0 0.0
    %2152 = vmatpush1.msra.mxu0 0.0
    %2153 = vmatprep.subr.mxu0 0.0
    %2154 = vmatpush1.msra.mxu0 0.0
    %2155 = vmatprep.subr.mxu0 0.0
    %2156 = vmatpush1.msra.mxu0 0.0
    %2157 = vmatprep.subr.mxu0 0.0
    %2158 = vmatpush1.msra.mxu0 0.0
    %2159 = vmatprep.subr.mxu0 0.0
    %2160 = vmatpush1.msra.mxu0 0.0
    %2161 = vmatprep.subr.mxu0 0.0
    %2162 = vmatpush1.msra.mxu0 0.0
    %2163 = vmatprep.subr.mxu0 0.0
    %2164 = vmatpush1.msra.mxu0 0.0
    %2165 = vmatprep.subr.mxu0 0.0
    %2166 = vmatpush1.msra.mxu0 0.0
    %2167 = vmatprep.subr.mxu0 0.0
    %2168 = vmatpush1.msra.mxu0 0.0
    %2169 = vmatprep.subr.mxu0 0.0
    %2170 = vmatpush1.msra.mxu0 0.0
    %2171 = vmatprep.subr.mxu0 0.0
    %2172 = vmatpush1.msra.mxu0 0.0
    %2173 = vmatprep.subr.mxu0 0.0
    %2174 = vmatpush1.msra.mxu0 0.0
    %2175 = vmatprep.subr.mxu0 0.0
    %2176 = vmatpush1.msra.mxu0 0.0
    %2177 = vmatprep.subr.mxu0 0.0
    %2178 = vmatpush1.msra.mxu0 0.0
    %2179 = vmatprep.subr.mxu0 0.0
    %2180 = vmatpush1.msra.mxu0 0.0
    %2181 = vmatprep.subr.mxu0 0.0
    %2182 = vmatpush1.msra.mxu0 0.0
    %2183 = vmatprep.subr.mxu0 0.0
    %2184 = vmatpush1.msra.mxu0 0.0
    %2185 = vmatprep.subr.mxu0 0.0
    %2186 = vmatpush1.msra.mxu0 0.0
    %2187 = vmatprep.subr.mxu0 0.0
    %2188 = vmatpush1.msra.mxu0 0.0
    %2189 = vmatprep.subr.mxu0 0.0
    %2190 = vmatpush1.msra.mxu0 0.0
    %2191 = vmatprep.subr.mxu0 0.0
    %2192 = vmatpush1.msra.mxu0 0.0
    %2193 = vmatprep.subr.mxu0 0.0
    %2194 = vmatpush1.msra.mxu0 0.0
    %2195 = vmatprep.subr.mxu0 0.0
    %2196 = vmatpush1.msra.mxu0 0.0
    %2197 = vmatprep.subr.mxu0 0.0
    %2198 = vmatpush1.msra.mxu0 0.0
    %2199 = vmatprep.subr.mxu0 0.0
    %2200 = vmatpush1.msra.mxu0 0.0
    %2201 = vmatprep.subr.mxu0 0.0
    %2202 = vmatpush1.msra.mxu0 0.0
    %2203 = vmatprep.mubr.f32.mxu0 0.0
    %2204 = vmatmul.mubr.f32.gmra.mrb[0].mxu0 %v2135
    %v2205 = vpop.f32.mrb[0].mxu0
    %v2206 = vadd.f32 %v2099, %v2205
    %v2207 = vpop.f32.mrb[0].mxu0
    %2208 = vmatprep.mubr.f32.mxu0 0.0
    %2209 = vmatmul.mubr.f32.gmra.mrb[0].mxu0 %v2137
    %v2210 = vpop.f32.mrb[0].mxu0
    %v2211 = vadd.f32 %v2100, %v2210
    %v2212 = vpop.f32.mrb[0].mxu0
    %2213 = vdwg.mxu0
    %v2214 = vld [vmem:[%s39] sm:$0x1]
    %v2216 = vlaneseq
    %v2217 = vshrl.u32 %v2216, 7
    %v2218 = vsub.s32 0, %v2217
    %v2219 = vrot.slane %v2214, %v2218
    %v2221 = vadd.f32 %v2206, %v2219
    %v2222 = vadd.f32 %v2211, %v2219
    %v2223 = vld [vmem:[%s35] sm:$0xff]
    %v2224 = vld [vmem:[%s43] sm:$0xff]
    %v2225 = vld [vmem:[%s43 + $0x8] sm:$0x1]
    %v2226 = vld [vmem:[%s43 + $0x10] sm:$0xff]
    %v2227 = vld [vmem:[%s43 + $0x18] sm:$0x1]
    %v2228 = vld [vmem:[%s43 + $0x20] sm:$0xff]
    %v2229 = vld [vmem:[%s43 + $0x28] sm:$0x1]
    %v2230 = vld [vmem:[%s43 + $0x30] sm:$0xff]
    %v2231 = vld [vmem:[%s43 + $0x38] sm:$0x1]
    %v2232 = vld [vmem:[%s43 + $0x40] sm:$0xff]
    %v2233 = vld [vmem:[%s43 + $0x48] sm:$0x1]
    %v2234 = vld [vmem:[%s43 + $0x50] sm:$0xff]
    %v2235 = vld [vmem:[%s43 + $0x58] sm:$0x1]
    %v2236 = vld [vmem:[%s43 + $0x60] sm:$0xff]
    %v2237 = vld [vmem:[%s43 + $0x68] sm:$0x1]
    %v2238 = vld [vmem:[%s43 + $0x70] sm:$0xff]
    %v2239 = vld [vmem:[%s43 + $0x78] sm:$0x1]
    %v2240 = vld [vmem:[%s45] sm:$0xff]
    %v2241 = vld [vmem:[%s45 + $0x8] sm:$0x1]
    %v2242 = vld [vmem:[%s45 + $0x10] sm:$0xff]
    %v2243 = vld [vmem:[%s45 + $0x18] sm:$0x1]
    %v2244 = vld [vmem:[%s45 + $0x20] sm:$0xff]
    %v2245 = vld [vmem:[%s45 + $0x28] sm:$0x1]
    %v2246 = vld [vmem:[%s45 + $0x30] sm:$0xff]
    %v2247 = vld [vmem:[%s45 + $0x38] sm:$0x1]
    %v2248 = vld [vmem:[%s45 + $0x40] sm:$0xff]
    %v2249 = vld [vmem:[%s45 + $0x48] sm:$0x1]
    %v2250 = vld [vmem:[%s45 + $0x50] sm:$0xff]
    %v2251 = vld [vmem:[%s45 + $0x58] sm:$0x1]
    %v2252 = vld [vmem:[%s45 + $0x60] sm:$0xff]
    %v2253 = vld [vmem:[%s45 + $0x68] sm:$0x1]
    %v2254 = vld [vmem:[%s45 + $0x70] sm:$0xff]
    %v2255 = vld [vmem:[%s45 + $0x78] sm:$0x1]
    %vm2256 = vcmask 138240
    %v2258 = vsel %vm2256, %v2223, 0
    %v2261 = vsel %vm2256, %v2221, 0
    %2263 = vmatprep.subr.mxu0 0.0
    %2264 = vmatpush1.xpose.msra.mxu0 %v2261
    %2265 = vmatprep.subr.mxu0 0.0
    %2266 = vmatpush1.xpose.msra.mxu0 0.0
    %2267 = vmatprep.subr.mxu0 0.0
    %2268 = vmatpush1.xpose.msra.mxu0 0.0
    %2269 = vmatprep.subr.mxu0 0.0
    %2270 = vmatpush1.xpose.msra.mxu0 0.0
    %2271 = vmatprep.subr.mxu0 0.0
    %2272 = vmatpush1.xpose.msra.mxu0 0.0
    %2273 = vmatprep.subr.mxu0 0.0
    %2274 = vmatpush1.xpose.msra.mxu0 0.0
    %2275 = vmatprep.subr.mxu0 0.0
    %2276 = vmatpush1.xpose.msra.mxu0 0.0
    %2277 = vmatprep.subr.mxu0 0.0
    %2278 = vmatpush1.xpose.msra.mxu0 0.0
    %2279 = vmatprep.subr.mxu0 0.0
    %2280 = vmatpush1.xpose.msra.mxu0 0.0
    %2281 = vmatprep.subr.mxu0 0.0
    %2282 = vmatpush1.xpose.msra.mxu0 0.0
    %2283 = vmatprep.subr.mxu0 0.0
    %2284 = vmatpush1.xpose.msra.mxu0 0.0
    %2285 = vmatprep.subr.mxu0 0.0
    %2286 = vmatpush1.xpose.msra.mxu0 0.0
    %2287 = vmatprep.subr.mxu0 0.0
    %2288 = vmatpush1.xpose.msra.mxu0 0.0
    %2289 = vmatprep.subr.mxu0 0.0
    %2290 = vmatpush1.xpose.msra.mxu0 0.0
    %2291 = vmatprep.subr.mxu0 0.0
    %2292 = vmatpush1.xpose.msra.mxu0 0.0
    %2293 = vmatprep.subr.mxu0 0.0
    %2294 = vmatpush1.xpose.msra.mxu0 0.0
    %2295 = vmatprep.subr.mxu0 0.0
    %2296 = vmatpush1.xpose.msra.mxu0 0.0
    %2297 = vmatprep.subr.mxu0 0.0
    %2298 = vmatpush1.xpose.msra.mxu0 0.0
    %2299 = vmatprep.subr.mxu0 0.0
    %2300 = vmatpush1.xpose.msra.mxu0 0.0
    %2301 = vmatprep.subr.mxu0 0.0
    %2302 = vmatpush1.xpose.msra.mxu0 0.0
    %2303 = vmatprep.subr.mxu0 0.0
    %2304 = vmatpush1.xpose.msra.mxu0 0.0
    %2305 = vmatprep.subr.mxu0 0.0
    %2306 = vmatpush1.xpose.msra.mxu0 0.0
    %2307 = vmatprep.subr.mxu0 0.0
    %2308 = vmatpush1.xpose.msra.mxu0 0.0
    %2309 = vmatprep.subr.mxu0 0.0
    %2310 = vmatpush1.xpose.msra.mxu0 0.0
    %2311 = vmatprep.subr.mxu0 0.0
    %2312 = vmatpush1.xpose.msra.mxu0 0.0
    %2313 = vmatprep.subr.mxu0 0.0
    %2314 = vmatpush1.xpose.msra.mxu0 0.0
    %2315 = vmatprep.subr.mxu0 0.0
    %2316 = vmatpush1.xpose.msra.mxu0 0.0
    %2317 = vmatprep.subr.mxu0 0.0
    %2318 = vmatpush1.xpose.msra.mxu0 0.0
    %2319 = vmatprep.subr.mxu0 0.0
    %2320 = vmatpush1.xpose.msra.mxu0 0.0
    %2321 = vmatprep.subr.mxu0 0.0
    %2322 = vmatpush1.xpose.msra.mxu0 0.0
    %2323 = vmatprep.subr.mxu0 0.0
    %2324 = vmatpush1.xpose.msra.mxu0 0.0
    %2325 = vmatprep.subr.mxu0 0.0
    %2326 = vmatpush1.xpose.msra.mxu0 0.0
    %2327 = vmatprep.mubr.f32.mxu0 0.0
    %2328 = vmatmul.mubr.f32.gmra.mrb[0].mxu0 %v2258
    %v2329 = vpop.f32.mrb[0].mxu0
    %v2330 = vadd.f32 0.0, %v2329
    %v2331 = vpop.f32.mrb[0].mxu0
    %2332 = vdwg.mxu0
    %v2333 = vmul.f32 %v2330, 0.24253562
    %v2334 = vld [vmem:[%s7] sm:$0x1]
    %v2335 = vld [vmem:[%s11] sm:$0xff]
    %v2336 = vld [vmem:[%s11 + $0x8] sm:$0x1]
    %v2337 = vld [vmem:[%s13] sm:$0xff]
    %v2338 = vld [vmem:[%s13 + $0x8] sm:$0x1]
    %v2339 = vlaneseq
    %v2340 = vshrl.u32 %v2339, 7
    %v2341 = vsub.s32 0, %v2340
    %v2342 = vrot.slane %v2334, %v2341
    %2344 = vset.pattern.permute.xlu0 0
    %2345 = vperm.xlu0 %2344, %v2224
    %v2346 = vpop.permute.xlu0 %2345
    %2349 = vset.pattern.permute.xlu0 0
    %2350 = vperm.xlu0 %2349, %v2225
    %v2351 = vpop.permute.xlu0 %2350
    %2354 = vset.pattern.permute.xlu0 0
    %2355 = vperm.xlu0 %2354, %v2226
    %v2356 = vpop.permute.xlu0 %2355
    %2359 = vset.pattern.permute.xlu0 0
    %2360 = vperm.xlu0 %2359, %v2227
    %v2361 = vpop.permute.xlu0 %2360
    %2364 = vset.pattern.permute.xlu0 0
    %2365 = vperm.xlu0 %2364, %v2228
    %v2366 = vpop.permute.xlu0 %2365
    %2369 = vset.pattern.permute.xlu0 0
    %2370 = vperm.xlu0 %2369, %v2229
    %v2371 = vpop.permute.xlu0 %2370
    %2374 = vset.pattern.permute.xlu0 0
    %2375 = vperm.xlu0 %2374, %v2230
    %v2376 = vpop.permute.xlu0 %2375
    %2379 = vset.pattern.permute.xlu0 0
    %2380 = vperm.xlu0 %2379, %v2231
    %v2381 = vpop.permute.xlu0 %2380
    %2384 = vset.pattern.permute.xlu0 0
    %2385 = vperm.xlu0 %2384, %v2232
    %v2386 = vpop.permute.xlu0 %2385
    %2389 = vset.pattern.permute.xlu0 0
    %2390 = vperm.xlu0 %2389, %v2233
    %v2391 = vpop.permute.xlu0 %2390
    %2394 = vset.pattern.permute.xlu0 0
    %2395 = vperm.xlu0 %2394, %v2234
    %v2396 = vpop.permute.xlu0 %2395
    %2399 = vset.pattern.permute.xlu0 0
    %2400 = vperm.xlu0 %2399, %v2235
    %v2401 = vpop.permute.xlu0 %2400
    %2404 = vset.pattern.permute.xlu0 0
    %2405 = vperm.xlu0 %2404, %v2236
    %v2406 = vpop.permute.xlu0 %2405
    %2409 = vset.pattern.permute.xlu0 0
    %2410 = vperm.xlu0 %2409, %v2237
    %v2411 = vpop.permute.xlu0 %2410
    %2414 = vset.pattern.permute.xlu0 0
    %2415 = vperm.xlu0 %2414, %v2238
    %v2416 = vpop.permute.xlu0 %2415
    %2419 = vset.pattern.permute.xlu0 0
    %2420 = vperm.xlu0 %2419, %v2239
    %v2421 = vpop.permute.xlu0 %2420
    %vm2423 = vcmp.le.f32.partialorder %v2342, %v2346
    %vm2424 = vcmp.le.f32.partialorder %v2342, %v2351
    %vm2425 = vcmp.le.f32.partialorder %v2342, %v2356
    %vm2426 = vcmp.le.f32.partialorder %v2342, %v2361
    %vm2427 = vcmp.le.f32.partialorder %v2342, %v2366
    %vm2428 = vcmp.le.f32.partialorder %v2342, %v2371
    %vm2429 = vcmp.le.f32.partialorder %v2342, %v2376
    %vm2430 = vcmp.le.f32.partialorder %v2342, %v2381
    %vm2431 = vcmp.le.f32.partialorder %v2342, %v2386
    %vm2432 = vcmp.le.f32.partialorder %v2342, %v2391
    %vm2433 = vcmp.le.f32.partialorder %v2342, %v2396
    %vm2434 = vcmp.le.f32.partialorder %v2342, %v2401
    %vm2435 = vcmp.le.f32.partialorder %v2342, %v2406
    %vm2436 = vcmp.le.f32.partialorder %v2342, %v2411
    %vm2437 = vcmp.le.f32.partialorder %v2342, %v2416
    %vm2438 = vcmp.le.f32.partialorder %v2342, %v2421
    %2440 = vset.pattern.permute.xlu0 0
    %2441 = vperm.xlu0 %2440, %v2240
    %v2442 = vpop.permute.xlu0 %2441
    %2445 = vset.pattern.permute.xlu0 0
    %2446 = vperm.xlu0 %2445, %v2241
    %v2447 = vpop.permute.xlu0 %2446
    %2450 = vset.pattern.permute.xlu0 0
    %2451 = vperm.xlu0 %2450, %v2242
    %v2452 = vpop.permute.xlu0 %2451
    %2455 = vset.pattern.permute.xlu0 0
    %2456 = vperm.xlu0 %2455, %v2243
    %v2457 = vpop.permute.xlu0 %2456
    %2460 = vset.pattern.permute.xlu0 0
    %2461 = vperm.xlu0 %2460, %v2244
    %v2462 = vpop.permute.xlu0 %2461
    %2465 = vset.pattern.permute.xlu0 0
    %2466 = vperm.xlu0 %2465, %v2245
    %v2467 = vpop.permute.xlu0 %2466
    %2470 = vset.pattern.permute.xlu0 0
    %2471 = vperm.xlu0 %2470, %v2246
    %v2472 = vpop.permute.xlu0 %2471
    %2475 = vset.pattern.permute.xlu0 0
    %2476 = vperm.xlu0 %2475, %v2247
    %v2477 = vpop.permute.xlu0 %2476
    %2480 = vset.pattern.permute.xlu0 0
    %2481 = vperm.xlu0 %2480, %v2248
    %v2482 = vpop.permute.xlu0 %2481
    %2485 = vset.pattern.permute.xlu0 0
    %2486 = vperm.xlu0 %2485, %v2249
    %v2487 = vpop.permute.xlu0 %2486
    %2490 = vset.pattern.permute.xlu0 0
    %2491 = vperm.xlu0 %2490, %v2250
    %v2492 = vpop.permute.xlu0 %2491
    %2495 = vset.pattern.permute.xlu0 0
    %2496 = vperm.xlu0 %2495, %v2251
    %v2497 = vpop.permute.xlu0 %2496
    %2500 = vset.pattern.permute.xlu0 0
    %2501 = vperm.xlu0 %2500, %v2252
    %v2502 = vpop.permute.xlu0 %2501
    %2505 = vset.pattern.permute.xlu0 0
    %2506 = vperm.xlu0 %2505, %v2253
    %v2507 = vpop.permute.xlu0 %2506
    %2510 = vset.pattern.permute.xlu0 0
    %2511 = vperm.xlu0 %2510, %v2254
    %v2512 = vpop.permute.xlu0 %2511
    %2515 = vset.pattern.permute.xlu0 0
    %2516 = vperm.xlu0 %2515, %v2255
    %v2517 = vpop.permute.xlu0 %2516
    %vm2519 = vcmp.ge.f32.partialorder %v2342, %v2442
    %vm2520 = vcmp.ge.f32.partialorder %v2342, %v2447
    %vm2521 = vcmp.ge.f32.partialorder %v2342, %v2452
    %vm2522 = vcmp.ge.f32.partialorder %v2342, %v2457
    %vm2523 = vcmp.ge.f32.partialorder %v2342, %v2462
    %vm2524 = vcmp.ge.f32.partialorder %v2342, %v2467
    %vm2525 = vcmp.ge.f32.partialorder %v2342, %v2472
    %vm2526 = vcmp.ge.f32.partialorder %v2342, %v2477
    %vm2527 = vcmp.ge.f32.partialorder %v2342, %v2482
    %vm2528 = vcmp.ge.f32.partialorder %v2342, %v2487
    %vm2529 = vcmp.ge.f32.partialorder %v2342, %v2492
    %vm2530 = vcmp.ge.f32.partialorder %v2342, %v2497
    %vm2531 = vcmp.ge.f32.partialorder %v2342, %v2502
    %vm2532 = vcmp.ge.f32.partialorder %v2342, %v2507
    %vm2533 = vcmp.ge.f32.partialorder %v2342, %v2512
    %vm2534 = vcmp.ge.f32.partialorder %v2342, %v2517
    %vm2535 = vmand %vm2423, %vm2519
    %vm2536 = vmand %vm2424, %vm2520
    %vm2537 = vmand %vm2425, %vm2521
    %vm2538 = vmand %vm2426, %vm2522
    %vm2539 = vmand %vm2427, %vm2523
    %vm2540 = vmand %vm2428, %vm2524
    %vm2541 = vmand %vm2429, %vm2525
    %vm2542 = vmand %vm2430, %vm2526
    %vm2543 = vmand %vm2431, %vm2527
    %vm2544 = vmand %vm2432, %vm2528
    %vm2545 = vmand %vm2433, %vm2529
    %vm2546 = vmand %vm2434, %vm2530
    %vm2547 = vmand %vm2435, %vm2531
    %vm2548 = vmand %vm2436, %vm2532
    %vm2549 = vmand %vm2437, %vm2533
    %vm2550 = vmand %vm2438, %vm2534
    %vm2551 = vcmp.ne.f32.partialorder %v2337, 0.0
    %vm2552 = vcmp.ne.f32.partialorder %v2338, 0.0
    %v2553 = vsel %vm2551, 1, 0
    %v2554 = vsel %vm2552, 1, 0
    %vm2555 = vcmp.eq.s32.totalorder %v2553, 1
    %vm2556 = vcmp.eq.s32.totalorder %v2554, 1
    %vm2557 = vmand %vm2535, %vm2555
    %vm2558 = vmand %vm2536, %vm2556
    %vm2559 = vmand %vm2537, %vm2555
    %vm2560 = vmand %vm2538, %vm2556
    %vm2561 = vmand %vm2539, %vm2555
    %vm2562 = vmand %vm2540, %vm2556
    %vm2563 = vmand %vm2541, %vm2555
    %vm2564 = vmand %vm2542, %vm2556
    %vm2565 = vmand %vm2543, %vm2555
    %vm2566 = vmand %vm2544, %vm2556
    %vm2567 = vmand %vm2545, %vm2555
    %vm2568 = vmand %vm2546, %vm2556
    %vm2569 = vmand %vm2547, %vm2555
    %vm2570 = vmand %vm2548, %vm2556
    %vm2571 = vmand %vm2549, %vm2555
    %vm2572 = vmand %vm2550, %vm2556
    %v2574 = vcombine.high %v2333, %v2333
    %v2576 = vunpack.c.l.s4 1966171168
    %v2577 = vunpack.c.0.s8 %v2576
    %v2578 = vlaneseq
    %v2579 = vshrl.u32 %v2578, 7
    %v2580 = vsub.s32 %v2577, %v2579
    %v2581 = vrot.slane %v2333, %v2580
    %v2583 = vunpack.c.l.s4 1966171168
    %v2584 = vunpack.c.0.s8 %v2583
    %v2585 = vlaneseq
    %v2586 = vshrl.u32 %v2585, 7
    %v2587 = vsub.s32 %v2584, %v2586
    %v2588 = vrot.slane %v2574, %v2587
    %v2589 = vcombine.high %v2581, %v2581
    %v2590 = vcombine.high %v2588, %v2588
    %v2592 = vunpack.c.l.s4 1966171168
    %v2593 = vunpack.c.0.s8 %v2592
    %v2594 = vlaneseq
    %v2595 = vshrl.u32 %v2594, 7
    %v2596 = vsub.s32 %v2593, %v2595
    %v2597 = vrot.slane %v2581, %v2596
    %v2599 = vunpack.c.l.s4 1966171168
    %v2600 = vunpack.c.0.s8 %v2599
    %v2601 = vlaneseq
    %v2602 = vshrl.u32 %v2601, 7
    %v2603 = vsub.s32 %v2600, %v2602
    %v2604 = vrot.slane %v2588, %v2603
    %v2606 = vunpack.c.l.s4 1966171168
    %v2607 = vunpack.c.0.s8 %v2606
    %v2608 = vlaneseq
    %v2609 = vshrl.u32 %v2608, 7
    %v2610 = vsub.s32 %v2607, %v2609
    %v2611 = vrot.slane %v2589, %v2610
    %v2613 = vunpack.c.l.s4 1966171168
    %v2614 = vunpack.c.0.s8 %v2613
    %v2615 = vlaneseq
    %v2616 = vshrl.u32 %v2615, 7
    %v2617 = vsub.s32 %v2614, %v2616
    %v2618 = vrot.slane %v2590, %v2617
    %v2619 = vcombine.high %v2597, %v2597
    %v2620 = vcombine.high %v2604, %v2604
    %v2621 = vcombine.high %v2611, %v2611
    %v2622 = vcombine.high %v2618, %v2618
    %v2623 = vlaneseq
    %v2624 = vshrl.u32 %v2623, 7
    %v2625 = vsub.s32 0, %v2624
    %v2626 = vrot.slane %v2597, %v2625
    %v2627 = vlaneseq
    %v2628 = vshrl.u32 %v2627, 7
    %v2629 = vsub.s32 0, %v2628
    %v2630 = vrot.slane %v2611, %v2629
    %v2631 = vlaneseq
    %v2632 = vshrl.u32 %v2631, 7
    %v2633 = vsub.s32 0, %v2632
    %v2634 = vrot.slane %v2619, %v2633
    %v2635 = vlaneseq
    %v2636 = vshrl.u32 %v2635, 7
    %v2637 = vsub.s32 0, %v2636
    %v2638 = vrot.slane %v2621, %v2637
    %v2639 = vlaneseq
    %v2640 = vshrl.u32 %v2639, 7
    %v2641 = vsub.s32 0, %v2640
    %v2642 = vrot.slane %v2604, %v2641
    %v2643 = vlaneseq
    %v2644 = vshrl.u32 %v2643, 7
    %v2645 = vsub.s32 0, %v2644
    %v2646 = vrot.slane %v2618, %v2645
    %v2647 = vlaneseq
    %v2648 = vshrl.u32 %v2647, 7
    %v2649 = vsub.s32 0, %v2648
    %v2650 = vrot.slane %v2620, %v2649
    %v2651 = vlaneseq
    %v2652 = vshrl.u32 %v2651, 7
    %v2653 = vsub.s32 0, %v2652
    %v2654 = vrot.slane %v2622, %v2653
    %v2663 = vsel %vm2557, %v2626, -1e+09
    %v2664 = vsel %vm2558, %v2626, -1e+09
    %v2665 = vsel %vm2559, %v2630, -1e+09
    %v2666 = vsel %vm2560, %v2630, -1e+09
    %v2667 = vsel %vm2561, %v2634, -1e+09
    %v2668 = vsel %vm2562, %v2634, -1e+09
    %v2669 = vsel %vm2563, %v2638, -1e+09
    %v2670 = vsel %vm2564, %v2638, -1e+09
    %v2671 = vsel %vm2565, %v2642, -1e+09
    %v2672 = vsel %vm2566, %v2642, -1e+09
    %v2673 = vsel %vm2567, %v2646, -1e+09
    %v2674 = vsel %vm2568, %v2646, -1e+09
    %v2675 = vsel %vm2569, %v2650, -1e+09
    %v2676 = vsel %vm2570, %v2650, -1e+09
    %v2677 = vsel %vm2571, %v2654, -1e+09
    %v2678 = vsel %vm2572, %v2654, -1e+09
    %vm2679 = vcmask 64512
    %v2680 = vsel %vm2679, %v2663, -inf
    %2681 = vmax.xlane.f32.xlu0 %v2680
    %v2682 = vpop.xlane.xlu0 %2681
    %vm2683 = vcmask 57344
    %v2684 = vsel %vm2683, %v2664, -inf
    %2685 = vmax.xlane.f32.xlu0 %v2684
    %v2686 = vpop.xlane.xlu0 %2685
    %v2687 = vsel %vm2679, %v2665, -inf
    %2688 = vmax.xlane.f32.xlu0 %v2687
    %v2689 = vpop.xlane.xlu0 %2688
    %v2690 = vsel %vm2683, %v2666, -inf
    %2691 = vmax.xlane.f32.xlu0 %v2690
    %v2692 = vpop.xlane.xlu0 %2691
    %v2693 = vsel %vm2679, %v2667, -inf
    %2694 = vmax.xlane.f32.xlu0 %v2693
    %v2695 = vpop.xlane.xlu0 %2694
    %v2696 = vsel %vm2683, %v2668, -inf
    %2697 = vmax.xlane.f32.xlu0 %v2696
    %v2698 = vpop.xlane.xlu0 %2697
    %v2699 = vsel %vm2679, %v2669, -inf
    %2700 = vmax.xlane.f32.xlu0 %v2699
    %v2701 = vpop.xlane.xlu0 %2700
    %v2702 = vsel %vm2683, %v2670, -inf
    %2703 = vmax.xlane.f32.xlu0 %v2702
    %v2704 = vpop.xlane.xlu0 %2703
    %v2705 = vsel %vm2679, %v2671, -inf
    %2706 = vmax.xlane.f32.xlu0 %v2705
    %v2707 = vpop.xlane.xlu0 %2706
    %v2708 = vsel %vm2683, %v2672, -inf
    %2709 = vmax.xlane.f32.xlu0 %v2708
    %v2710 = vpop.xlane.xlu0 %2709
    %v2711 = vsel %vm2679, %v2673, -inf
    %2712 = vmax.xlane.f32.xlu0 %v2711
    %v2713 = vpop.xlane.xlu0 %2712
    %v2714 = vsel %vm2683, %v2674, -inf
    %2715 = vmax.xlane.f32.xlu0 %v2714
    %v2716 = vpop.xlane.xlu0 %2715
    %v2717 = vsel %vm2679, %v2675, -inf
    %2718 = vmax.xlane.f32.xlu0 %v2717
    %v2719 = vpop.xlane.xlu0 %2718
    %v2720 = vsel %vm2683, %v2676, -inf
    %2721 = vmax.xlane.f32.xlu0 %v2720
    %v2722 = vpop.xlane.xlu0 %2721
    %v2723 = vsel %vm2679, %v2677, -inf
    %2724 = vmax.xlane.f32.xlu0 %v2723
    %v2725 = vpop.xlane.xlu0 %2724
    %v2726 = vsel %vm2683, %v2678, -inf
    %2727 = vmax.xlane.f32.xlu0 %v2726
    %v2728 = vpop.xlane.xlu0 %2727
    %v2729 = vsub.f32 %v2663, %v2682
    %v2730 = vsub.f32 %v2664, %v2686
    %v2731 = vsub.f32 %v2665, %v2689
    %v2732 = vsub.f32 %v2666, %v2692
    %v2733 = vsub.f32 %v2667, %v2695
    %v2734 = vsub.f32 %v2668, %v2698
    %v2735 = vsub.f32 %v2669, %v2701
    %v2736 = vsub.f32 %v2670, %v2704
    %v2737 = vsub.f32 %v2671, %v2707
    %v2738 = vsub.f32 %v2672, %v2710
    %v2739 = vsub.f32 %v2673, %v2713
    %v2740 = vsub.f32 %v2674, %v2716
    %v2741 = vsub.f32 %v2675, %v2719
    %v2742 = vsub.f32 %v2676, %v2722
    %v2743 = vsub.f32 %v2677, %v2725
    %v2744 = vsub.f32 %v2678, %v2728
    %v2745 = vmul.f32 %v2729, 1.442695
    %v2746 = vpow.pop %v2745
    %v2747 = vmul.f32 %v2730, 1.442695
    %v2748 = vpow.pop %v2747
    %v2749 = vmul.f32 %v2731, 1.442695
    %v2750 = vpow.pop %v2749
    %v2751 = vmul.f32 %v2732, 1.442695
    %v2752 = vpow.pop %v2751
    %v2753 = vmul.f32 %v2733, 1.442695
    %v2754 = vpow.pop %v2753
    %v2755 = vmul.f32 %v2734, 1.442695
    %v2756 = vpow.pop %v2755
    %v2757 = vmul.f32 %v2735, 1.442695
    %v2758 = vpow.pop %v2757
    %v2759 = vmul.f32 %v2736, 1.442695
    %v2760 = vpow.pop %v2759
    %v2761 = vmul.f32 %v2737, 1.442695
    %v2762 = vpow.pop %v2761
    %v2763 = vmul.f32 %v2738, 1.442695
    %v2764 = vpow.pop %v2763
    %v2765 = vmul.f32 %v2739, 1.442695
    %v2766 = vpow.pop %v2765
    %v2767 = vmul.f32 %v2740, 1.442695
    %v2768 = vpow.pop %v2767
    %v2769 = vmul.f32 %v2741, 1.442695
    %v2770 = vpow.pop %v2769
    %v2771 = vmul.f32 %v2742, 1.442695
    %v2772 = vpow.pop %v2771
    %v2773 = vmul.f32 %v2743, 1.442695
    %v2774 = vpow.pop %v2773
    %v2775 = vmul.f32 %v2744, 1.442695
    %v2776 = vpow.pop %v2775
    %v2777 = vsel %vm2679, %v2746, 0.0
    %2778 = vadd.xlane.f32.xlu0 %v2777
    %v2779 = vpop.xlane.xlu0 %2778
    %v2780 = vsel %vm2683, %v2748, 0.0
    %2781 = vadd.xlane.f32.xlu0 %v2780
    %v2782 = vpop.xlane.xlu0 %2781
    %v2783 = vsel %vm2679, %v2750, 0.0
    %2784 = vadd.xlane.f32.xlu0 %v2783
    %v2785 = vpop.xlane.xlu0 %2784
    %v2786 = vsel %vm2683, %v2752, 0.0
    %2787 = vadd.xlane.f32.xlu0 %v2786
    %v2788 = vpop.xlane.xlu0 %2787
    %v2789 = vsel %vm2679, %v2754, 0.0
    %2790 = vadd.xlane.f32.xlu0 %v2789
    %v2791 = vpop.xlane.xlu0 %2790
    %v2792 = vsel %vm2683, %v2756, 0.0
    %2793 = vadd.xlane.f32.xlu0 %v2792
    %v2794 = vpop.xlane.xlu0 %2793
    %v2795 = vsel %vm2679, %v2758, 0.0
    %2796 = vadd.xlane.f32.xlu0 %v2795
    %v2797 = vpop.xlane.xlu0 %2796
    %v2798 = vsel %vm2683, %v2760, 0.0
    %2799 = vadd.xlane.f32.xlu0 %v2798
    %v2800 = vpop.xlane.xlu0 %2799
    %v2801 = vsel %vm2679, %v2762, 0.0
    %2802 = vadd.xlane.f32.xlu0 %v2801
    %v2803 = vpop.xlane.xlu0 %2802
    %v2804 = vsel %vm2683, %v2764, 0.0
    %2805 = vadd.xlane.f32.xlu0 %v2804
    %v2806 = vpop.xlane.xlu0 %2805
    %v2807 = vsel %vm2679, %v2766, 0.0
    %2808 = vadd.xlane.f32.xlu0 %v2807
    %v2809 = vpop.xlane.xlu0 %2808
    %v2810 = vsel %vm2683, %v2768, 0.0
    %2811 = vadd.xlane.f32.xlu0 %v2810
    %v2812 = vpop.xlane.xlu0 %2811
    %v2813 = vsel %vm2679, %v2770, 0.0
    %2814 = vadd.xlane.f32.xlu0 %v2813
    %v2815 = vpop.xlane.xlu0 %2814
    %v2816 = vsel %vm2683, %v2772, 0.0
    %2817 = vadd.xlane.f32.xlu0 %v2816
    %v2818 = vpop.xlane.xlu0 %2817
    %v2819 = vsel %vm2679, %v2774, 0.0
    %2820 = vadd.xlane.f32.xlu0 %v2819
    %v2821 = vpop.xlane.xlu0 %2820
    %v2822 = vsel %vm2683, %v2776, 0.0
    %2823 = vadd.xlane.f32.xlu0 %v2822
    %v2824 = vpop.xlane.xlu0 %2823
    %v2825 = vrcp.pop %v2779
    %v2826 = vrcp.pop %v2782
    %v2827 = vrcp.pop %v2785
    %v2828 = vrcp.pop %v2788
    %v2829 = vrcp.pop %v2791
    %v2830 = vrcp.pop %v2794
    %v2831 = vrcp.pop %v2797
    %v2832 = vrcp.pop %v2800
    %v2833 = vrcp.pop %v2803
    %v2834 = vrcp.pop %v2806
    %v2835 = vrcp.pop %v2809
    %v2836 = vrcp.pop %v2812
    %v2837 = vrcp.pop %v2815
    %v2838 = vrcp.pop %v2818
    %v2839 = vrcp.pop %v2821
    %v2840 = vrcp.pop %v2824
    %v2841 = vmul.f32 %v2746, %v2825
    %v2842 = vmul.f32 %v2748, %v2826
    %v2843 = vmul.f32 %v2750, %v2827
    %v2844 = vmul.f32 %v2752, %v2828
    %v2845 = vmul.f32 %v2754, %v2829
    %v2846 = vmul.f32 %v2756, %v2830
    %v2847 = vmul.f32 %v2758, %v2831
    %v2848 = vmul.f32 %v2760, %v2832
    %v2849 = vmul.f32 %v2762, %v2833
    %v2850 = vmul.f32 %v2764, %v2834
    %v2851 = vmul.f32 %v2766, %v2835
    %v2852 = vmul.f32 %v2768, %v2836
    %v2853 = vmul.f32 %v2770, %v2837
    %v2854 = vmul.f32 %v2772, %v2838
    %v2855 = vmul.f32 %v2774, %v2839
    %v2856 = vmul.f32 %v2776, %v2840
    %v2857 = vmul.f32 %v2841, %v2335
    %v2858 = vmul.f32 %v2842, %v2336
    %v2859 = vmul.f32 %v2843, %v2335
    %v2860 = vmul.f32 %v2844, %v2336
    %v2861 = vmul.f32 %v2845, %v2335
    %v2862 = vmul.f32 %v2846, %v2336
    %v2863 = vmul.f32 %v2847, %v2335
    %v2864 = vmul.f32 %v2848, %v2336
    %v2865 = vmul.f32 %v2849, %v2335
    %v2866 = vmul.f32 %v2850, %v2336
    %v2867 = vmul.f32 %v2851, %v2335
    %v2868 = vmul.f32 %v2852, %v2336
    %v2869 = vmul.f32 %v2853, %v2335
    %v2870 = vmul.f32 %v2854, %v2336
    %v2871 = vmul.f32 %v2855, %v2335
    %v2872 = vmul.f32 %v2856, %v2336
    %v2873 = vsel %vm2679, %v2857, 0.0
    %2874 = vadd.xlane.f32.xlu0 %v2873
    %v2875 = vpop.xlane.xlu0 %2874
    %v2876 = vsel %vm2683, %v2858, 0.0
    %2877 = vadd.xlane.f32.xlu0 %v2876
    %v2878 = vpop.xlane.xlu0 %2877
    %v2879 = vsel %vm2679, %v2859, 0.0
    %2880 = vadd.xlane.f32.xlu0 %v2879
    %v2881 = vpop.xlane.xlu0 %2880
    %v2882 = vsel %vm2683, %v2860, 0.0
    %2883 = vadd.xlane.f32.xlu0 %v2882
    %v2884 = vpop.xlane.xlu0 %2883
    %v2885 = vsel %vm2679, %v2861, 0.0
    %2886 = vadd.xlane.f32.xlu0 %v2885
    %v2887 = vpop.xlane.xlu0 %2886
    %v2888 = vsel %vm2683, %v2862, 0.0
    %2889 = vadd.xlane.f32.xlu0 %v2888
    %v2890 = vpop.xlane.xlu0 %2889
    %v2891 = vsel %vm2679, %v2863, 0.0
    %2892 = vadd.xlane.f32.xlu0 %v2891
    %v2893 = vpop.xlane.xlu0 %2892
    %v2894 = vsel %vm2683, %v2864, 0.0
    %2895 = vadd.xlane.f32.xlu0 %v2894
    %v2896 = vpop.xlane.xlu0 %2895
    %v2897 = vsel %vm2679, %v2865, 0.0
    %2898 = vadd.xlane.f32.xlu0 %v2897
    %v2899 = vpop.xlane.xlu0 %2898
    %v2900 = vsel %vm2683, %v2866, 0.0
    %2901 = vadd.xlane.f32.xlu0 %v2900
    %v2902 = vpop.xlane.xlu0 %2901
    %v2903 = vsel %vm2679, %v2867, 0.0
    %2904 = vadd.xlane.f32.xlu0 %v2903
    %v2905 = vpop.xlane.xlu0 %2904
    %v2906 = vsel %vm2683, %v2868, 0.0
    %2907 = vadd.xlane.f32.xlu0 %v2906
    %v2908 = vpop.xlane.xlu0 %2907
    %v2909 = vsel %vm2679, %v2869, 0.0
    %2910 = vadd.xlane.f32.xlu0 %v2909
    %v2911 = vpop.xlane.xlu0 %2910
    %v2912 = vsel %vm2683, %v2870, 0.0
    %2913 = vadd.xlane.f32.xlu0 %v2912
    %v2914 = vpop.xlane.xlu0 %2913
    %v2915 = vsel %vm2679, %v2871, 0.0
    %2916 = vadd.xlane.f32.xlu0 %v2915
    %v2917 = vpop.xlane.xlu0 %2916
    %v2918 = vsel %vm2683, %v2872, 0.0
    %2919 = vadd.xlane.f32.xlu0 %v2918
    %v2920 = vpop.xlane.xlu0 %2919
    %v2922 = vsel %vm2256, %v2222, 0
    %2924 = vmatprep.subr.mxu0 0.0
    %2925 = vmatpush1.xpose.msra.mxu0 %v2922
    %2926 = vmatprep.subr.mxu0 0.0
    %2927 = vmatpush1.xpose.msra.mxu0 0.0
    %2928 = vmatprep.subr.mxu0 0.0
    %2929 = vmatpush1.xpose.msra.mxu0 0.0
    %2930 = vmatprep.subr.mxu0 0.0
    %2931 = vmatpush1.xpose.msra.mxu0 0.0
    %2932 = vmatprep.subr.mxu0 0.0
    %2933 = vmatpush1.xpose.msra.mxu0 0.0
    %2934 = vmatprep.subr.mxu0 0.0
    %2935 = vmatpush1.xpose.msra.mxu0 0.0
    %2936 = vmatprep.subr.mxu0 0.0
    %2937 = vmatpush1.xpose.msra.mxu0 0.0
    %2938 = vmatprep.subr.mxu0 0.0
    %2939 = vmatpush1.xpose.msra.mxu0 0.0
    %2940 = vmatprep.subr.mxu0 0.0
    %2941 = vmatpush1.xpose.msra.mxu0 0.0
    %2942 = vmatprep.subr.mxu0 0.0
    %2943 = vmatpush1.xpose.msra.mxu0 0.0
    %2944 = vmatprep.subr.mxu0 0.0
    %2945 = vmatpush1.xpose.msra.mxu0 0.0
    %2946 = vmatprep.subr.mxu0 0.0
    %2947 = vmatpush1.xpose.msra.mxu0 0.0
    %2948 = vmatprep.subr.mxu0 0.0
    %2949 = vmatpush1.xpose.msra.mxu0 0.0
    %2950 = vmatprep.subr.mxu0 0.0
    %2951 = vmatpush1.xpose.msra.mxu0 0.0
    %2952 = vmatprep.subr.mxu0 0.0
    %2953 = vmatpush1.xpose.msra.mxu0 0.0
    %2954 = vmatprep.subr.mxu0 0.0
    %2955 = vmatpush1.xpose.msra.mxu0 0.0
    %2956 = vmatprep.subr.mxu0 0.0
    %2957 = vmatpush1.xpose.msra.mxu0 0.0
    %2958 = vmatprep.subr.mxu0 0.0
    %2959 = vmatpush1.xpose.msra.mxu0 0.0
    %2960 = vmatprep.subr.mxu0 0.0
    %2961 = vmatpush1.xpose.msra.mxu0 0.0
    %2962 = vmatprep.subr.mxu0 0.0
    %2963 = vmatpush1.xpose.msra.mxu0 0.0
    %2964 = vmatprep.subr.mxu0 0.0
    %2965 = vmatpush1.xpose.msra.mxu0 0.0
    %2966 = vmatprep.subr.mxu0 0.0
    %2967 = vmatpush1.xpose.msra.mxu0 0.0
    %2968 = vmatprep.subr.mxu0 0.0
    %2969 = vmatpush1.xpose.msra.mxu0 0.0
    %2970 = vmatprep.subr.mxu0 0.0
    %2971 = vmatpush1.xpose.msra.mxu0 0.0
    %2972 = vmatprep.subr.mxu0 0.0
    %2973 = vmatpush1.xpose.msra.mxu0 0.0
    %2974 = vmatprep.subr.mxu0 0.0
    %2975 = vmatpush1.xpose.msra.mxu0 0.0
    %2976 = vmatprep.subr.mxu0 0.0
    %2977 = vmatpush1.xpose.msra.mxu0 0.0
    %2978 = vmatprep.subr.mxu0 0.0
    %2979 = vmatpush1.xpose.msra.mxu0 0.0
    %2980 = vmatprep.subr.mxu0 0.0
    %2981 = vmatpush1.xpose.msra.mxu0 0.0
    %2982 = vmatprep.subr.mxu0 0.0
    %2983 = vmatpush1.xpose.msra.mxu0 0.0
    %2984 = vmatprep.subr.mxu0 0.0
    %2985 = vmatpush1.xpose.msra.mxu0 0.0
    %2986 = vmatprep.subr.mxu0 0.0
    %2987 = vmatpush1.xpose.msra.mxu0 0.0
    %2988 = vmatprep.mubr.f32.mxu0 0.0
    %2989 = vmatmul.mubr.f32.gmra.mrb[0].mxu0 %v2258
    %v2990 = vpop.f32.mrb[0].mxu0
    %v2991 = vadd.f32 0.0, %v2990
    %v2992 = vpop.f32.mrb[0].mxu0
    %2993 = vdwg.mxu0
    %v2994 = vmul.f32 %v2991, 0.24253562
    %v2995 = vld [vmem:[%s7 + $0x1] sm:$0x1]
    %s2996 = scalar_lea.vmem %s11, 16
    %v2997 = vld [vmem:[%s2996] sm:$0xff]
    %v2998 = vld [vmem:[%s2996 + $0x8] sm:$0x1]
    %s2999 = scalar_lea.vmem %s13, 16
    %v3000 = vld [vmem:[%s2999] sm:$0xff]
    %v3001 = vld [vmem:[%s2999 + $0x8] sm:$0x1]
    %v3002 = vlaneseq
    %v3003 = vshrl.u32 %v3002, 7
    %v3004 = vsub.s32 0, %v3003
    %v3005 = vrot.slane %v2995, %v3004
    %vm3006 = vcmp.le.f32.partialorder %v3005, %v2346
    %vm3007 = vcmp.le.f32.partialorder %v3005, %v2351
    %vm3008 = vcmp.le.f32.partialorder %v3005, %v2356
    %vm3009 = vcmp.le.f32.partialorder %v3005, %v2361
    %vm3010 = vcmp.le.f32.partialorder %v3005, %v2366
    %vm3011 = vcmp.le.f32.partialorder %v3005, %v2371
    %vm3012 = vcmp.le.f32.partialorder %v3005, %v2376
    %vm3013 = vcmp.le.f32.partialorder %v3005, %v2381
    %vm3014 = vcmp.le.f32.partialorder %v3005, %v2386
    %vm3015 = vcmp.le.f32.partialorder %v3005, %v2391
    %vm3016 = vcmp.le.f32.partialorder %v3005, %v2396
    %vm3017 = vcmp.le.f32.partialorder %v3005, %v2401
    %vm3018 = vcmp.le.f32.partialorder %v3005, %v2406
    %vm3019 = vcmp.le.f32.partialorder %v3005, %v2411
    %vm3020 = vcmp.le.f32.partialorder %v3005, %v2416
    %vm3021 = vcmp.le.f32.partialorder %v3005, %v2421
    %vm3022 = vcmp.ge.f32.partialorder %v3005, %v2442
    %vm3023 = vcmp.ge.f32.partialorder %v3005, %v2447
    %vm3024 = vcmp.ge.f32.partialorder %v3005, %v2452
    %vm3025 = vcmp.ge.f32.partialorder %v3005, %v2457
    %vm3026 = vcmp.ge.f32.partialorder %v3005, %v2462
    %vm3027 = vcmp.ge.f32.partialorder %v3005, %v2467
    %vm3028 = vcmp.ge.f32.partialorder %v3005, %v2472
    %vm3029 = vcmp.ge.f32.partialorder %v3005, %v2477
    %vm3030 = vcmp.ge.f32.partialorder %v3005, %v2482
    %vm3031 = vcmp.ge.f32.partialorder %v3005, %v2487
    %vm3032 = vcmp.ge.f32.partialorder %v3005, %v2492
    %vm3033 = vcmp.ge.f32.partialorder %v3005, %v2497
    %vm3034 = vcmp.ge.f32.partialorder %v3005, %v2502
    %vm3035 = vcmp.ge.f32.partialorder %v3005, %v2507
    %vm3036 = vcmp.ge.f32.partialorder %v3005, %v2512
    %vm3037 = vcmp.ge.f32.partialorder %v3005, %v2517
    %vm3038 = vmand %vm3006, %vm3022
    %vm3039 = vmand %vm3007, %vm3023
    %vm3040 = vmand %vm3008, %vm3024
    %vm3041 = vmand %vm3009, %vm3025
    %vm3042 = vmand %vm3010, %vm3026
    %vm3043 = vmand %vm3011, %vm3027
    %vm3044 = vmand %vm3012, %vm3028
    %vm3045 = vmand %vm3013, %vm3029
    %vm3046 = vmand %vm3014, %vm3030
    %vm3047 = vmand %vm3015, %vm3031
    %vm3048 = vmand %vm3016, %vm3032
    %vm3049 = vmand %vm3017, %vm3033
    %vm3050 = vmand %vm3018, %vm3034
    %vm3051 = vmand %vm3019, %vm3035
    %vm3052 = vmand %vm3020, %vm3036
    %vm3053 = vmand %vm3021, %vm3037
    %vm3054 = vcmp.ne.f32.partialorder %v3000, 0.0
    %vm3055 = vcmp.ne.f32.partialorder %v3001, 0.0
    %v3056 = vsel %vm3054, 1, 0
    %v3057 = vsel %vm3055, 1, 0
    %vm3058 = vcmp.eq.s32.totalorder %v3056, 1
    %vm3059 = vcmp.eq.s32.totalorder %v3057, 1
    %vm3060 = vmand %vm3038, %vm3058
    %vm3061 = vmand %vm3039, %vm3059
    %vm3062 = vmand %vm3040, %vm3058
    %vm3063 = vmand %vm3041, %vm3059
    %vm3064 = vmand %vm3042, %vm3058
    %vm3065 = vmand %vm3043, %vm3059
    %vm3066 = vmand %vm3044, %vm3058
    %vm3067 = vmand %vm3045, %vm3059
    %vm3068 = vmand %vm3046, %vm3058
    %vm3069 = vmand %vm3047, %vm3059
    %vm3070 = vmand %vm3048, %vm3058
    %vm3071 = vmand %vm3049, %vm3059
    %vm3072 = vmand %vm3050, %vm3058
    %vm3073 = vmand %vm3051, %vm3059
    %vm3074 = vmand %vm3052, %vm3058
    %vm3075 = vmand %vm3053, %vm3059
    %v3077 = vcombine.high %v2994, %v2994
    %v3079 = vunpack.c.l.s4 1966171168
    %v3080 = vunpack.c.0.s8 %v3079
    %v3081 = vlaneseq
    %v3082 = vshrl.u32 %v3081, 7
    %v3083 = vsub.s32 %v3080, %v3082
    %v3084 = vrot.slane %v2994, %v3083
    %v3086 = vunpack.c.l.s4 1966171168
    %v3087 = vunpack.c.0.s8 %v3086
    %v3088 = vlaneseq
    %v3089 = vshrl.u32 %v3088, 7
    %v3090 = vsub.s32 %v3087, %v3089
    %v3091 = vrot.slane %v3077, %v3090
    %v3092 = vcombine.high %v3084, %v3084
    %v3093 = vcombine.high %v3091, %v3091
    %v3095 = vunpack.c.l.s4 1966171168
    %v3096 = vunpack.c.0.s8 %v3095
    %v3097 = vlaneseq
    %v3098 = vshrl.u32 %v3097, 7
    %v3099 = vsub.s32 %v3096, %v3098
    %v3100 = vrot.slane %v3084, %v3099
    %v3102 = vunpack.c.l.s4 1966171168
    %v3103 = vunpack.c.0.s8 %v3102
    %v3104 = vlaneseq
    %v3105 = vshrl.u32 %v3104, 7
    %v3106 = vsub.s32 %v3103, %v3105
    %v3107 = vrot.slane %v3091, %v3106
    %v3109 = vunpack.c.l.s4 1966171168
    %v3110 = vunpack.c.0.s8 %v3109
    %v3111 = vlaneseq
    %v3112 = vshrl.u32 %v3111, 7
    %v3113 = vsub.s32 %v3110, %v3112
    %v3114 = vrot.slane %v3092, %v3113
    %v3116 = vunpack.c.l.s4 1966171168
    %v3117 = vunpack.c.0.s8 %v3116
    %v3118 = vlaneseq
    %v3119 = vshrl.u32 %v3118, 7
    %v3120 = vsub.s32 %v3117, %v3119
    %v3121 = vrot.slane %v3093, %v3120
    %v3122 = vcombine.high %v3100, %v3100
    %v3123 = vcombine.high %v3107, %v3107
    %v3124 = vcombine.high %v3114, %v3114
    %v3125 = vcombine.high %v3121, %v3121
    %v3126 = vlaneseq
    %v3127 = vshrl.u32 %v3126, 7
    %v3128 = vsub.s32 0, %v3127
    %v3129 = vrot.slane %v3100, %v3128
    %v3130 = vlaneseq
    %v3131 = vshrl.u32 %v3130, 7
    %v3132 = vsub.s32 0, %v3131
    %v3133 = vrot.slane %v3114, %v3132
    %v3134 = vlaneseq
    %v3135 = vshrl.u32 %v3134, 7
    %v3136 = vsub.s32 0, %v3135
    %v3137 = vrot.slane %v3122, %v3136
    %v3138 = vlaneseq
    %v3139 = vshrl.u32 %v3138, 7
    %v3140 = vsub.s32 0, %v3139
    %v3141 = vrot.slane %v3124, %v3140
    %v3142 = vlaneseq
    %v3143 = vshrl.u32 %v3142, 7
    %v3144 = vsub.s32 0, %v3143
    %v3145 = vrot.slane %v3107, %v3144
    %v3146 = vlaneseq
    %v3147 = vshrl.u32 %v3146, 7
    %v3148 = vsub.s32 0, %v3147
    %v3149 = vrot.slane %v3121, %v3148
    %v3150 = vlaneseq
    %v3151 = vshrl.u32 %v3150, 7
    %v3152 = vsub.s32 0, %v3151
    %v3153 = vrot.slane %v3123, %v3152
    %v3154 = vlaneseq
    %v3155 = vshrl.u32 %v3154, 7
    %v3156 = vsub.s32 0, %v3155
    %v3157 = vrot.slane %v3125, %v3156
    %v3166 = vsel %vm3060, %v3129, -1e+09
    %v3167 = vsel %vm3061, %v3129, -1e+09
    %v3168 = vsel %vm3062, %v3133, -1e+09
    %v3169 = vsel %vm3063, %v3133, -1e+09
    %v3170 = vsel %vm3064, %v3137, -1e+09
    %v3171 = vsel %vm3065, %v3137, -1e+09
    %v3172 = vsel %vm3066, %v3141, -1e+09
    %v3173 = vsel %vm3067, %v3141, -1e+09
    %v3174 = vsel %vm3068, %v3145, -1e+09
    %v3175 = vsel %vm3069, %v3145, -1e+09
    %v3176 = vsel %vm3070, %v3149, -1e+09
    %v3177 = vsel %vm3071, %v3149, -1e+09
    %v3178 = vsel %vm3072, %v3153, -1e+09
    %v3179 = vsel %vm3073, %v3153, -1e+09
    %v3180 = vsel %vm3074, %v3157, -1e+09
    %v3181 = vsel %vm3075, %v3157, -1e+09
    %v3182 = vsel %vm2679, %v3166, -inf
    %3183 = vmax.xlane.f32.xlu0 %v3182
    %v3184 = vpop.xlane.xlu0 %3183
    %v3185 = vsel %vm2683, %v3167, -inf
    %3186 = vmax.xlane.f32.xlu0 %v3185
    %v3187 = vpop.xlane.xlu0 %3186
    %v3188 = vsel %vm2679, %v3168, -inf
    %3189 = vmax.xlane.f32.xlu0 %v3188
    %v3190 = vpop.xlane.xlu0 %3189
    %v3191 = vsel %vm2683, %v3169, -inf
    %3192 = vmax.xlane.f32.xlu0 %v3191
    %v3193 = vpop.xlane.xlu0 %3192
    %v3194 = vsel %vm2679, %v3170, -inf
    %3195 = vmax.xlane.f32.xlu0 %v3194
    %v3196 = vpop.xlane.xlu0 %3195
    %v3197 = vsel %vm2683, %v3171, -inf
    %3198 = vmax.xlane.f32.xlu0 %v3197
    %v3199 = vpop.xlane.xlu0 %3198
    %v3200 = vsel %vm2679, %v3172, -inf
    %3201 = vmax.xlane.f32.xlu0 %v3200
    %v3202 = vpop.xlane.xlu0 %3201
    %v3203 = vsel %vm2683, %v3173, -inf
    %3204 = vmax.xlane.f32.xlu0 %v3203
    %v3205 = vpop.xlane.xlu0 %3204
    %v3206 = vsel %vm2679, %v3174, -inf
    %3207 = vmax.xlane.f32.xlu0 %v3206
    %v3208 = vpop.xlane.xlu0 %3207
    %v3209 = vsel %vm2683, %v3175, -inf
    %3210 = vmax.xlane.f32.xlu0 %v3209
    %v3211 = vpop.xlane.xlu0 %3210
    %v3212 = vsel %vm2679, %v3176, -inf
    %3213 = vmax.xlane.f32.xlu0 %v3212
    %v3214 = vpop.xlane.xlu0 %3213
    %v3215 = vsel %vm2683, %v3177, -inf
    %3216 = vmax.xlane.f32.xlu0 %v3215
    %v3217 = vpop.xlane.xlu0 %3216
    %v3218 = vsel %vm2679, %v3178, -inf
    %3219 = vmax.xlane.f32.xlu0 %v3218
    %v3220 = vpop.xlane.xlu0 %3219
    %v3221 = vsel %vm2683, %v3179, -inf
    %3222 = vmax.xlane.f32.xlu0 %v3221
    %v3223 = vpop.xlane.xlu0 %3222
    %v3224 = vsel %vm2679, %v3180, -inf
    %3225 = vmax.xlane.f32.xlu0 %v3224
    %v3226 = vpop.xlane.xlu0 %3225
    %v3227 = vsel %vm2683, %v3181, -inf
    %3228 = vmax.xlane.f32.xlu0 %v3227
    %v3229 = vpop.xlane.xlu0 %3228
    %v3230 = vsub.f32 %v3166, %v3184
    %v3231 = vsub.f32 %v3167, %v3187
    %v3232 = vsub.f32 %v3168, %v3190
    %v3233 = vsub.f32 %v3169, %v3193
    %v3234 = vsub.f32 %v3170, %v3196
    %v3235 = vsub.f32 %v3171, %v3199
    %v3236 = vsub.f32 %v3172, %v3202
    %v3237 = vsub.f32 %v3173, %v3205
    %v3238 = vsub.f32 %v3174, %v3208
    %v3239 = vsub.f32 %v3175, %v3211
    %v3240 = vsub.f32 %v3176, %v3214
    %v3241 = vsub.f32 %v3177, %v3217
    %v3242 = vsub.f32 %v3178, %v3220
    %v3243 = vsub.f32 %v3179, %v3223
    %v3244 = vsub.f32 %v3180, %v3226
    %v3245 = vsub.f32 %v3181, %v3229
    %v3246 = vmul.f32 %v3230, 1.442695
    %v3247 = vpow.pop %v3246
    %v3248 = vmul.f32 %v3231, 1.442695
    %v3249 = vpow.pop %v3248
    %v3250 = vmul.f32 %v3232, 1.442695
    %v3251 = vpow.pop %v3250
    %v3252 = vmul.f32 %v3233, 1.442695
    %v3253 = vpow.pop %v3252
    %v3254 = vmul.f32 %v3234, 1.442695
    %v3255 = vpow.pop %v3254
    %v3256 = vmul.f32 %v3235, 1.442695
    %v3257 = vpow.pop %v3256
    %v3258 = vmul.f32 %v3236, 1.442695
    %v3259 = vpow.pop %v3258
    %v3260 = vmul.f32 %v3237, 1.442695
    %v3261 = vpow.pop %v3260
    %v3262 = vmul.f32 %v3238, 1.442695
    %v3263 = vpow.pop %v3262
    %v3264 = vmul.f32 %v3239, 1.442695
    %v3265 = vpow.pop %v3264
    %v3266 = vmul.f32 %v3240, 1.442695
    %v3267 = vpow.pop %v3266
    %v3268 = vmul.f32 %v3241, 1.442695
    %v3269 = vpow.pop %v3268
    %v3270 = vmul.f32 %v3242, 1.442695
    %v3271 = vpow.pop %v3270
    %v3272 = vmul.f32 %v3243, 1.442695
    %v3273 = vpow.pop %v3272
    %v3274 = vmul.f32 %v3244, 1.442695
    %v3275 = vpow.pop %v3274
    %v3276 = vmul.f32 %v3245, 1.442695
    %v3277 = vpow.pop %v3276
    %v3278 = vsel %vm2679, %v3247, 0.0
    %3279 = vadd.xlane.f32.xlu0 %v3278
    %v3280 = vpop.xlane.xlu0 %3279
    %v3281 = vsel %vm2683, %v3249, 0.0
    %3282 = vadd.xlane.f32.xlu0 %v3281
    %v3283 = vpop.xlane.xlu0 %3282
    %v3284 = vsel %vm2679, %v3251, 0.0
    %3285 = vadd.xlane.f32.xlu0 %v3284
    %v3286 = vpop.xlane.xlu0 %3285
    %v3287 = vsel %vm2683, %v3253, 0.0
    %3288 = vadd.xlane.f32.xlu0 %v3287
    %v3289 = vpop.xlane.xlu0 %3288
    %v3290 = vsel %vm2679, %v3255, 0.0
    %3291 = vadd.xlane.f32.xlu0 %v3290
    %v3292 = vpop.xlane.xlu0 %3291
    %v3293 = vsel %vm2683, %v3257, 0.0
    %3294 = vadd.xlane.f32.xlu0 %v3293
    %v3295 = vpop.xlane.xlu0 %3294
    %v3296 = vsel %vm2679, %v3259, 0.0
    %3297 = vadd.xlane.f32.xlu0 %v3296
    %v3298 = vpop.xlane.xlu0 %3297
    %v3299 = vsel %vm2683, %v3261, 0.0
    %3300 = vadd.xlane.f32.xlu0 %v3299
    %v3301 = vpop.xlane.xlu0 %3300
    %v3302 = vsel %vm2679, %v3263, 0.0
    %3303 = vadd.xlane.f32.xlu0 %v3302
    %v3304 = vpop.xlane.xlu0 %3303
    %v3305 = vsel %vm2683, %v3265, 0.0
    %3306 = vadd.xlane.f32.xlu0 %v3305
    %v3307 = vpop.xlane.xlu0 %3306
    %v3308 = vsel %vm2679, %v3267, 0.0
    %3309 = vadd.xlane.f32.xlu0 %v3308
    %v3310 = vpop.xlane.xlu0 %3309
    %v3311 = vsel %vm2683, %v3269, 0.0
    %3312 = vadd.xlane.f32.xlu0 %v3311
    %v3313 = vpop.xlane.xlu0 %3312
    %v3314 = vsel %vm2679, %v3271, 0.0
    %3315 = vadd.xlane.f32.xlu0 %v3314
    %v3316 = vpop.xlane.xlu0 %3315
    %v3317 = vsel %vm2683, %v3273, 0.0
    %3318 = vadd.xlane.f32.xlu0 %v3317
    %v3319 = vpop.xlane.xlu0 %3318
    %v3320 = vsel %vm2679, %v3275, 0.0
    %3321 = vadd.xlane.f32.xlu0 %v3320
    %v3322 = vpop.xlane.xlu0 %3321
    %v3323 = vsel %vm2683, %v3277, 0.0
    %3324 = vadd.xlane.f32.xlu0 %v3323
    %v3325 = vpop.xlane.xlu0 %3324
    %v3326 = vrcp.pop %v3280
    %v3327 = vrcp.pop %v3283
    %v3328 = vrcp.pop %v3286
    %v3329 = vrcp.pop %v3289
    %v3330 = vrcp.pop %v3292
    %v3331 = vrcp.pop %v3295
    %v3332 = vrcp.pop %v3298
    %v3333 = vrcp.pop %v3301
    %v3334 = vrcp.pop %v3304
    %v3335 = vrcp.pop %v3307
    %v3336 = vrcp.pop %v3310
    %v3337 = vrcp.pop %v3313
    %v3338 = vrcp.pop %v3316
    %v3339 = vrcp.pop %v3319
    %v3340 = vrcp.pop %v3322
    %v3341 = vrcp.pop %v3325
    %v3342 = vmul.f32 %v3247, %v3326
    %v3343 = vmul.f32 %v3249, %v3327
    %v3344 = vmul.f32 %v3251, %v3328
    %v3345 = vmul.f32 %v3253, %v3329
    %v3346 = vmul.f32 %v3255, %v3330
    %v3347 = vmul.f32 %v3257, %v3331
    %v3348 = vmul.f32 %v3259, %v3332
    %v3349 = vmul.f32 %v3261, %v3333
    %v3350 = vmul.f32 %v3263, %v3334
    %v3351 = vmul.f32 %v3265, %v3335
    %v3352 = vmul.f32 %v3267, %v3336
    %v3353 = vmul.f32 %v3269, %v3337
    %v3354 = vmul.f32 %v3271, %v3338
    %v3355 = vmul.f32 %v3273, %v3339
    %v3356 = vmul.f32 %v3275, %v3340
    %v3357 = vmul.f32 %v3277, %v3341
    %v3358 = vmul.f32 %v3342, %v2997
    %v3359 = vmul.f32 %v3343, %v2998
    %v3360 = vmul.f32 %v3344, %v2997
    %v3361 = vmul.f32 %v3345, %v2998
    %v3362 = vmul.f32 %v3346, %v2997
    %v3363 = vmul.f32 %v3347, %v2998
    %v3364 = vmul.f32 %v3348, %v2997
    %v3365 = vmul.f32 %v3349, %v2998
    %v3366 = vmul.f32 %v3350, %v2997
    %v3367 = vmul.f32 %v3351, %v2998
    %v3368 = vmul.f32 %v3352, %v2997
    %v3369 = vmul.f32 %v3353, %v2998
    %v3370 = vmul.f32 %v3354, %v2997
    %v3371 = vmul.f32 %v3355, %v2998
    %v3372 = vmul.f32 %v3356, %v2997
    %v3373 = vmul.f32 %v3357, %v2998
    %v3374 = vsel %vm2679, %v3358, 0.0
    %3375 = vadd.xlane.f32.xlu0 %v3374
    %v3376 = vpop.xlane.xlu0 %3375
    %v3377 = vsel %vm2683, %v3359, 0.0
    %3378 = vadd.xlane.f32.xlu0 %v3377
    %v3379 = vpop.xlane.xlu0 %3378
    %v3380 = vsel %vm2679, %v3360, 0.0
    %3381 = vadd.xlane.f32.xlu0 %v3380
    %v3382 = vpop.xlane.xlu0 %3381
    %v3383 = vsel %vm2683, %v3361, 0.0
    %3384 = vadd.xlane.f32.xlu0 %v3383
    %v3385 = vpop.xlane.xlu0 %3384
    %v3386 = vsel %vm2679, %v3362, 0.0
    %3387 = vadd.xlane.f32.xlu0 %v3386
    %v3388 = vpop.xlane.xlu0 %3387
    %v3389 = vsel %vm2683, %v3363, 0.0
    %3390 = vadd.xlane.f32.xlu0 %v3389
    %v3391 = vpop.xlane.xlu0 %3390
    %v3392 = vsel %vm2679, %v3364, 0.0
    %3393 = vadd.xlane.f32.xlu0 %v3392
    %v3394 = vpop.xlane.xlu0 %3393
    %v3395 = vsel %vm2683, %v3365, 0.0
    %3396 = vadd.xlane.f32.xlu0 %v3395
    %v3397 = vpop.xlane.xlu0 %3396
    %v3398 = vsel %vm2679, %v3366, 0.0
    %3399 = vadd.xlane.f32.xlu0 %v3398
    %v3400 = vpop.xlane.xlu0 %3399
    %v3401 = vsel %vm2683, %v3367, 0.0
    %3402 = vadd.xlane.f32.xlu0 %v3401
    %v3403 = vpop.xlane.xlu0 %3402
    %v3404 = vsel %vm2679, %v3368, 0.0
    %3405 = vadd.xlane.f32.xlu0 %v3404
    %v3406 = vpop.xlane.xlu0 %3405
    %v3407 = vsel %vm2683, %v3369, 0.0
    %3408 = vadd.xlane.f32.xlu0 %v3407
    %v3409 = vpop.xlane.xlu0 %3408
    %v3410 = vsel %vm2679, %v3370, 0.0
    %3411 = vadd.xlane.f32.xlu0 %v3410
    %v3412 = vpop.xlane.xlu0 %3411
    %v3413 = vsel %vm2683, %v3371, 0.0
    %3414 = vadd.xlane.f32.xlu0 %v3413
    %v3415 = vpop.xlane.xlu0 %3414
    %v3416 = vsel %vm2679, %v3372, 0.0
    %3417 = vadd.xlane.f32.xlu0 %v3416
    %v3418 = vpop.xlane.xlu0 %3417
    %v3419 = vsel %vm2683, %v3373, 0.0
    %3420 = vadd.xlane.f32.xlu0 %v3419
    %v3421 = vpop.xlane.xlu0 %3420
    %v3438 = vlaneseq
    %v3439 = vand.u32 %v3438, 127
    %v3440 = vlaneseq
    %v3441 = vshrl.u32 %v3440, 7
    %v3442 = vsub.s32 %v3439, %v3441
    %v3443 = vrot.slane %v2875, %v3442
    %v3444 = vadd.s32 %v3439, 4294967288
    %v3445 = vlaneseq
    %v3446 = vshrl.u32 %v3445, 7
    %v3447 = vsub.s32 %v3444, %v3446
    %v3448 = vrot.slane %v2878, %v3447
    %vm3449 = vcmask 130112
    %v3450 = vsel %vm3449, %v3448, %v3443
    %v3451 = vlaneseq
    %v3452 = vshrl.u32 %v3451, 7
    %v3453 = vsub.s32 %v3439, %v3452
    %v3454 = vrot.slane %v2881, %v3453
    %v3455 = vlaneseq
    %v3456 = vshrl.u32 %v3455, 7
    %v3457 = vsub.s32 %v3444, %v3456
    %v3458 = vrot.slane %v2884, %v3457
    %v3459 = vsel %vm3449, %v3458, %v3454
    %v3460 = vlaneseq
    %v3461 = vshrl.u32 %v3460, 7
    %v3462 = vsub.s32 %v3439, %v3461
    %v3463 = vrot.slane %v2887, %v3462
    %v3464 = vlaneseq
    %v3465 = vshrl.u32 %v3464, 7
    %v3466 = vsub.s32 %v3444, %v3465
    %v3467 = vrot.slane %v2890, %v3466
    %v3468 = vsel %vm3449, %v3467, %v3463
    %v3469 = vlaneseq
    %v3470 = vshrl.u32 %v3469, 7
    %v3471 = vsub.s32 %v3439, %v3470
    %v3472 = vrot.slane %v2893, %v3471
    %v3473 = vlaneseq
    %v3474 = vshrl.u32 %v3473, 7
    %v3475 = vsub.s32 %v3444, %v3474
    %v3476 = vrot.slane %v2896, %v3475
    %v3477 = vsel %vm3449, %v3476, %v3472
    %v3478 = vlaneseq
    %v3479 = vshrl.u32 %v3478, 7
    %v3480 = vsub.s32 %v3439, %v3479
    %v3481 = vrot.slane %v2899, %v3480
    %v3482 = vlaneseq
    %v3483 = vshrl.u32 %v3482, 7
    %v3484 = vsub.s32 %v3444, %v3483
    %v3485 = vrot.slane %v2902, %v3484
    %v3486 = vsel %vm3449, %v3485, %v3481
    %v3487 = vlaneseq
    %v3488 = vshrl.u32 %v3487, 7
    %v3489 = vsub.s32 %v3439, %v3488
    %v3490 = vrot.slane %v2905, %v3489
    %v3491 = vlaneseq
    %v3492 = vshrl.u32 %v3491, 7
    %v3493 = vsub.s32 %v3444, %v3492
    %v3494 = vrot.slane %v2908, %v3493
    %v3495 = vsel %vm3449, %v3494, %v3490
    %v3496 = vlaneseq
    %v3497 = vshrl.u32 %v3496, 7
    %v3498 = vsub.s32 %v3439, %v3497
    %v3499 = vrot.slane %v2911, %v3498
    %v3500 = vlaneseq
    %v3501 = vshrl.u32 %v3500, 7
    %v3502 = vsub.s32 %v3444, %v3501
    %v3503 = vrot.slane %v2914, %v3502
    %v3504 = vsel %vm3449, %v3503, %v3499
    %v3505 = vlaneseq
    %v3506 = vshrl.u32 %v3505, 7
    %v3507 = vsub.s32 %v3439, %v3506
    %v3508 = vrot.slane %v2917, %v3507
    %v3509 = vlaneseq
    %v3510 = vshrl.u32 %v3509, 7
    %v3511 = vsub.s32 %v3444, %v3510
    %v3512 = vrot.slane %v2920, %v3511
    %v3513 = vsel %vm3449, %v3512, %v3508
    %v3514 = vsel %vm1019, %v3459, %v3450
    %v3515 = vsel %vm1021, %v3468, %v3514
    %v3516 = vsel %vm1023, %v3477, %v3515
    %v3517 = vsel %vm1025, %v3486, %v3516
    %v3518 = vsel %vm1027, %v3495, %v3517
    %v3519 = vsel %vm1029, %v3504, %v3518
    %v3520 = vsel %vm1031, %v3513, %v3519
    %v3537 = vlaneseq
    %v3538 = vshrl.u32 %v3537, 7
    %v3539 = vsub.s32 %v3439, %v3538
    %v3540 = vrot.slane %v3376, %v3539
    %v3541 = vlaneseq
    %v3542 = vshrl.u32 %v3541, 7
    %v3543 = vsub.s32 %v3444, %v3542
    %v3544 = vrot.slane %v3379, %v3543
    %v3545 = vsel %vm3449, %v3544, %v3540
    %v3546 = vlaneseq
    %v3547 = vshrl.u32 %v3546, 7
    %v3548 = vsub.s32 %v3439, %v3547
    %v3549 = vrot.slane %v3382, %v3548
    %v3550 = vlaneseq
    %v3551 = vshrl.u32 %v3550, 7
    %v3552 = vsub.s32 %v3444, %v3551
    %v3553 = vrot.slane %v3385, %v3552
    %v3554 = vsel %vm3449, %v3553, %v3549
    %v3555 = vlaneseq
    %v3556 = vshrl.u32 %v3555, 7
    %v3557 = vsub.s32 %v3439, %v3556
    %v3558 = vrot.slane %v3388, %v3557
    %v3559 = vlaneseq
    %v3560 = vshrl.u32 %v3559, 7
    %v3561 = vsub.s32 %v3444, %v3560
    %v3562 = vrot.slane %v3391, %v3561
    %v3563 = vsel %vm3449, %v3562, %v3558
    %v3564 = vlaneseq
    %v3565 = vshrl.u32 %v3564, 7
    %v3566 = vsub.s32 %v3439, %v3565
    %v3567 = vrot.slane %v3394, %v3566
    %v3568 = vlaneseq
    %v3569 = vshrl.u32 %v3568, 7
    %v3570 = vsub.s32 %v3444, %v3569
    %v3571 = vrot.slane %v3397, %v3570
    %v3572 = vsel %vm3449, %v3571, %v3567
    %v3573 = vlaneseq
    %v3574 = vshrl.u32 %v3573, 7
    %v3575 = vsub.s32 %v3439, %v3574
    %v3576 = vrot.slane %v3400, %v3575
    %v3577 = vlaneseq
    %v3578 = vshrl.u32 %v3577, 7
    %v3579 = vsub.s32 %v3444, %v3578
    %v3580 = vrot.slane %v3403, %v3579
    %v3581 = vsel %vm3449, %v3580, %v3576
    %v3582 = vlaneseq
    %v3583 = vshrl.u32 %v3582, 7
    %v3584 = vsub.s32 %v3439, %v3583
    %v3585 = vrot.slane %v3406, %v3584
    %v3586 = vlaneseq
    %v3587 = vshrl.u32 %v3586, 7
    %v3588 = vsub.s32 %v3444, %v3587
    %v3589 = vrot.slane %v3409, %v3588
    %v3590 = vsel %vm3449, %v3589, %v3585
    %v3591 = vlaneseq
    %v3592 = vshrl.u32 %v3591, 7
    %v3593 = vsub.s32 %v3439, %v3592
    %v3594 = vrot.slane %v3412, %v3593
    %v3595 = vlaneseq
    %v3596 = vshrl.u32 %v3595, 7
    %v3597 = vsub.s32 %v3444, %v3596
    %v3598 = vrot.slane %v3415, %v3597
    %v3599 = vsel %vm3449, %v3598, %v3594
    %v3600 = vlaneseq
    %v3601 = vshrl.u32 %v3600, 7
    %v3602 = vsub.s32 %v3439, %v3601
    %v3603 = vrot.slane %v3418, %v3602
    %v3604 = vlaneseq
    %v3605 = vshrl.u32 %v3604, 7
    %v3606 = vsub.s32 %v3444, %v3605
    %v3607 = vrot.slane %v3421, %v3606
    %v3608 = vsel %vm3449, %v3607, %v3603
    %v3609 = vsel %vm1019, %v3554, %v3545
    %v3610 = vsel %vm1021, %v3563, %v3609
    %v3611 = vsel %vm1023, %v3572, %v3610
    %v3612 = vsel %vm1025, %v3581, %v3611
    %v3613 = vsel %vm1027, %v3590, %v3612
    %v3614 = vsel %vm1029, %v3599, %v3613
    %v3615 = vsel %vm1031, %v3608, %v3614
    %v3616 = vld [vmem:[%s41] sm:$0xff]
    %v3617 = vld [vmem:[%s41 + $0x8] sm:$0x1]
    %vm3618 = vcmask 72704
    %v3619 = vsel %vm3618, %v3520, 0
    %v3621 = vsel %vm3618, %v3615, 0
    %vm3623 = vcmask 1040384
    %v3625 = vsel %vm3623, %v3617, 0
    %3627 = vmatprep.subr.mxu0 0.0
    %3628 = vmatpush1.msra.mxu0 %v3616
    %3629 = vmatprep.subr.mxu0 0.0
    %3630 = vmatpush1.msra.mxu0 %v3625
    %3631 = vmatprep.subr.mxu0 0.0
    %3632 = vmatpush1.msra.mxu0 0.0
    %3633 = vmatprep.subr.mxu0 0.0
    %3634 = vmatpush1.msra.mxu0 0.0
    %3635 = vmatprep.subr.mxu0 0.0
    %3636 = vmatpush1.msra.mxu0 0.0
    %3637 = vmatprep.subr.mxu0 0.0
    %3638 = vmatpush1.msra.mxu0 0.0
    %3639 = vmatprep.subr.mxu0 0.0
    %3640 = vmatpush1.msra.mxu0 0.0
    %3641 = vmatprep.subr.mxu0 0.0
    %3642 = vmatpush1.msra.mxu0 0.0
    %3643 = vmatprep.subr.mxu0 0.0
    %3644 = vmatpush1.msra.mxu0 0.0
    %3645 = vmatprep.subr.mxu0 0.0
    %3646 = vmatpush1.msra.mxu0 0.0
    %3647 = vmatprep.subr.mxu0 0.0
    %3648 = vmatpush1.msra.mxu0 0.0
    %3649 = vmatprep.subr.mxu0 0.0
    %3650 = vmatpush1.msra.mxu0 0.0
    %3651 = vmatprep.subr.mxu0 0.0
    %3652 = vmatpush1.msra.mxu0 0.0
    %3653 = vmatprep.subr.mxu0 0.0
    %3654 = vmatpush1.msra.mxu0 0.0
    %3655 = vmatprep.subr.mxu0 0.0
    %3656 = vmatpush1.msra.mxu0 0.0
    %3657 = vmatprep.subr.mxu0 0.0
    %3658 = vmatpush1.msra.mxu0 0.0
    %3659 = vmatprep.subr.mxu0 0.0
    %3660 = vmatpush1.msra.mxu0 0.0
    %3661 = vmatprep.subr.mxu0 0.0
    %3662 = vmatpush1.msra.mxu0 0.0
    %3663 = vmatprep.subr.mxu0 0.0
    %3664 = vmatpush1.msra.mxu0 0.0
    %3665 = vmatprep.subr.mxu0 0.0
    %3666 = vmatpush1.msra.mxu0 0.0
    %3667 = vmatprep.subr.mxu0 0.0
    %3668 = vmatpush1.msra.mxu0 0.0
    %3669 = vmatprep.subr.mxu0 0.0
    %3670 = vmatpush1.msra.mxu0 0.0
    %3671 = vmatprep.subr.mxu0 0.0
    %3672 = vmatpush1.msra.mxu0 0.0
    %3673 = vmatprep.subr.mxu0 0.0
    %3674 = vmatpush1.msra.mxu0 0.0
    %3675 = vmatprep.subr.mxu0 0.0
    %3676 = vmatpush1.msra.mxu0 0.0
    %3677 = vmatprep.subr.mxu0 0.0
    %3678 = vmatpush1.msra.mxu0 0.0
    %3679 = vmatprep.subr.mxu0 0.0
    %3680 = vmatpush1.msra.mxu0 0.0
    %3681 = vmatprep.subr.mxu0 0.0
    %3682 = vmatpush1.msra.mxu0 0.0
    %3683 = vmatprep.subr.mxu0 0.0
    %3684 = vmatpush1.msra.mxu0 0.0
    %3685 = vmatprep.subr.mxu0 0.0
    %3686 = vmatpush1.msra.mxu0 0.0
    %3687 = vmatprep.subr.mxu0 0.0
    %3688 = vmatpush1.msra.mxu0 0.0
    %3689 = vmatprep.subr.mxu0 0.0
    %3690 = vmatpush1.msra.mxu0 0.0
    %3691 = vmatprep.mubr.f32.mxu0 0.0
    %3692 = vmatmul.mubr.f32.gmra.mrb[0].mxu0 %v3619
    %v3693 = vpop.f32.mrb[0].mxu0
    %v3694 = vadd.f32 0.0, %v3693
    %v3695 = vpop.f32.mrb[0].mxu0
    %3696 = vmatprep.mubr.f32.mxu0 0.0
    %3697 = vmatmul.mubr.f32.gmra.mrb[0].mxu0 %v3621
    %v3698 = vpop.f32.mrb[0].mxu0
    %v3699 = vadd.f32 0.0, %v3698
    %v3700 = vpop.f32.mrb[0].mxu0
    %3701 = vdwg.mxu0
    %v3702 = vld [vmem:[%s47] sm:$0xff]
    %v3703 = vld [vmem:[%s47 + $0x8] sm:$0xff]
    %v3704 = vld [vmem:[%s49] sm:$0xff]
    %v3705 = vld [vmem:[%s49 + $0x8] sm:$0xff]
    %v3707 = vsel %vm640, %v3702, 0
    %v3710 = vsel %vm640, %v3703, 0
    %3712 = vmatprep.subr.mxu0 0.0
    %3713 = vmatpush1.msra.mxu0 %v3694
    %3714 = vmatprep.subr.mxu0 0.0
    %3715 = vmatpush1.msra.mxu0 %v3699
    %3716 = vmatprep.subr.mxu0 0.0
    %3717 = vmatpush1.msra.mxu0 0.0
    %3718 = vmatprep.subr.mxu0 0.0
    %3719 = vmatpush1.msra.mxu0 0.0
    %3720 = vmatprep.subr.mxu0 0.0
    %3721 = vmatpush1.msra.mxu0 0.0
    %3722 = vmatprep.subr.mxu0 0.0
    %3723 = vmatpush1.msra.mxu0 0.0
    %3724 = vmatprep.subr.mxu0 0.0
    %3725 = vmatpush1.msra.mxu0 0.0
    %3726 = vmatprep.subr.mxu0 0.0
    %3727 = vmatpush1.msra.mxu0 0.0
    %3728 = vmatprep.subr.mxu0 0.0
    %3729 = vmatpush1.msra.mxu0 0.0
    %3730 = vmatprep.subr.mxu0 0.0
    %3731 = vmatpush1.msra.mxu0 0.0
    %3732 = vmatprep.subr.mxu0 0.0
    %3733 = vmatpush1.msra.mxu0 0.0
    %3734 = vmatprep.subr.mxu0 0.0
    %3735 = vmatpush1.msra.mxu0 0.0
    %3736 = vmatprep.subr.mxu0 0.0
    %3737 = vmatpush1.msra.mxu0 0.0
    %3738 = vmatprep.subr.mxu0 0.0
    %3739 = vmatpush1.msra.mxu0 0.0
    %3740 = vmatprep.subr.mxu0 0.0
    %3741 = vmatpush1.msra.mxu0 0.0
    %3742 = vmatprep.subr.mxu0 0.0
    %3743 = vmatpush1.msra.mxu0 0.0
    %3744 = vmatprep.subr.mxu0 0.0
    %3745 = vmatpush1.msra.mxu0 0.0
    %3746 = vmatprep.subr.mxu0 0.0
    %3747 = vmatpush1.msra.mxu0 0.0
    %3748 = vmatprep.subr.mxu0 0.0
    %3749 = vmatpush1.msra.mxu0 0.0
    %3750 = vmatprep.subr.mxu0 0.0
    %3751 = vmatpush1.msra.mxu0 0.0
    %3752 = vmatprep.subr.mxu0 0.0
    %3753 = vmatpush1.msra.mxu0 0.0
    %3754 = vmatprep.subr.mxu0 0.0
    %3755 = vmatpush1.msra.mxu0 0.0
    %3756 = vmatprep.subr.mxu0 0.0
    %3757 = vmatpush1.msra.mxu0 0.0
    %3758 = vmatprep.subr.mxu0 0.0
    %3759 = vmatpush1.msra.mxu0 0.0
    %3760 = vmatprep.subr.mxu0 0.0
    %3761 = vmatpush1.msra.mxu0 0.0
    %3762 = vmatprep.subr.mxu0 0.0
    %3763 = vmatpush1.msra.mxu0 0.0
    %3764 = vmatprep.subr.mxu0 0.0
    %3765 = vmatpush1.msra.mxu0 0.0
    %3766 = vmatprep.subr.mxu0 0.0
    %3767 = vmatpush1.msra.mxu0 0.0
    %3768 = vmatprep.subr.mxu0 0.0
    %3769 = vmatpush1.msra.mxu0 0.0
    %3770 = vmatprep.subr.mxu0 0.0
    %3771 = vmatpush1.msra.mxu0 0.0
    %3772 = vmatprep.subr.mxu0 0.0
    %3773 = vmatpush1.msra.mxu0 0.0
    %3774 = vmatprep.subr.mxu0 0.0
    %3775 = vmatpush1.msra.mxu0 0.0
    %3776 = vmatprep.mubr.f32.mxu0 0.0
    %3777 = vmatmul.mubr.f32.gmra.mrb[0].mxu0 %v3707
    %v3778 = vpop.f32.mrb[0].mxu0
    %v3779 = vadd.f32 %v3704, %v3778
    %v3780 = vpop.f32.mrb[0].mxu0
    %3781 = vmatprep.mubr.f32.mxu0 0.0
    %3782 = vmatmul.mubr.f32.gmra.mrb[0].mxu0 %v3710
    %v3783 = vpop.f32.mrb[0].mxu0
    %v3784 = vadd.f32 %v3705, %v3783
    %v3785 = vpop.f32.mrb[0].mxu0
    %3786 = vdwg.mxu0
    %v3787 = vld [vmem:[%s51] sm:$0xff]
    %v3788 = vld [vmem:[%s51 + $0x8] sm:$0xff]
    %v3789 = vld [vmem:[%s51 + $0x10] sm:$0xff]
    %v3790 = vld [vmem:[%s51 + $0x18] sm:$0xff]
    %v3791 = vld [vmem:[%s51 + $0x20] sm:$0xff]
    %v3792 = vld [vmem:[%s51 + $0x28] sm:$0xff]
    %v3793 = vld [vmem:[%s53] sm:$0x7]
    %v3795 = vlaneseq
    %v3796 = vshrl.u32 %v3795, 7
    %v3797 = vsub.s32 0, %v3796
    %v3798 = vrot.slane %v3793, %v3797
    %v3799 = vlaneseq
    %v3800 = vshrl.u32 %v3799, 7
    %v3801 = vsub.s32 1, %v3800
    %v3802 = vrot.slane %v3793, %v3801
    %v3803 = vlaneseq
    %v3804 = vshrl.u32 %v3803, 7
    %v3805 = vsub.s32 2, %v3804
    %v3806 = vrot.slane %v3793, %v3805
    %v3811 = vsel %vm640, %v3779, 0
    %v3814 = vsel %vm640, %v3784, 0
    %3816 = vmatprep.subr.mxu0 %v3788
    %3817 = vmatpush1.msra.mxu0 %v3787
    %3818 = vmatprep.subr.mxu0 %v3791
    %3819 = vmatpush1.msra.mxu0 %v3790
    %3820 = vmatprep.subr.mxu0 0.0
    %3821 = vmatpush1.msra.mxu0 0.0
    %3822 = vmatprep.subr.mxu0 0.0
    %3823 = vmatpush1.msra.mxu0 0.0
    %3824 = vmatprep.subr.mxu0 0.0
    %3825 = vmatpush1.msra.mxu0 0.0
    %3826 = vmatprep.subr.mxu0 0.0
    %3827 = vmatpush1.msra.mxu0 0.0
    %3828 = vmatprep.subr.mxu0 0.0
    %3829 = vmatpush1.msra.mxu0 0.0
    %3830 = vmatprep.subr.mxu0 0.0
    %3831 = vmatpush1.msra.mxu0 0.0
    %3832 = vmatprep.subr.mxu0 0.0
    %3833 = vmatpush1.msra.mxu0 0.0
    %3834 = vmatprep.subr.mxu0 0.0
    %3835 = vmatpush1.msra.mxu0 0.0
    %3836 = vmatprep.subr.mxu0 0.0
    %3837 = vmatpush1.msra.mxu0 0.0
    %3838 = vmatprep.subr.mxu0 0.0
    %3839 = vmatpush1.msra.mxu0 0.0
    %3840 = vmatprep.subr.mxu0 0.0
    %3841 = vmatpush1.msra.mxu0 0.0
    %3842 = vmatprep.subr.mxu0 0.0
    %3843 = vmatpush1.msra.mxu0 0.0
    %3844 = vmatprep.subr.mxu0 0.0
    %3845 = vmatpush1.msra.mxu0 0.0
    %3846 = vmatprep.subr.mxu0 0.0
    %3847 = vmatpush1.msra.mxu0 0.0
    %3848 = vmatprep.subr.mxu0 0.0
    %3849 = vmatpush1.msra.mxu0 0.0
    %3850 = vmatprep.subr.mxu0 0.0
    %3851 = vmatpush1.msra.mxu0 0.0
    %3852 = vmatprep.subr.mxu0 0.0
    %3853 = vmatpush1.msra.mxu0 0.0
    %3854 = vmatprep.subr.mxu0 0.0
    %3855 = vmatpush1.msra.mxu0 0.0
    %3856 = vmatprep.subr.mxu0 0.0
    %3857 = vmatpush1.msra.mxu0 0.0
    %3858 = vmatprep.subr.mxu0 0.0
    %3859 = vmatpush1.msra.mxu0 0.0
    %3860 = vmatprep.subr.mxu0 0.0
    %3861 = vmatpush1.msra.mxu0 0.0
    %3862 = vmatprep.subr.mxu0 0.0
    %3863 = vmatpush1.msra.mxu0 0.0
    %3864 = vmatprep.subr.mxu0 0.0
    %3865 = vmatpush1.msra.mxu0 0.0
    %3866 = vmatprep.subr.mxu0 0.0
    %3867 = vmatpush1.msra.mxu0 0.0
    %3868 = vmatprep.subr.mxu0 0.0
    %3869 = vmatpush1.msra.mxu0 0.0
    %3870 = vmatprep.subr.mxu0 0.0
    %3871 = vmatpush1.msra.mxu0 0.0
    %3872 = vmatprep.subr.mxu0 0.0
    %3873 = vmatpush1.msra.mxu0 0.0
    %3874 = vmatprep.subr.mxu0 0.0
    %3875 = vmatpush1.msra.mxu0 0.0
    %3876 = vmatprep.subr.mxu0 0.0
    %3877 = vmatpush1.msra.mxu0 0.0
    %3878 = vmatprep.subr.mxu0 0.0
    %3879 = vmatpush1.msra.mxu0 0.0
    %3880 = vmatprep.mubr.f32.mxu0 0.0
    %3881 = vmatmul.mubr.f32.gmra.mrb[0].mxu0 %v3811
    %v3882 = vpop.f32.mrb[0].mxu0
    %v3883 = vadd.f32 %v3798, %v3882
    %v3884 = vpop.f32.mrb[0].mxu0
    %v3885 = vadd.f32 %v3802, %v3884
    %3886 = vmatprep.mubr.f32.mxu0 0.0
    %3887 = vmatmul.mubr.f32.gmra.mrb[0].mxu0 %v3814
    %v3888 = vpop.f32.mrb[0].mxu0
    %v3889 = vadd.f32 %v3798, %v3888
    %v3890 = vpop.f32.mrb[0].mxu0
    %v3891 = vadd.f32 %v3802, %v3890
    %3892 = vdwg.mxu0
    %3893 = vmatprep.subr.mxu0 0.0
    %3894 = vmatpush1.msra.mxu0 %v3789
    %3895 = vmatprep.subr.mxu0 0.0
    %3896 = vmatpush1.msra.mxu0 %v3792
    %3897 = vmatprep.subr.mxu0 0.0
    %3898 = vmatpush1.msra.mxu0 0.0
    %3899 = vmatprep.subr.mxu0 0.0
    %3900 = vmatpush1.msra.mxu0 0.0
    %3901 = vmatprep.subr.mxu0 0.0
    %3902 = vmatpush1.msra.mxu0 0.0
    %3903 = vmatprep.subr.mxu0 0.0
    %3904 = vmatpush1.msra.mxu0 0.0
    %3905 = vmatprep.subr.mxu0 0.0
    %3906 = vmatpush1.msra.mxu0 0.0
    %3907 = vmatprep.subr.mxu0 0.0
    %3908 = vmatpush1.msra.mxu0 0.0
    %3909 = vmatprep.subr.mxu0 0.0
    %3910 = vmatpush1.msra.mxu0 0.0
    %3911 = vmatprep.subr.mxu0 0.0
    %3912 = vmatpush1.msra.mxu0 0.0
    %3913 = vmatprep.subr.mxu0 0.0
    %3914 = vmatpush1.msra.mxu0 0.0
    %3915 = vmatprep.subr.mxu0 0.0
    %3916 = vmatpush1.msra.mxu0 0.0
    %3917 = vmatprep.subr.mxu0 0.0
    %3918 = vmatpush1.msra.mxu0 0.0
    %3919 = vmatprep.subr.mxu0 0.0
    %3920 = vmatpush1.msra.mxu0 0.0
    %3921 = vmatprep.subr.mxu0 0.0
    %3922 = vmatpush1.msra.mxu0 0.0
    %3923 = vmatprep.subr.mxu0 0.0
    %3924 = vmatpush1.msra.mxu0 0.0
    %3925 = vmatprep.subr.mxu0 0.0
    %3926 = vmatpush1.msra.mxu0 0.0
    %3927 = vmatprep.subr.mxu0 0.0
    %3928 = vmatpush1.msra.mxu0 0.0
    %3929 = vmatprep.subr.mxu0 0.0
    %3930 = vmatpush1.msra.mxu0 0.0
    %3931 = vmatprep.subr.mxu0 0.0
    %3932 = vmatpush1.msra.mxu0 0.0
    %3933 = vmatprep.subr.mxu0 0.0
    %3934 = vmatpush1.msra.mxu0 0.0
    %3935 = vmatprep.subr.mxu0 0.0
    %3936 = vmatpush1.msra.mxu0 0.0
    %3937 = vmatprep.subr.mxu0 0.0
    %3938 = vmatpush1.msra.mxu0 0.0
    %3939 = vmatprep.subr.mxu0 0.0
    %3940 = vmatpush1.msra.mxu0 0.0
    %3941 = vmatprep.subr.mxu0 0.0
    %3942 = vmatpush1.msra.mxu0 0.0
    %3943 = vmatprep.subr.mxu0 0.0
    %3944 = vmatpush1.msra.mxu0 0.0
    %3945 = vmatprep.subr.mxu0 0.0
    %3946 = vmatpush1.msra.mxu0 0.0
    %3947 = vmatprep.subr.mxu0 0.0
    %3948 = vmatpush1.msra.mxu0 0.0
    %3949 = vmatprep.subr.mxu0 0.0
    %3950 = vmatpush1.msra.mxu0 0.0
    %3951 = vmatprep.subr.mxu0 0.0
    %3952 = vmatpush1.msra.mxu0 0.0
    %3953 = vmatprep.subr.mxu0 0.0
    %3954 = vmatpush1.msra.mxu0 0.0
    %3955 = vmatprep.subr.mxu0 0.0
    %3956 = vmatpush1.msra.mxu0 0.0
    %3957 = vmatprep.mubr.f32.mxu0 0.0
    %3958 = vmatmul.mubr.f32.gmra.mrb[0].mxu0 %v3811
    %v3959 = vpop.f32.mrb[0].mxu0
    %v3960 = vadd.f32 %v3806, %v3959
    %v3961 = vpop.f32.mrb[0].mxu0
    %3962 = vmatprep.mubr.f32.mxu0 0.0
    %3963 = vmatmul.mubr.f32.gmra.mrb[0].mxu0 %v3814
    %v3964 = vpop.f32.mrb[0].mxu0
    %v3965 = vadd.f32 %v3806, %v3964
    %v3966 = vpop.f32.mrb[0].mxu0
    %3967 = vdwg.mxu0
    %v3968 = vmax.f32 %v3883, 0.0
    %v3969 = vmax.f32 %v3885, 0.0
    %v3970 = vmax.f32 %v3960, 0.0
    %v3971 = vmax.f32 %v3889, 0.0
    %v3972 = vmax.f32 %v3891, 0.0
    %v3973 = vmax.f32 %v3965, 0.0
    %v3974 = vld [vmem:[%s55] sm:$0xff]
    %v3975 = vld [vmem:[%s55 + $0x8] sm:$0xff]
    %v3976 = vld [vmem:[%s55 + $0x10] sm:$0xff]
    %v3977 = vld [vmem:[%s55 + $0x18] sm:$0xff]
    %v3978 = vld [vmem:[%s55 + $0x20] sm:$0xff]
    %v3979 = vld [vmem:[%s55 + $0x28] sm:$0xff]
    %v3980 = vld [vmem:[%s55 + $0x30] sm:$0xff]
    %v3981 = vld [vmem:[%s55 + $0x38] sm:$0xff]
    %v3982 = vld [vmem:[%s55 + $0x40] sm:$0xff]
    %v3983 = vld [vmem:[%s55 + $0x48] sm:$0xff]
    %v3984 = vld [vmem:[%s55 + $0x50] sm:$0xff]
    %v3985 = vld [vmem:[%s55 + $0x58] sm:$0xff]
    %v3986 = vld [vmem:[%s55 + $0x60] sm:$0xff]
    %v3987 = vld [vmem:[%s55 + $0x68] sm:$0xff]
    %v3988 = vld [vmem:[%s55 + $0x70] sm:$0xff]
    %v3989 = vld [vmem:[%s55 + $0x78] sm:$0xff]
    %v3990 = vld [vmem:[%s55 + $0x80] sm:$0xff]
    %v3991 = vld [vmem:[%s55 + $0x88] sm:$0xff]
    %v3992 = vld [vmem:[%s55 + $0x90] sm:$0xff]
    %v3993 = vld [vmem:[%s55 + $0x98] sm:$0xff]
    %v3994 = vld [vmem:[%s55 + $0xa0] sm:$0xff]
    %v3995 = vld [vmem:[%s55 + $0xa8] sm:$0xff]
    %v3996 = vld [vmem:[%s55 + $0xb0] sm:$0xff]
    %v3997 = vld [vmem:[%s55 + $0xb8] sm:$0xff]
    %v3998 = vld [vmem:[%s55 + $0xc0] sm:$0xff]
    %v3999 = vld [vmem:[%s55 + $0xc8] sm:$0xff]
    %v4000 = vld [vmem:[%s55 + $0xd0] sm:$0xff]
    %v4001 = vld [vmem:[%s55 + $0xd8] sm:$0xff]
    %v4002 = vld [vmem:[%s55 + $0xe0] sm:$0xff]
    %v4003 = vld [vmem:[%s55 + $0xe8] sm:$0xff]
    %v4004 = vld [vmem:[%s55 + $0xf0] sm:$0xff]
    %v4005 = vld [vmem:[%s55 + $0xf8] sm:$0xff]
    %v4006 = vld [vmem:[%s55 + $0x100] sm:$0xff]
    %v4007 = vld [vmem:[%s55 + $0x108] sm:$0xff]
    %v4008 = vld [vmem:[%s55 + $0x110] sm:$0xff]
    %v4009 = vld [vmem:[%s55 + $0x118] sm:$0xff]
    %v4010 = vld [vmem:[%s55 + $0x120] sm:$0xff]
    %v4011 = vld [vmem:[%s55 + $0x128] sm:$0xff]
    %v4012 = vld [vmem:[%s55 + $0x130] sm:$0xff]
    %v4013 = vld [vmem:[%s55 + $0x138] sm:$0xff]
    %v4014 = vld [vmem:[%s55 + $0x140] sm:$0xff]
    %v4015 = vld [vmem:[%s55 + $0x148] sm:$0xff]
    %v4016 = vld [vmem:[%s55 + $0x150] sm:$0xff]
    %v4017 = vld [vmem:[%s55 + $0x158] sm:$0xff]
    %v4018 = vld [vmem:[%s55 + $0x160] sm:$0xff]
    %v4019 = vld [vmem:[%s55 + $0x168] sm:$0xff]
    %v4020 = vld [vmem:[%s55 + $0x170] sm:$0xff]
    %v4021 = vld [vmem:[%s55 + $0x178] sm:$0xff]
    %v4022 = vld [vmem:[%s55 + $0x180] sm:$0xff]
    %v4023 = vld [vmem:[%s55 + $0x188] sm:$0xff]
    %v4024 = vld [vmem:[%s55 + $0x190] sm:$0xff]
    %v4025 = vld [vmem:[%s55 + $0x198] sm:$0xff]
    %v4026 = vld [vmem:[%s55 + $0x1a0] sm:$0xff]
    %v4027 = vld [vmem:[%s55 + $0x1a8] sm:$0xff]
    %v4028 = vld [vmem:[%s55 + $0x1b0] sm:$0xff]
    %v4029 = vld [vmem:[%s55 + $0x1b8] sm:$0xff]
    %v4030 = vld [vmem:[%s55 + $0x1c0] sm:$0xff]
    %v4031 = vld [vmem:[%s55 + $0x1c8] sm:$0xff]
    %v4032 = vld [vmem:[%s55 + $0x1d0] sm:$0xff]
    %v4033 = vld [vmem:[%s55 + $0x1d8] sm:$0xff]
    %v4034 = vld [vmem:[%s55 + $0x1e0] sm:$0xff]
    %v4035 = vld [vmem:[%s55 + $0x1e8] sm:$0xff]
    %v4036 = vld [vmem:[%s55 + $0x1f0] sm:$0xff]
    %v4037 = vld [vmem:[%s55 + $0x1f8] sm:$0xff]
    %v4038 = vld [vmem:[%s55 + $0x200] sm:$0xff]
    %v4039 = vld [vmem:[%s55 + $0x208] sm:$0xff]
    %v4040 = vld [vmem:[%s55 + $0x210] sm:$0xff]
    %v4041 = vld [vmem:[%s55 + $0x218] sm:$0xff]
    %v4042 = vld [vmem:[%s55 + $0x220] sm:$0xff]
    %v4043 = vld [vmem:[%s55 + $0x228] sm:$0xff]
    %v4044 = vld [vmem:[%s55 + $0x230] sm:$0xff]
    %v4045 = vld [vmem:[%s55 + $0x238] sm:$0xff]
    %v4046 = vld [vmem:[%s55 + $0x240] sm:$0xff]
    %v4047 = vld [vmem:[%s55 + $0x248] sm:$0xff]
    %v4048 = vld [vmem:[%s55 + $0x250] sm:$0xff]
    %v4049 = vld [vmem:[%s55 + $0x258] sm:$0xff]
    %v4050 = vld [vmem:[%s55 + $0x260] sm:$0xff]
    %v4051 = vld [vmem:[%s55 + $0x268] sm:$0xff]
    %v4052 = vld [vmem:[%s55 + $0x270] sm:$0xff]
    %v4053 = vld [vmem:[%s55 + $0x278] sm:$0xff]
    %v4054 = vld [vmem:[%s55 + $0x280] sm:$0xff]
    %v4055 = vld [vmem:[%s55 + $0x288] sm:$0xff]
    %v4056 = vld [vmem:[%s55 + $0x290] sm:$0xff]
    %v4057 = vld [vmem:[%s55 + $0x298] sm:$0xff]
    %v4058 = vld [vmem:[%s55 + $0x2a0] sm:$0xff]
    %v4059 = vld [vmem:[%s55 + $0x2a8] sm:$0xff]
    %v4060 = vld [vmem:[%s55 + $0x2b0] sm:$0xff]
    %v4061 = vld [vmem:[%s55 + $0x2b8] sm:$0xff]
    %v4062 = vld [vmem:[%s55 + $0x2c0] sm:$0xff]
    %v4063 = vld [vmem:[%s55 + $0x2c8] sm:$0xff]
    %v4064 = vld [vmem:[%s55 + $0x2d0] sm:$0xff]
    %v4065 = vld [vmem:[%s55 + $0x2d8] sm:$0xff]
    %v4066 = vld [vmem:[%s55 + $0x2e0] sm:$0xff]
    %v4067 = vld [vmem:[%s55 + $0x2e8] sm:$0xff]
    %v4068 = vld [vmem:[%s55 + $0x2f0] sm:$0xff]
    %v4069 = vld [vmem:[%s55 + $0x2f8] sm:$0xff]
    %v4070 = vld [vmem:[%s55 + $0x300] sm:$0xff]
    %v4071 = vld [vmem:[%s55 + $0x308] sm:$0xff]
    %v4072 = vld [vmem:[%s55 + $0x310] sm:$0xff]
    %v4073 = vld [vmem:[%s55 + $0x318] sm:$0xff]
    %v4074 = vld [vmem:[%s55 + $0x320] sm:$0xff]
    %v4075 = vld [vmem:[%s55 + $0x328] sm:$0xff]
    %v4076 = vld [vmem:[%s55 + $0x330] sm:$0xff]
    %v4077 = vld [vmem:[%s55 + $0x338] sm:$0xff]
    %v4078 = vld [vmem:[%s55 + $0x340] sm:$0xff]
    %v4079 = vld [vmem:[%s55 + $0x348] sm:$0xff]
    %v4080 = vld [vmem:[%s55 + $0x350] sm:$0xff]
    %v4081 = vld [vmem:[%s55 + $0x358] sm:$0xff]
    %v4082 = vld [vmem:[%s55 + $0x360] sm:$0xff]
    %v4083 = vld [vmem:[%s55 + $0x368] sm:$0xff]
    %v4084 = vld [vmem:[%s55 + $0x370] sm:$0xff]
    %v4085 = vld [vmem:[%s55 + $0x378] sm:$0xff]
    %v4086 = vld [vmem:[%s55 + $0x380] sm:$0xff]
    %v4087 = vld [vmem:[%s55 + $0x388] sm:$0xff]
    %v4088 = vld [vmem:[%s55 + $0x390] sm:$0xff]
    %v4089 = vld [vmem:[%s55 + $0x398] sm:$0xff]
    %v4090 = vld [vmem:[%s55 + $0x3a0] sm:$0xff]
    %v4091 = vld [vmem:[%s55 + $0x3a8] sm:$0xff]
    %v4092 = vld [vmem:[%s55 + $0x3b0] sm:$0xff]
    %v4093 = vld [vmem:[%s55 + $0x3b8] sm:$0xff]
    %v4094 = vld [vmem:[%s55 + $0x3c0] sm:$0xff]
    %v4095 = vld [vmem:[%s55 + $0x3c8] sm:$0xff]
    %v4096 = vld [vmem:[%s55 + $0x3d0] sm:$0xff]
    %v4097 = vld [vmem:[%s55 + $0x3d8] sm:$0xff]
    %v4098 = vld [vmem:[%s55 + $0x3e0] sm:$0xff]
    %v4099 = vld [vmem:[%s55 + $0x3e8] sm:$0xff]
    %v4100 = vld [vmem:[%s55 + $0x3f0] sm:$0xff]
    %v4101 = vld [vmem:[%s55 + $0x3f8] sm:$0xff]
    %v4102 = vld [vmem:[%s55 + $0x400] sm:$0xff]
    %v4103 = vld [vmem:[%s55 + $0x408] sm:$0xff]
    %v4104 = vld [vmem:[%s55 + $0x410] sm:$0xff]
    %v4105 = vld [vmem:[%s55 + $0x418] sm:$0xff]
    %v4106 = vld [vmem:[%s55 + $0x420] sm:$0xff]
    %v4107 = vld [vmem:[%s55 + $0x428] sm:$0xff]
    %v4108 = vld [vmem:[%s55 + $0x430] sm:$0xff]
    %v4109 = vld [vmem:[%s55 + $0x438] sm:$0xff]
    %v4110 = vld [vmem:[%s55 + $0x440] sm:$0xff]
    %v4111 = vld [vmem:[%s55 + $0x448] sm:$0xff]
    %v4112 = vld [vmem:[%s55 + $0x450] sm:$0xff]
    %v4113 = vld [vmem:[%s55 + $0x458] sm:$0xff]
    %v4114 = vld [vmem:[%s55 + $0x460] sm:$0xff]
    %v4115 = vld [vmem:[%s55 + $0x468] sm:$0xff]
    %v4116 = vld [vmem:[%s55 + $0x470] sm:$0xff]
    %v4117 = vld [vmem:[%s55 + $0x478] sm:$0xff]
    %v4118 = vld [vmem:[%s57] sm:$0x7]
    %v4120 = vlaneseq
    %v4121 = vshrl.u32 %v4120, 7
    %v4122 = vsub.s32 0, %v4121
    %v4123 = vrot.slane %v4118, %v4122
    %v4124 = vlaneseq
    %v4125 = vshrl.u32 %v4124, 7
    %v4126 = vsub.s32 1, %v4125
    %v4127 = vrot.slane %v4118, %v4126
    %v4128 = vlaneseq
    %v4129 = vshrl.u32 %v4128, 7
    %v4130 = vsub.s32 2, %v4129
    %v4131 = vrot.slane %v4118, %v4130
    %4135 = vmatprep.subr.mxu0 %v3975
    %4136 = vmatpush1.msra.mxu0 %v3974
    %4137 = vmatprep.subr.mxu0 %v3978
    %4138 = vmatpush1.msra.mxu0 %v3977
    %4139 = vmatprep.subr.mxu0 %v3981
    %4140 = vmatpush1.msra.mxu0 %v3980
    %4141 = vmatprep.subr.mxu0 %v3984
    %4142 = vmatpush1.msra.mxu0 %v3983
    %4143 = vmatprep.subr.mxu0 %v3987
    %4144 = vmatpush1.msra.mxu0 %v3986
    %4145 = vmatprep.subr.mxu0 %v3990
    %4146 = vmatpush1.msra.mxu0 %v3989
    %4147 = vmatprep.subr.mxu0 %v3993
    %4148 = vmatpush1.msra.mxu0 %v3992
    %4149 = vmatprep.subr.mxu0 %v3996
    %4150 = vmatpush1.msra.mxu0 %v3995
    %4151 = vmatprep.subr.mxu0 %v3999
    %4152 = vmatpush1.msra.mxu0 %v3998
    %4153 = vmatprep.subr.mxu0 %v4002
    %4154 = vmatpush1.msra.mxu0 %v4001
    %4155 = vmatprep.subr.mxu0 %v4005
    %4156 = vmatpush1.msra.mxu0 %v4004
    %4157 = vmatprep.subr.mxu0 %v4008
    %4158 = vmatpush1.msra.mxu0 %v4007
    %4159 = vmatprep.subr.mxu0 %v4011
    %4160 = vmatpush1.msra.mxu0 %v4010
    %4161 = vmatprep.subr.mxu0 %v4014
    %4162 = vmatpush1.msra.mxu0 %v4013
    %4163 = vmatprep.subr.mxu0 %v4017
    %4164 = vmatpush1.msra.mxu0 %v4016
    %4165 = vmatprep.subr.mxu0 %v4020
    %4166 = vmatpush1.msra.mxu0 %v4019
    %4167 = vmatprep.subr.mxu0 %v4023
    %4168 = vmatpush1.msra.mxu0 %v4022
    %4169 = vmatprep.subr.mxu0 %v4026
    %4170 = vmatpush1.msra.mxu0 %v4025
    %4171 = vmatprep.subr.mxu0 %v4029
    %4172 = vmatpush1.msra.mxu0 %v4028
    %4173 = vmatprep.subr.mxu0 %v4032
    %4174 = vmatpush1.msra.mxu0 %v4031
    %4175 = vmatprep.subr.mxu0 %v4035
    %4176 = vmatpush1.msra.mxu0 %v4034
    %4177 = vmatprep.subr.mxu0 %v4038
    %4178 = vmatpush1.msra.mxu0 %v4037
    %4179 = vmatprep.subr.mxu0 %v4041
    %4180 = vmatpush1.msra.mxu0 %v4040
    %4181 = vmatprep.subr.mxu0 %v4044
    %4182 = vmatpush1.msra.mxu0 %v4043
    %4183 = vmatprep.subr.mxu0 %v4047
    %4184 = vmatpush1.msra.mxu0 %v4046
    %4185 = vmatprep.subr.mxu0 %v4050
    %4186 = vmatpush1.msra.mxu0 %v4049
    %4187 = vmatprep.subr.mxu0 %v4053
    %4188 = vmatpush1.msra.mxu0 %v4052
    %4189 = vmatprep.subr.mxu0 %v4056
    %4190 = vmatpush1.msra.mxu0 %v4055
    %4191 = vmatprep.subr.mxu0 %v4059
    %4192 = vmatpush1.msra.mxu0 %v4058
    %4193 = vmatprep.subr.mxu0 %v4062
    %4194 = vmatpush1.msra.mxu0 %v4061
    %4195 = vmatprep.subr.mxu0 %v4065
    %4196 = vmatpush1.msra.mxu0 %v4064
    %4197 = vmatprep.subr.mxu0 %v4068
    %4198 = vmatpush1.msra.mxu0 %v4067
    %4199 = vmatprep.mubr.f32.mxu0 %v3969
    %4200 = vmatmul.mubr.f32.gmra.mrb[0].mxu0 %v3968
    %v4201 = vpop.f32.mrb[0].mxu0
    %v4202 = vadd.f32 %v4123, %v4201
    %v4203 = vpop.f32.mrb[0].mxu0
    %v4204 = vadd.f32 %v4127, %v4203
    %4205 = vmatprep.mubr.f32.mxu0 %v3972
    %4206 = vmatmul.mubr.f32.gmra.mrb[0].mxu0 %v3971
    %v4207 = vpop.f32.mrb[0].mxu0
    %v4208 = vadd.f32 %v4123, %v4207
    %v4209 = vpop.f32.mrb[0].mxu0
    %v4210 = vadd.f32 %v4127, %v4209
    %4211 = vdwg.mxu0
    %4212 = vmatprep.subr.mxu0 %v4071
    %4213 = vmatpush1.msra.mxu0 %v4070
    %4214 = vmatprep.subr.mxu0 %v4074
    %4215 = vmatpush1.msra.mxu0 %v4073
    %4216 = vmatprep.subr.mxu0 %v4077
    %4217 = vmatpush1.msra.mxu0 %v4076
    %4218 = vmatprep.subr.mxu0 %v4080
    %4219 = vmatpush1.msra.mxu0 %v4079
    %4220 = vmatprep.subr.mxu0 %v4083
    %4221 = vmatpush1.msra.mxu0 %v4082
    %4222 = vmatprep.subr.mxu0 %v4086
    %4223 = vmatpush1.msra.mxu0 %v4085
    %4224 = vmatprep.subr.mxu0 %v4089
    %4225 = vmatpush1.msra.mxu0 %v4088
    %4226 = vmatprep.subr.mxu0 %v4092
    %4227 = vmatpush1.msra.mxu0 %v4091
    %4228 = vmatprep.subr.mxu0 %v4095
    %4229 = vmatpush1.msra.mxu0 %v4094
    %4230 = vmatprep.subr.mxu0 %v4098
    %4231 = vmatpush1.msra.mxu0 %v4097
    %4232 = vmatprep.subr.mxu0 %v4101
    %4233 = vmatpush1.msra.mxu0 %v4100
    %4234 = vmatprep.subr.mxu0 %v4104
    %4235 = vmatpush1.msra.mxu0 %v4103
    %4236 = vmatprep.subr.mxu0 %v4107
    %4237 = vmatpush1.msra.mxu0 %v4106
    %4238 = vmatprep.subr.mxu0 %v4110
    %4239 = vmatpush1.msra.mxu0 %v4109
    %4240 = vmatprep.subr.mxu0 %v4113
    %4241 = vmatpush1.msra.mxu0 %v4112
    %4242 = vmatprep.subr.mxu0 %v4116
    %4243 = vmatpush1.msra.mxu0 %v4115
    %4244 = vmatprep.subr.mxu0 0.0
    %4245 = vmatpush1.msra.mxu0 0.0
    %4246 = vmatprep.subr.mxu0 0.0
    %4247 = vmatpush1.msra.mxu0 0.0
    %4248 = vmatprep.subr.mxu0 0.0
    %4249 = vmatpush1.msra.mxu0 0.0
    %4250 = vmatprep.subr.mxu0 0.0
    %4251 = vmatpush1.msra.mxu0 0.0
    %4252 = vmatprep.subr.mxu0 0.0
    %4253 = vmatpush1.msra.mxu0 0.0
    %4254 = vmatprep.subr.mxu0 0.0
    %4255 = vmatpush1.msra.mxu0 0.0
    %4256 = vmatprep.subr.mxu0 0.0
    %4257 = vmatpush1.msra.mxu0 0.0
    %4258 = vmatprep.subr.mxu0 0.0
    %4259 = vmatpush1.msra.mxu0 0.0
    %4260 = vmatprep.subr.mxu0 0.0
    %4261 = vmatpush1.msra.mxu0 0.0
    %4262 = vmatprep.subr.mxu0 0.0
    %4263 = vmatpush1.msra.mxu0 0.0
    %4264 = vmatprep.subr.mxu0 0.0
    %4265 = vmatpush1.msra.mxu0 0.0
    %4266 = vmatprep.subr.mxu0 0.0
    %4267 = vmatpush1.msra.mxu0 0.0
    %4268 = vmatprep.subr.mxu0 0.0
    %4269 = vmatpush1.msra.mxu0 0.0
    %4270 = vmatprep.subr.mxu0 0.0
    %4271 = vmatpush1.msra.mxu0 0.0
    %4272 = vmatprep.subr.mxu0 0.0
    %4273 = vmatpush1.msra.mxu0 0.0
    %4274 = vmatprep.subr.mxu0 0.0
    %4275 = vmatpush1.msra.mxu0 0.0
    %4276 = vmatprep.mubr.f32.mxu0 0.0
    %4277 = vmatmul.mubr.f32.gmra.mrb[0].mxu0 %v3970
    %v4278 = vpop.f32.mrb[0].mxu0
    %v4279 = vadd.f32 %v4202, %v4278
    %v4280 = vpop.f32.mrb[0].mxu0
    %v4281 = vadd.f32 %v4204, %v4280
    %4282 = vmatprep.mubr.f32.mxu0 0.0
    %4283 = vmatmul.mubr.f32.gmra.mrb[0].mxu0 %v3973
    %v4284 = vpop.f32.mrb[0].mxu0
    %v4285 = vadd.f32 %v4208, %v4284
    %v4286 = vpop.f32.mrb[0].mxu0
    %v4287 = vadd.f32 %v4210, %v4286
    %4288 = vdwg.mxu0
    %4289 = vmatprep.subr.mxu0 0.0
    %4290 = vmatpush1.msra.mxu0 %v3976
    %4291 = vmatprep.subr.mxu0 0.0
    %4292 = vmatpush1.msra.mxu0 %v3979
    %4293 = vmatprep.subr.mxu0 0.0
    %4294 = vmatpush1.msra.mxu0 %v3982
    %4295 = vmatprep.subr.mxu0 0.0
    %4296 = vmatpush1.msra.mxu0 %v3985
    %4297 = vmatprep.subr.mxu0 0.0
    %4298 = vmatpush1.msra.mxu0 %v3988
    %4299 = vmatprep.subr.mxu0 0.0
    %4300 = vmatpush1.msra.mxu0 %v3991
    %4301 = vmatprep.subr.mxu0 0.0
    %4302 = vmatpush1.msra.mxu0 %v3994
    %4303 = vmatprep.subr.mxu0 0.0
    %4304 = vmatpush1.msra.mxu0 %v3997
    %4305 = vmatprep.subr.mxu0 0.0
    %4306 = vmatpush1.msra.mxu0 %v4000
    %4307 = vmatprep.subr.mxu0 0.0
    %4308 = vmatpush1.msra.mxu0 %v4003
    %4309 = vmatprep.subr.mxu0 0.0
    %4310 = vmatpush1.msra.mxu0 %v4006
    %4311 = vmatprep.subr.mxu0 0.0
    %4312 = vmatpush1.msra.mxu0 %v4009
    %4313 = vmatprep.subr.mxu0 0.0
    %4314 = vmatpush1.msra.mxu0 %v4012
    %4315 = vmatprep.subr.mxu0 0.0
    %4316 = vmatpush1.msra.mxu0 %v4015
    %4317 = vmatprep.subr.mxu0 0.0
    %4318 = vmatpush1.msra.mxu0 %v4018
    %4319 = vmatprep.subr.mxu0 0.0
    %4320 = vmatpush1.msra.mxu0 %v4021
    %4321 = vmatprep.subr.mxu0 0.0
    %4322 = vmatpush1.msra.mxu0 %v4024
    %4323 = vmatprep.subr.mxu0 0.0
    %4324 = vmatpush1.msra.mxu0 %v4027
    %4325 = vmatprep.subr.mxu0 0.0
    %4326 = vmatpush1.msra.mxu0 %v4030
    %4327 = vmatprep.subr.mxu0 0.0
    %4328 = vmatpush1.msra.mxu0 %v4033
    %4329 = vmatprep.subr.mxu0 0.0
    %4330 = vmatpush1.msra.mxu0 %v4036
    %4331 = vmatprep.subr.mxu0 0.0
    %4332 = vmatpush1.msra.mxu0 %v4039
    %4333 = vmatprep.subr.mxu0 0.0
    %4334 = vmatpush1.msra.mxu0 %v4042
    %4335 = vmatprep.subr.mxu0 0.0
    %4336 = vmatpush1.msra.mxu0 %v4045
    %4337 = vmatprep.subr.mxu0 0.0
    %4338 = vmatpush1.msra.mxu0 %v4048
    %4339 = vmatprep.subr.mxu0 0.0
    %4340 = vmatpush1.msra.mxu0 %v4051
    %4341 = vmatprep.subr.mxu0 0.0
    %4342 = vmatpush1.msra.mxu0 %v4054
    %4343 = vmatprep.subr.mxu0 0.0
    %4344 = vmatpush1.msra.mxu0 %v4057
    %4345 = vmatprep.subr.mxu0 0.0
    %4346 = vmatpush1.msra.mxu0 %v4060
    %4347 = vmatprep.subr.mxu0 0.0
    %4348 = vmatpush1.msra.mxu0 %v4063
    %4349 = vmatprep.subr.mxu0 0.0
    %4350 = vmatpush1.msra.mxu0 %v4066
    %4351 = vmatprep.subr.mxu0 0.0
    %4352 = vmatpush1.msra.mxu0 %v4069
    %4353 = vmatprep.mubr.f32.mxu0 %v3969
    %4354 = vmatmul.mubr.f32.gmra.mrb[0].mxu0 %v3968
    %v4355 = vpop.f32.mrb[0].mxu0
    %v4356 = vadd.f32 %v4131, %v4355
    %v4357 = vpop.f32.mrb[0].mxu0
    %4358 = vmatprep.mubr.f32.mxu0 %v3972
    %4359 = vmatmul.mubr.f32.gmra.mrb[0].mxu0 %v3971
    %v4360 = vpop.f32.mrb[0].mxu0
    %v4361 = vadd.f32 %v4131, %v4360
    %v4362 = vpop.f32.mrb[0].mxu0
    %4363 = vdwg.mxu0
    %4364 = vmatprep.subr.mxu0 0.0
    %4365 = vmatpush1.msra.mxu0 %v4072
    %4366 = vmatprep.subr.mxu0 0.0
    %4367 = vmatpush1.msra.mxu0 %v4075
    %4368 = vmatprep.subr.mxu0 0.0
    %4369 = vmatpush1.msra.mxu0 %v4078
    %4370 = vmatprep.subr.mxu0 0.0
    %4371 = vmatpush1.msra.mxu0 %v4081
    %4372 = vmatprep.subr.mxu0 0.0
    %4373 = vmatpush1.msra.mxu0 %v4084
    %4374 = vmatprep.subr.mxu0 0.0
    %4375 = vmatpush1.msra.mxu0 %v4087
    %4376 = vmatprep.subr.mxu0 0.0
    %4377 = vmatpush1.msra.mxu0 %v4090
    %4378 = vmatprep.subr.mxu0 0.0
    %4379 = vmatpush1.msra.mxu0 %v4093
    %4380 = vmatprep.subr.mxu0 0.0
    %4381 = vmatpush1.msra.mxu0 %v4096
    %4382 = vmatprep.subr.mxu0 0.0
    %4383 = vmatpush1.msra.mxu0 %v4099
    %4384 = vmatprep.subr.mxu0 0.0
    %4385 = vmatpush1.msra.mxu0 %v4102
    %4386 = vmatprep.subr.mxu0 0.0
    %4387 = vmatpush1.msra.mxu0 %v4105
    %4388 = vmatprep.subr.mxu0 0.0
    %4389 = vmatpush1.msra.mxu0 %v4108
    %4390 = vmatprep.subr.mxu0 0.0
    %4391 = vmatpush1.msra.mxu0 %v4111
    %4392 = vmatprep.subr.mxu0 0.0
    %4393 = vmatpush1.msra.mxu0 %v4114
    %4394 = vmatprep.subr.mxu0 0.0
    %4395 = vmatpush1.msra.mxu0 %v4117
    %4396 = vmatprep.subr.mxu0 0.0
    %4397 = vmatpush1.msra.mxu0 0.0
    %4398 = vmatprep.subr.mxu0 0.0
    %4399 = vmatpush1.msra.mxu0 0.0
    %4400 = vmatprep.subr.mxu0 0.0
    %4401 = vmatpush1.msra.mxu0 0.0
    %4402 = vmatprep.subr.mxu0 0.0
    %4403 = vmatpush1.msra.mxu0 0.0
    %4404 = vmatprep.subr.mxu0 0.0
    %4405 = vmatpush1.msra.mxu0 0.0
    %4406 = vmatprep.subr.mxu0 0.0
    %4407 = vmatpush1.msra.mxu0 0.0
    %4408 = vmatprep.subr.mxu0 0.0
    %4409 = vmatpush1.msra.mxu0 0.0
    %4410 = vmatprep.subr.mxu0 0.0
    %4411 = vmatpush1.msra.mxu0 0.0
    %4412 = vmatprep.subr.mxu0 0.0
    %4413 = vmatpush1.msra.mxu0 0.0
    %4414 = vmatprep.subr.mxu0 0.0
    %4415 = vmatpush1.msra.mxu0 0.0
    %4416 = vmatprep.subr.mxu0 0.0
    %4417 = vmatpush1.msra.mxu0 0.0
    %4418 = vmatprep.subr.mxu0 0.0
    %4419 = vmatpush1.msra.mxu0 0.0
    %4420 = vmatprep.subr.mxu0 0.0
    %4421 = vmatpush1.msra.mxu0 0.0
    %4422 = vmatprep.subr.mxu0 0.0
    %4423 = vmatpush1.msra.mxu0 0.0
    %4424 = vmatprep.subr.mxu0 0.0
    %4425 = vmatpush1.msra.mxu0 0.0
    %4426 = vmatprep.subr.mxu0 0.0
    %4427 = vmatpush1.msra.mxu0 0.0
    %4428 = vmatprep.mubr.f32.mxu0 0.0
    %4429 = vmatmul.mubr.f32.gmra.mrb[0].mxu0 %v3970
    %v4430 = vpop.f32.mrb[0].mxu0
    %v4431 = vadd.f32 %v4356, %v4430
    %v4432 = vpop.f32.mrb[0].mxu0
    %4433 = vmatprep.mubr.f32.mxu0 0.0
    %4434 = vmatmul.mubr.f32.gmra.mrb[0].mxu0 %v3973
    %v4435 = vpop.f32.mrb[0].mxu0
    %v4436 = vadd.f32 %v4361, %v4435
    %v4437 = vpop.f32.mrb[0].mxu0
    %4438 = vdwg.mxu0
    %v4439 = vmax.f32 %v4279, 0.0
    %v4440 = vmax.f32 %v4281, 0.0
    %v4441 = vmax.f32 %v4431, 0.0
    %v4442 = vmax.f32 %v4285, 0.0
    %v4443 = vmax.f32 %v4287, 0.0
    %v4444 = vmax.f32 %v4436, 0.0
    %v4445 = vld [vmem:[%s59] sm:$0xff]
    %v4446 = vld [vmem:[%s59 + $0x8] sm:$0xff]
    %v4447 = vld [vmem:[%s59 + $0x10] sm:$0xff]
    %v4448 = vld [vmem:[%s59 + $0x18] sm:$0xff]
    %v4449 = vld [vmem:[%s59 + $0x20] sm:$0xff]
    %v4450 = vld [vmem:[%s59 + $0x28] sm:$0xff]
    %v4451 = vld [vmem:[%s59 + $0x30] sm:$0xff]
    %v4452 = vld [vmem:[%s59 + $0x38] sm:$0xff]
    %v4453 = vld [vmem:[%s59 + $0x40] sm:$0xff]
    %v4454 = vld [vmem:[%s59 + $0x48] sm:$0xff]
    %v4455 = vld [vmem:[%s59 + $0x50] sm:$0xff]
    %v4456 = vld [vmem:[%s59 + $0x58] sm:$0xff]
    %v4457 = vld [vmem:[%s59 + $0x60] sm:$0xff]
    %v4458 = vld [vmem:[%s59 + $0x68] sm:$0xff]
    %v4459 = vld [vmem:[%s59 + $0x70] sm:$0xff]
    %v4460 = vld [vmem:[%s59 + $0x78] sm:$0xff]
    %v4461 = vld [vmem:[%s59 + $0x80] sm:$0xff]
    %v4462 = vld [vmem:[%s59 + $0x88] sm:$0xff]
    %v4463 = vld [vmem:[%s59 + $0x90] sm:$0xff]
    %v4464 = vld [vmem:[%s59 + $0x98] sm:$0xff]
    %v4465 = vld [vmem:[%s59 + $0xa0] sm:$0xff]
    %v4466 = vld [vmem:[%s59 + $0xa8] sm:$0xff]
    %v4467 = vld [vmem:[%s59 + $0xb0] sm:$0xff]
    %v4468 = vld [vmem:[%s59 + $0xb8] sm:$0xff]
    %v4469 = vld [vmem:[%s59 + $0xc0] sm:$0xff]
    %v4470 = vld [vmem:[%s59 + $0xc8] sm:$0xff]
    %v4471 = vld [vmem:[%s59 + $0xd0] sm:$0xff]
    %v4472 = vld [vmem:[%s59 + $0xd8] sm:$0xff]
    %v4473 = vld [vmem:[%s59 + $0xe0] sm:$0xff]
    %v4474 = vld [vmem:[%s59 + $0xe8] sm:$0xff]
    %v4475 = vld [vmem:[%s59 + $0xf0] sm:$0xff]
    %v4476 = vld [vmem:[%s59 + $0xf8] sm:$0xff]
    %v4477 = vld [vmem:[%s59 + $0x100] sm:$0xff]
    %v4478 = vld [vmem:[%s59 + $0x108] sm:$0xff]
    %v4479 = vld [vmem:[%s59 + $0x110] sm:$0xff]
    %v4480 = vld [vmem:[%s59 + $0x118] sm:$0xff]
    %v4481 = vld [vmem:[%s59 + $0x120] sm:$0xff]
    %v4482 = vld [vmem:[%s59 + $0x128] sm:$0xff]
    %v4483 = vld [vmem:[%s59 + $0x130] sm:$0xff]
    %v4484 = vld [vmem:[%s59 + $0x138] sm:$0xff]
    %v4485 = vld [vmem:[%s59 + $0x140] sm:$0xff]
    %v4486 = vld [vmem:[%s59 + $0x148] sm:$0xff]
    %v4487 = vld [vmem:[%s59 + $0x150] sm:$0xff]
    %v4488 = vld [vmem:[%s59 + $0x158] sm:$0xff]
    %v4489 = vld [vmem:[%s59 + $0x160] sm:$0xff]
    %v4490 = vld [vmem:[%s59 + $0x168] sm:$0xff]
    %v4491 = vld [vmem:[%s59 + $0x170] sm:$0xff]
    %v4492 = vld [vmem:[%s59 + $0x178] sm:$0xff]
    %4493 = vmatprep.subr.mxu0 0.0
    %4494 = vmatpush1.msra.mxu0 %v4445
    %4495 = vmatprep.subr.mxu0 0.0
    %4496 = vmatpush1.msra.mxu0 %v4446
    %4497 = vmatprep.subr.mxu0 0.0
    %4498 = vmatpush1.msra.mxu0 %v4447
    %4499 = vmatprep.subr.mxu0 0.0
    %4500 = vmatpush1.msra.mxu0 %v4448
    %4501 = vmatprep.subr.mxu0 0.0
    %4502 = vmatpush1.msra.mxu0 %v4449
    %4503 = vmatprep.subr.mxu0 0.0
    %4504 = vmatpush1.msra.mxu0 %v4450
    %4505 = vmatprep.subr.mxu0 0.0
    %4506 = vmatpush1.msra.mxu0 %v4451
    %4507 = vmatprep.subr.mxu0 0.0
    %4508 = vmatpush1.msra.mxu0 %v4452
    %4509 = vmatprep.subr.mxu0 0.0
    %4510 = vmatpush1.msra.mxu0 %v4453
    %4511 = vmatprep.subr.mxu0 0.0
    %4512 = vmatpush1.msra.mxu0 %v4454
    %4513 = vmatprep.subr.mxu0 0.0
    %4514 = vmatpush1.msra.mxu0 %v4455
    %4515 = vmatprep.subr.mxu0 0.0
    %4516 = vmatpush1.msra.mxu0 %v4456
    %4517 = vmatprep.subr.mxu0 0.0
    %4518 = vmatpush1.msra.mxu0 %v4457
    %4519 = vmatprep.subr.mxu0 0.0
    %4520 = vmatpush1.msra.mxu0 %v4458
    %4521 = vmatprep.subr.mxu0 0.0
    %4522 = vmatpush1.msra.mxu0 %v4459
    %4523 = vmatprep.subr.mxu0 0.0
    %4524 = vmatpush1.msra.mxu0 %v4460
    %4525 = vmatprep.subr.mxu0 0.0
    %4526 = vmatpush1.msra.mxu0 %v4461
    %4527 = vmatprep.subr.mxu0 0.0
    %4528 = vmatpush1.msra.mxu0 %v4462
    %4529 = vmatprep.subr.mxu0 0.0
    %4530 = vmatpush1.msra.mxu0 %v4463
    %4531 = vmatprep.subr.mxu0 0.0
    %4532 = vmatpush1.msra.mxu0 %v4464
    %4533 = vmatprep.subr.mxu0 0.0
    %4534 = vmatpush1.msra.mxu0 %v4465
    %4535 = vmatprep.subr.mxu0 0.0
    %4536 = vmatpush1.msra.mxu0 %v4466
    %4537 = vmatprep.subr.mxu0 0.0
    %4538 = vmatpush1.msra.mxu0 %v4467
    %4539 = vmatprep.subr.mxu0 0.0
    %4540 = vmatpush1.msra.mxu0 %v4468
    %4541 = vmatprep.subr.mxu0 0.0
    %4542 = vmatpush1.msra.mxu0 %v4469
    %4543 = vmatprep.subr.mxu0 0.0
    %4544 = vmatpush1.msra.mxu0 %v4470
    %4545 = vmatprep.subr.mxu0 0.0
    %4546 = vmatpush1.msra.mxu0 %v4471
    %4547 = vmatprep.subr.mxu0 0.0
    %4548 = vmatpush1.msra.mxu0 %v4472
    %4549 = vmatprep.subr.mxu0 0.0
    %4550 = vmatpush1.msra.mxu0 %v4473
    %4551 = vmatprep.subr.mxu0 0.0
    %4552 = vmatpush1.msra.mxu0 %v4474
    %4553 = vmatprep.subr.mxu0 0.0
    %4554 = vmatpush1.msra.mxu0 %v4475
    %4555 = vmatprep.subr.mxu0 0.0
    %4556 = vmatpush1.msra.mxu0 %v4476
    %4557 = vmatprep.mubr.f32.mxu0 %v4440
    %4558 = vmatmul.mubr.f32.gmra.mrb[0].mxu0 %v4439
    %v4559 = vpop.f32.mrb[0].mxu0
    %v4560 = vadd.f32 0.0, %v4559
    %v4561 = vpop.f32.mrb[0].mxu0
    %4562 = vmatprep.mubr.f32.mxu0 %v4443
    %4563 = vmatmul.mubr.f32.gmra.mrb[0].mxu0 %v4442
    %v4564 = vpop.f32.mrb[0].mxu0
    %v4565 = vadd.f32 0.0, %v4564
    %v4566 = vpop.f32.mrb[0].mxu0
    %4567 = vdwg.mxu0
    %4568 = vmatprep.subr.mxu0 0.0
    %4569 = vmatpush1.msra.mxu0 %v4477
    %4570 = vmatprep.subr.mxu0 0.0
    %4571 = vmatpush1.msra.mxu0 %v4478
    %4572 = vmatprep.subr.mxu0 0.0
    %4573 = vmatpush1.msra.mxu0 %v4479
    %4574 = vmatprep.subr.mxu0 0.0
    %4575 = vmatpush1.msra.mxu0 %v4480
    %4576 = vmatprep.subr.mxu0 0.0
    %4577 = vmatpush1.msra.mxu0 %v4481
    %4578 = vmatprep.subr.mxu0 0.0
    %4579 = vmatpush1.msra.mxu0 %v4482
    %4580 = vmatprep.subr.mxu0 0.0
    %4581 = vmatpush1.msra.mxu0 %v4483
    %4582 = vmatprep.subr.mxu0 0.0
    %4583 = vmatpush1.msra.mxu0 %v4484
    %4584 = vmatprep.subr.mxu0 0.0
    %4585 = vmatpush1.msra.mxu0 %v4485
    %4586 = vmatprep.subr.mxu0 0.0
    %4587 = vmatpush1.msra.mxu0 %v4486
    %4588 = vmatprep.subr.mxu0 0.0
    %4589 = vmatpush1.msra.mxu0 %v4487
    %4590 = vmatprep.subr.mxu0 0.0
    %4591 = vmatpush1.msra.mxu0 %v4488
    %4592 = vmatprep.subr.mxu0 0.0
    %4593 = vmatpush1.msra.mxu0 %v4489
    %4594 = vmatprep.subr.mxu0 0.0
    %4595 = vmatpush1.msra.mxu0 %v4490
    %4596 = vmatprep.subr.mxu0 0.0
    %4597 = vmatpush1.msra.mxu0 %v4491
    %4598 = vmatprep.subr.mxu0 0.0
    %4599 = vmatpush1.msra.mxu0 %v4492
    %4600 = vmatprep.subr.mxu0 0.0
    %4601 = vmatpush1.msra.mxu0 0.0
    %4602 = vmatprep.subr.mxu0 0.0
    %4603 = vmatpush1.msra.mxu0 0.0
    %4604 = vmatprep.subr.mxu0 0.0
    %4605 = vmatpush1.msra.mxu0 0.0
    %4606 = vmatprep.subr.mxu0 0.0
    %4607 = vmatpush1.msra.mxu0 0.0
    %4608 = vmatprep.subr.mxu0 0.0
    %4609 = vmatpush1.msra.mxu0 0.0
    %4610 = vmatprep.subr.mxu0 0.0
    %4611 = vmatpush1.msra.mxu0 0.0
    %4612 = vmatprep.subr.mxu0 0.0
    %4613 = vmatpush1.msra.mxu0 0.0
    %4614 = vmatprep.subr.mxu0 0.0
    %4615 = vmatpush1.msra.mxu0 0.0
    %4616 = vmatprep.subr.mxu0 0.0
    %4617 = vmatpush1.msra.mxu0 0.0
    %4618 = vmatprep.subr.mxu0 0.0
    %4619 = vmatpush1.msra.mxu0 0.0
    %4620 = vmatprep.subr.mxu0 0.0
    %4621 = vmatpush1.msra.mxu0 0.0
    %4622 = vmatprep.subr.mxu0 0.0
    %4623 = vmatpush1.msra.mxu0 0.0
    %4624 = vmatprep.subr.mxu0 0.0
    %4625 = vmatpush1.msra.mxu0 0.0
    %4626 = vmatprep.subr.mxu0 0.0
    %4627 = vmatpush1.msra.mxu0 0.0
    %4628 = vmatprep.subr.mxu0 0.0
    %4629 = vmatpush1.msra.mxu0 0.0
    %4630 = vmatprep.subr.mxu0 0.0
    %4631 = vmatpush1.msra.mxu0 0.0
    %4632 = vmatprep.mubr.f32.mxu0 0.0
    %4633 = vmatmul.mubr.f32.gmra.mrb[0].mxu0 %v4441
    %v4634 = vpop.f32.mrb[0].mxu0
    %v4635 = vadd.f32 %v4560, %v4634
    %v4636 = vpop.f32.mrb[0].mxu0
    %4637 = vmatprep.mubr.f32.mxu0 0.0
    %4638 = vmatmul.mubr.f32.gmra.mrb[0].mxu0 %v4444
    %v4639 = vpop.f32.mrb[0].mxu0
    %v4640 = vadd.f32 %v4565, %v4639
    %v4641 = vpop.f32.mrb[0].mxu0
    %4642 = vdwg.mxu0
    %vm4643 = vcmask 23552
    %v4644 = vsel %vm4643, %v4635, 0.0
    %v4645 = vrot.slane %v4644, 4
    %v4646 = vadd.f32 %v4644, %v4645
    %v4647 = vrot.slane %v4646, 2
    %v4648 = vadd.f32 %v4646, %v4647
    %v4649 = vrot.slane %v4648, 1
    %v4650 = vadd.f32 %v4648, %v4649
    %v4651 = vsel %vm4643, %v4640, 0.0
    %v4652 = vrot.slane %v4651, 4
    %v4653 = vadd.f32 %v4651, %v4652
    %v4654 = vrot.slane %v4653, 2
    %v4655 = vadd.f32 %v4653, %v4654
    %v4656 = vrot.slane %v4655, 1
    %v4657 = vadd.f32 %v4655, %v4656
    %v4658 = vld [vmem:[%s61] sm:$0x1]
    %v4660 = vlaneseq
    %v4661 = vshrl.u32 %v4660, 7
    %v4662 = vsub.s32 0, %v4661
    %v4663 = vrot.slane %v4658, %v4662
    %v4665 = vadd.f32 %v4650, %v4663
    %v4666 = vadd.f32 %v4657, %v4663
    %v4669 = vrot.slane %v4666, 7
    %v4670 = vsel %vm1019, %v4669, %v4665
    %vm4672 = vcmask 17408
    %4673 = vst.msk [vmem:[#allocation2] sm:$0x3] %vm4672, %v4670
    // Predicated region
    $region126: #{tada_forward.1} parent=1 // pred_check
      _
    $region127: #{tada_forward.1} parent=1 // pred_check_branch
      %4675 = sbr.rel (0) target = $region129
    $region128: #{tada_forward.1} parent=1 // pred_region
      %s4677 = ssub.s32 32, 32
      %4678 = vsyncadd [#allocation3], %s4677
      %s4680 = sshll.u32 [#allocation2], 4
      %s4681 = int_to_ptr.vmem [resolvable:$true] %s4680
      %4683 = dma.vmem_to_hbm [thread:$0]  %s4681, 32, %s63, [#allocation3]
    $region129: #{tada_forward.1} parent=1 // pred_fallthru
      _
    // Predicated region
    $region130: #{tada_forward.1} parent=1 // pred_check
      _
    $region131: #{tada_forward.1} parent=1 // pred_check_branch
      %4685 = sbr.rel (0) target = $region133
    $region132: #{tada_forward.1} parent=1 // pred_region
      %4686 = dma.done [#allocation3], 32
    $region133: #{tada_forward.1} parent=1 // pred_fallthru
      _
    %4687 = vsyncpa [#allocation3], 1

</llo_original>
